<compile_context>
chip_gen: v7x
topology: tpu7x:2x2x1
jax: 0.10.0
libtpu: 0.0.40
codegen_flags: <defaults>
</compile_context>

<pallas_src>
import jax
import jax.numpy as jnp
from jax.experimental import pallas as pl
from jax.experimental.pallas import tpu as pltpu


# ----------------------------------------------------------------------------
# Pallas kernel: all 5 bottleneck blocks for one batch element (grid over N).
# ----------------------------------------------------------------------------
def _bottleneck5_kernel(x_ref,    # (1, H, W, C)        input / residual block
                        w1_ref,   # (nblk, C, Cm)       1x1 conv (BN1 folded)
                        b1_ref,   # (nblk, 1, Cm)       BN1 bias
                        w2_ref,   # (nblk, 9*Cm, Cm)    3x3 conv im2col (BN2 folded)
                        b2_ref,   # (nblk, 1, Cm)       BN2 bias
                        w3_ref,   # (nblk, Cm, C)       1x1 conv (BN3 folded)
                        b3_ref,   # (nblk, 1, C)        BN3 bias
                        out_ref): # (1, H, W, C)
    _, H, W, C = x_ref.shape
    nblk, _, Cm = w1_ref.shape
    M = H * W

    act = x_ref[...].astype(jnp.float32).reshape(M, C)

    for blk in range(nblk):                       # unrolled: blocks are sequential
        residual = act

        # --- conv1 (1x1) [BN scale folded] + bias + ReLU ----------------------
        h1 = jnp.dot(act, w1_ref[blk], preferred_element_type=jnp.float32)
        h1 = jnp.maximum(h1 + b1_ref[blk], 0.0)

        # --- conv2 (3x3, pad=1) as ONE im2col matmul, K = 9*Cm ----------------
        h1 = h1.reshape(H, W, Cm)
        zc = jnp.zeros((H, 1, Cm), jnp.float32)
        zr = jnp.zeros((1, W + 2, Cm), jnp.float32)
        hp = jnp.concatenate([zc, h1, zc], axis=1)          # (H,   W+2, Cm)
        hp = jnp.concatenate([zr, hp, zr], axis=0)          # (H+2, W+2, Cm)
        cols = jnp.concatenate(
            [hp[dy:dy + H, dx:dx + W, :]
             for dy in range(3) for dx in range(3)], axis=-1)   # (H, W, 9*Cm)
        h2 = jnp.dot(cols.reshape(M, 9 * Cm), w2_ref[blk],
                     preferred_element_type=jnp.float32)
        h2 = jnp.maximum(h2 + b2_ref[blk], 0.0)

        # --- conv3 (1x1) [BN scale folded] + bias + residual + ReLU -----------
        h3 = jnp.dot(h2, w3_ref[blk], preferred_element_type=jnp.float32)
        act = jnp.maximum(h3 + b3_ref[blk] + residual, 0.0)

    out_ref[...] = act.reshape(1, H, W, C).astype(out_ref.dtype)


# ----------------------------------------------------------------------------
# Wrapper: NCHW in, NCHW out (matches the PyTorch module).
# ----------------------------------------------------------------------------
@jax.jit
def bottleneck5_forward(x_nchw, stacked):
    N, C, H, W = x_nchw.shape
    nblk, _, Cm = stacked["w1"].shape

    x = jnp.transpose(x_nchw, (0, 2, 3, 1))       # NCHW -> NHWC (once per forward)

    def whole(arr):
        return pl.BlockSpec(arr.shape, lambda n: (0,) * arr.ndim)

    args = (x, stacked["w1"], stacked["b1"], stacked["w2"], stacked["b2"],
            stacked["w3"], stacked["b3"])

    flops = 2 * N * H * W * nblk * (C * Cm + 9 * Cm * Cm + Cm * C)
    bytes_accessed = sum(int(a.size) * 4 for a in args) + int(x.size) * 4

    out = pl.pallas_call(
        _bottleneck5_kernel,
        out_shape=jax.ShapeDtypeStruct((N, H, W, C), jnp.float32),
        grid=(N,),
        in_specs=[
            pl.BlockSpec((1, H, W, C), lambda n: (n, 0, 0, 0)),
            whole(stacked["w1"]), whole(stacked["b1"]),
            whole(stacked["w2"]), whole(stacked["b2"]),
            whole(stacked["w3"]), whole(stacked["b3"]),
        ],
        out_specs=pl.BlockSpec((1, H, W, C), lambda n: (n, 0, 0, 0)),
        input_output_aliases={0: 0},              # output reuses the input buffer
        compiler_params=pltpu.CompilerParams(
            dimension_semantics=("parallel",),    # batch images are independent
            vmem_limit_bytes=16 * 1024 * 1024),
        cost_estimate=pl.CostEstimate(
            flops=flops, transcendentals=0, bytes_accessed=bytes_accessed),
    )(*args)

    return jnp.transpose(out, (0, 3, 1, 2))       # NHWC -> NCHW


# ----------------------------------------------------------------------------
# Parameter construction: PyTorch layouts, BN (inference mode) folded into the
# conv weights; only per-channel biases remain.
# ----------------------------------------------------------------------------
def make_bottleneck_params(key, planes):
    C = planes
    Cm = planes // 4
    keys = jax.random.split(key, 6)

    def bn_fold(k, ch, eps=1e-5):
        k1, k2, k3, k4 = jax.random.split(k, 4)
        gamma = jax.random.uniform(k1, (ch,), minval=0.5, maxval=1.5)
        beta = jax.random.normal(k2, (ch,)) * 0.1
        mean = jax.random.normal(k3, (ch,)) * 0.1
        var = jax.random.uniform(k4, (ch,), minval=0.5, maxval=1.5)
        scale = gamma / jnp.sqrt(var + eps)
        bias = beta - mean * scale
        return scale, bias

    # PyTorch conv weight layout is (Cout, Cin, kH, kW).
    w1_t = jax.random.normal(keys[0], (Cm, C, 1, 1)) * (1.0 / jnp.sqrt(C))
    w2_t = jax.random.normal(keys[1], (Cm, Cm, 3, 3)) * (1.0 / jnp.sqrt(9 * Cm))
    w3_t = jax.random.normal(keys[2], (C, Cm, 1, 1)) * (1.0 / jnp.sqrt(Cm))

    s1, b1 = bn_fold(keys[3], Cm)
    s2, b2 = bn_fold(keys[4], Cm)
    s3, b3 = bn_fold(keys[5], C)

    # Fold BN scale into conv weights (per output channel).
    w1 = jnp.transpose(w1_t[:, :, 0, 0], (1, 0)) * s1[None, :]                 # (C, Cm)
    w2_hwio = jnp.transpose(w2_t, (2, 3, 1, 0)) * s2[None, None, None, :]      # (3,3,Cm,Cm)
    w2 = w2_hwio.reshape(9 * Cm, Cm)                                           # im2col layout
    w3 = jnp.transpose(w3_t[:, :, 0, 0], (1, 0)) * s3[None, :]                 # (Cm, C)

    return {"w1": w1, "b1": b1[None, :],
            "w2": w2, "b2": b2[None, :],
            "w3": w3, "b3": b3[None, :]}


def stack_params(all_params):
    keys = ("w1", "b1", "w2", "b2", "w3", "b3")
    return {k: jnp.stack([p[k] for p in all_params]) for k in keys}


# ----------------------------------------------------------------------------
# Pure-JAX reference (independent conv implementation) for verification.
# ----------------------------------------------------------------------------
def _conv_nhwc(x, w_hwio, padding):
    return jax.lax.conv_general_dilated(
        x, w_hwio, window_strides=(1, 1), padding=padding,
        dimension_numbers=("NHWC", "HWIO", "NHWC"))


def bottleneck_block_ref(x, p):
    C, Cm = p["w1"].shape
    h = _conv_nhwc(x, p["w1"].reshape(1, 1, C, Cm), "VALID")
    h = jnp.maximum(h + p["b1"][0], 0.0)
    h = _conv_nhwc(h, p["w2"].reshape(3, 3, Cm, Cm), "SAME")
    h = jnp.maximum(h + p["b2"][0], 0.0)
    h = _conv_nhwc(h, p["w3"].reshape(1, 1, Cm, C), "VALID")
    h = h + p["b3"][0]
    return jnp.maximum(h + x, 0.0)


def bottleneck5_ref(x_nchw, all_params):
    x = jnp.transpose(x_nchw, (0, 2, 3, 1))
    for p in all_params:
        x = bottleneck_block_ref(x, p)
    return jnp.transpose(x, (0, 3, 1, 2))


# ----------------------------------------------------------------------------
if __name__ == "__main__":
    N, PLANES, H, W = 2, 16, 8, 8            # small shapes; planes divisible by 4

    root = jax.random.PRNGKey(0)
    kx, *kblocks = jax.random.split(root, 6)

    x = jax.random.normal(kx, (N, PLANES, H, W), dtype=jnp.float32)   # NCHW
    all_params = [make_bottleneck_params(k, PLANES) for k in kblocks]
    stacked = stack_params(all_params)

    out = jax.block_until_ready(bottleneck5_forward(x, stacked))
    ref = jax.block_until_ready(bottleneck5_ref(x, all_params))

    assert out.shape == x.shape
    max_err = jnp.max(jnp.abs(out - ref))
    assert jnp.allclose(out, ref, atol=1e-4, rtol=1e-4), f"max abs err {max_err}"

    print("KERNEL_OK")
</pallas_src>

<mosaic_0001>
module attributes {stable_mosaic.version = 11 : i64} {
  func.func @_bottleneck5_kernel(%arg0: i32, %arg1: memref<1x8x8x16xf32, #tpu.memory_space<vmem>>, %arg2: memref<5x16x4xf32, #tpu.memory_space<vmem>>, %arg3: memref<5x1x4xf32, #tpu.memory_space<vmem>>, %arg4: memref<5x36x4xf32, #tpu.memory_space<vmem>>, %arg5: memref<5x1x4xf32, #tpu.memory_space<vmem>>, %arg6: memref<5x4x16xf32, #tpu.memory_space<vmem>>, %arg7: memref<5x1x16xf32, #tpu.memory_space<vmem>>, %arg8: memref<1x8x8x16xf32, #tpu.memory_space<vmem>>) attributes {dimension_semantics = [#tpu.dimension_semantics<parallel>], iteration_bounds = array<i64: 2>, scalar_prefetch = 0 : i64, scratch_operands = 0 : i64, tpu.core_type = #tpu.core_type<tc>, window_params = [{transform_indices = @transform_0, window_bounds = array<i64: 1, 8, 8, 16>}, {pipeline_mode = #tpu.pipeline_mode<synchronous>, transform_indices = @transform_1, window_bounds = array<i64: 5, 16, 4>}, {pipeline_mode = #tpu.pipeline_mode<synchronous>, transform_indices = @transform_2, window_bounds = array<i64: 5, 1, 4>}, {pipeline_mode = #tpu.pipeline_mode<synchronous>, transform_indices = @transform_3, window_bounds = array<i64: 5, 36, 4>}, {pipeline_mode = #tpu.pipeline_mode<synchronous>, transform_indices = @transform_4, window_bounds = array<i64: 5, 1, 4>}, {pipeline_mode = #tpu.pipeline_mode<synchronous>, transform_indices = @transform_5, window_bounds = array<i64: 5, 4, 16>}, {pipeline_mode = #tpu.pipeline_mode<synchronous>, transform_indices = @transform_6, window_bounds = array<i64: 5, 1, 16>}, {transform_indices = @transform_7, window_bounds = array<i64: 1, 8, 8, 16>}]} {
    %c0 = arith.constant 0 : index
    %c0_0 = arith.constant 0 : index
    %c0_1 = arith.constant 0 : index
    %c0_2 = arith.constant 0 : index
    %0 = vector.load %arg1[%c0, %c0_0, %c0_1, %c0_2] : memref<1x8x8x16xf32, #tpu.memory_space<vmem>>, vector<1x8x8x16xf32>
    %1 = vector.shape_cast %0 : vector<1x8x8x16xf32> to vector<64x16xf32>
    %c0_3 = arith.constant 0 : index
    %c0_4 = arith.constant 0 : index
    %c0_5 = arith.constant 0 : index
    %2 = vector.load %arg2[%c0_3, %c0_4, %c0_5] : memref<5x16x4xf32, #tpu.memory_space<vmem>>, vector<1x16x4xf32>
    %3 = vector.shape_cast %2 : vector<1x16x4xf32> to vector<16x4xf32>
    %cst = arith.constant dense<0.000000e+00> : vector<64x4xf32>
    %4 = tpu.matmul %1, %3, %cst {dimension_numbers = #tpu.dot_dimension_numbers<[1], [0], [0], [1], [0, 0, 1, 1], [], []>} : vector<64x16xf32>, vector<16x4xf32>, vector<64x4xf32> -> vector<64x4xf32>
    %c0_6 = arith.constant 0 : index
    %c0_7 = arith.constant 0 : index
    %c0_8 = arith.constant 0 : index
    %5 = vector.load %arg3[%c0_6, %c0_7, %c0_8] : memref<5x1x4xf32, #tpu.memory_space<vmem>>, vector<1x1x4xf32>
    %6 = vector.shape_cast %5 : vector<1x1x4xf32> to vector<1x4xf32>
    %7 = vector.broadcast %6 : vector<1x4xf32> to vector<64x4xf32>
    %8 = arith.addf %4, %7 : vector<64x4xf32>
    %cst_9 = arith.constant 0.000000e+00 : f32
    %9 = vector.broadcast %cst_9 : f32 to vector<64x4xf32>
    %10 = arith.maximumf %8, %9 : vector<64x4xf32>
    %11 = vector.shape_cast %10 : vector<64x4xf32> to vector<8x8x4xf32>
    %cst_10 = arith.constant 0.000000e+00 : f32
    %12 = vector.broadcast %cst_10 : f32 to vector<8x1x4xf32>
    %cst_11 = arith.constant 0.000000e+00 : f32
    %13 = vector.broadcast %cst_11 : f32 to vector<1x10x4xf32>
    %14 = tpu.concatenate %12, %11, %12 in 1 : vector<8x1x4xf32>, vector<8x8x4xf32>, vector<8x1x4xf32> -> vector<8x10x4xf32>
    %15 = tpu.concatenate %13, %14, %13 in 0 : vector<1x10x4xf32>, vector<8x10x4xf32>, vector<1x10x4xf32> -> vector<10x10x4xf32>
    %16 = vector.extract_strided_slice %15 {offsets = [0, 0, 0], sizes = [8, 8, 4], strides = [1, 1, 1]} : vector<10x10x4xf32> to vector<8x8x4xf32>
    %17 = vector.extract_strided_slice %15 {offsets = [0, 1, 0], sizes = [8, 8, 4], strides = [1, 1, 1]} : vector<10x10x4xf32> to vector<8x8x4xf32>
    %18 = vector.extract_strided_slice %15 {offsets = [0, 2, 0], sizes = [8, 8, 4], strides = [1, 1, 1]} : vector<10x10x4xf32> to vector<8x8x4xf32>
    %19 = vector.extract_strided_slice %15 {offsets = [1, 0, 0], sizes = [8, 8, 4], strides = [1, 1, 1]} : vector<10x10x4xf32> to vector<8x8x4xf32>
    %20 = vector.extract_strided_slice %15 {offsets = [1, 1, 0], sizes = [8, 8, 4], strides = [1, 1, 1]} : vector<10x10x4xf32> to vector<8x8x4xf32>
    %21 = vector.extract_strided_slice %15 {offsets = [1, 2, 0], sizes = [8, 8, 4], strides = [1, 1, 1]} : vector<10x10x4xf32> to vector<8x8x4xf32>
    %22 = vector.extract_strided_slice %15 {offsets = [2, 0, 0], sizes = [8, 8, 4], strides = [1, 1, 1]} : vector<10x10x4xf32> to vector<8x8x4xf32>
    %23 = vector.extract_strided_slice %15 {offsets = [2, 1, 0], sizes = [8, 8, 4], strides = [1, 1, 1]} : vector<10x10x4xf32> to vector<8x8x4xf32>
    %24 = vector.extract_strided_slice %15 {offsets = [2, 2, 0], sizes = [8, 8, 4], strides = [1, 1, 1]} : vector<10x10x4xf32> to vector<8x8x4xf32>
    %25 = tpu.concatenate %16, %17, %18, %19, %20, %21, %22, %23, %24 in 2 : vector<8x8x4xf32>, vector<8x8x4xf32>, vector<8x8x4xf32>, vector<8x8x4xf32>, vector<8x8x4xf32>, vector<8x8x4xf32>, vector<8x8x4xf32>, vector<8x8x4xf32>, vector<8x8x4xf32> -> vector<8x8x36xf32>
    %26 = vector.shape_cast %25 : vector<8x8x36xf32> to vector<64x36xf32>
    %c0_12 = arith.constant 0 : index
    %c0_13 = arith.constant 0 : index
    %c0_14 = arith.constant 0 : index
    %27 = vector.load %arg4[%c0_12, %c0_13, %c0_14] : memref<5x36x4xf32, #tpu.memory_space<vmem>>, vector<1x36x4xf32>
    %28 = vector.shape_cast %27 : vector<1x36x4xf32> to vector<36x4xf32>
    %cst_15 = arith.constant dense<0.000000e+00> : vector<64x4xf32>
    %29 = tpu.matmul %26, %28, %cst_15 {dimension_numbers = #tpu.dot_dimension_numbers<[1], [0], [0], [1], [0, 0, 1, 1], [], []>} : vector<64x36xf32>, vector<36x4xf32>, vector<64x4xf32> -> vector<64x4xf32>
    %c0_16 = arith.constant 0 : index
    %c0_17 = arith.constant 0 : index
    %c0_18 = arith.constant 0 : index
    %30 = vector.load %arg5[%c0_16, %c0_17, %c0_18] : memref<5x1x4xf32, #tpu.memory_space<vmem>>, vector<1x1x4xf32>
    %31 = vector.shape_cast %30 : vector<1x1x4xf32> to vector<1x4xf32>
    %32 = vector.broadcast %31 : vector<1x4xf32> to vector<64x4xf32>
    %33 = arith.addf %29, %32 : vector<64x4xf32>
    %cst_19 = arith.constant 0.000000e+00 : f32
    %34 = vector.broadcast %cst_19 : f32 to vector<64x4xf32>
    %35 = arith.maximumf %33, %34 : vector<64x4xf32>
    %c0_20 = arith.constant 0 : index
    %c0_21 = arith.constant 0 : index
    %c0_22 = arith.constant 0 : index
    %36 = vector.load %arg6[%c0_20, %c0_21, %c0_22] : memref<5x4x16xf32, #tpu.memory_space<vmem>>, vector<1x4x16xf32>
    %37 = vector.shape_cast %36 : vector<1x4x16xf32> to vector<4x16xf32>
    %cst_23 = arith.constant dense<0.000000e+00> : vector<64x16xf32>
    %38 = tpu.matmul %35, %37, %cst_23 {dimension_numbers = #tpu.dot_dimension_numbers<[1], [0], [0], [1], [0, 0, 1, 1], [], []>} : vector<64x4xf32>, vector<4x16xf32>, vector<64x16xf32> -> vector<64x16xf32>
    %c0_24 = arith.constant 0 : index
    %c0_25 = arith.constant 0 : index
    %c0_26 = arith.constant 0 : index
    %39 = vector.load %arg7[%c0_24, %c0_25, %c0_26] : memref<5x1x16xf32, #tpu.memory_space<vmem>>, vector<1x1x16xf32>
    %40 = vector.shape_cast %39 : vector<1x1x16xf32> to vector<1x16xf32>
    %41 = vector.broadcast %40 : vector<1x16xf32> to vector<64x16xf32>
    %42 = arith.addf %38, %41 : vector<64x16xf32>
    %43 = arith.addf %42, %1 : vector<64x16xf32>
    %cst_27 = arith.constant 0.000000e+00 : f32
    %44 = vector.broadcast %cst_27 : f32 to vector<64x16xf32>
    %45 = arith.maximumf %43, %44 : vector<64x16xf32>
    %c1 = arith.constant 1 : index
    %c0_28 = arith.constant 0 : index
    %c0_29 = arith.constant 0 : index
    %46 = vector.load %arg2[%c1, %c0_28, %c0_29] : memref<5x16x4xf32, #tpu.memory_space<vmem>>, vector<1x16x4xf32>
    %47 = vector.shape_cast %46 : vector<1x16x4xf32> to vector<16x4xf32>
    %cst_30 = arith.constant dense<0.000000e+00> : vector<64x4xf32>
    %48 = tpu.matmul %45, %47, %cst_30 {dimension_numbers = #tpu.dot_dimension_numbers<[1], [0], [0], [1], [0, 0, 1, 1], [], []>} : vector<64x16xf32>, vector<16x4xf32>, vector<64x4xf32> -> vector<64x4xf32>
    %c1_31 = arith.constant 1 : index
    %c0_32 = arith.constant 0 : index
    %c0_33 = arith.constant 0 : index
    %49 = vector.load %arg3[%c1_31, %c0_32, %c0_33] : memref<5x1x4xf32, #tpu.memory_space<vmem>>, vector<1x1x4xf32>
    %50 = vector.shape_cast %49 : vector<1x1x4xf32> to vector<1x4xf32>
    %51 = vector.broadcast %50 : vector<1x4xf32> to vector<64x4xf32>
    %52 = arith.addf %48, %51 : vector<64x4xf32>
    %cst_34 = arith.constant 0.000000e+00 : f32
    %53 = vector.broadcast %cst_34 : f32 to vector<64x4xf32>
    %54 = arith.maximumf %52, %53 : vector<64x4xf32>
    %55 = vector.shape_cast %54 : vector<64x4xf32> to vector<8x8x4xf32>
    %cst_35 = arith.constant 0.000000e+00 : f32
    %56 = vector.broadcast %cst_35 : f32 to vector<8x1x4xf32>
    %cst_36 = arith.constant 0.000000e+00 : f32
    %57 = vector.broadcast %cst_36 : f32 to vector<1x10x4xf32>
    %58 = tpu.concatenate %56, %55, %56 in 1 : vector<8x1x4xf32>, vector<8x8x4xf32>, vector<8x1x4xf32> -> vector<8x10x4xf32>
    %59 = tpu.concatenate %57, %58, %57 in 0 : vector<1x10x4xf32>, vector<8x10x4xf32>, vector<1x10x4xf32> -> vector<10x10x4xf32>
    %60 = vector.extract_strided_slice %59 {offsets = [0, 0, 0], sizes = [8, 8, 4], strides = [1, 1, 1]} : vector<10x10x4xf32> to vector<8x8x4xf32>
    %61 = vector.extract_strided_slice %59 {offsets = [0, 1, 0], sizes = [8, 8, 4], strides = [1, 1, 1]} : vector<10x10x4xf32> to vector<8x8x4xf32>
    %62 = vector.extract_strided_slice %59 {offsets = [0, 2, 0], sizes = [8, 8, 4], strides = [1, 1, 1]} : vector<10x10x4xf32> to vector<8x8x4xf32>
    %63 = vector.extract_strided_slice %59 {offsets = [1, 0, 0], sizes = [8, 8, 4], strides = [1, 1, 1]} : vector<10x10x4xf32> to vector<8x8x4xf32>
    %64 = vector.extract_strided_slice %59 {offsets = [1, 1, 0], sizes = [8, 8, 4], strides = [1, 1, 1]} : vector<10x10x4xf32> to vector<8x8x4xf32>
    %65 = vector.extract_strided_slice %59 {offsets = [1, 2, 0], sizes = [8, 8, 4], strides = [1, 1, 1]} : vector<10x10x4xf32> to vector<8x8x4xf32>
    %66 = vector.extract_strided_slice %59 {offsets = [2, 0, 0], sizes = [8, 8, 4], strides = [1, 1, 1]} : vector<10x10x4xf32> to vector<8x8x4xf32>
    %67 = vector.extract_strided_slice %59 {offsets = [2, 1, 0], sizes = [8, 8, 4], strides = [1, 1, 1]} : vector<10x10x4xf32> to vector<8x8x4xf32>
    %68 = vector.extract_strided_slice %59 {offsets = [2, 2, 0], sizes = [8, 8, 4], strides = [1, 1, 1]} : vector<10x10x4xf32> to vector<8x8x4xf32>
    %69 = tpu.concatenate %60, %61, %62, %63, %64, %65, %66, %67, %68 in 2 : vector<8x8x4xf32>, vector<8x8x4xf32>, vector<8x8x4xf32>, vector<8x8x4xf32>, vector<8x8x4xf32>, vector<8x8x4xf32>, vector<8x8x4xf32>, vector<8x8x4xf32>, vector<8x8x4xf32> -> vector<8x8x36xf32>
    %70 = vector.shape_cast %69 : vector<8x8x36xf32> to vector<64x36xf32>
    %c1_37 = arith.constant 1 : index
    %c0_38 = arith.constant 0 : index
    %c0_39 = arith.constant 0 : index
    %71 = vector.load %arg4[%c1_37, %c0_38, %c0_39] : memref<5x36x4xf32, #tpu.memory_space<vmem>>, vector<1x36x4xf32>
    %72 = vector.shape_cast %71 : vector<1x36x4xf32> to vector<36x4xf32>
    %cst_40 = arith.constant dense<0.000000e+00> : vector<64x4xf32>
    %73 = tpu.matmul %70, %72, %cst_40 {dimension_numbers = #tpu.dot_dimension_numbers<[1], [0], [0], [1], [0, 0, 1, 1], [], []>} : vector<64x36xf32>, vector<36x4xf32>, vector<64x4xf32> -> vector<64x4xf32>
    %c1_41 = arith.constant 1 : index
    %c0_42 = arith.constant 0 : index
    %c0_43 = arith.constant 0 : index
    %74 = vector.load %arg5[%c1_41, %c0_42, %c0_43] : memref<5x1x4xf32, #tpu.memory_space<vmem>>, vector<1x1x4xf32>
    %75 = vector.shape_cast %74 : vector<1x1x4xf32> to vector<1x4xf32>
    %76 = vector.broadcast %75 : vector<1x4xf32> to vector<64x4xf32>
    %77 = arith.addf %73, %76 : vector<64x4xf32>
    %cst_44 = arith.constant 0.000000e+00 : f32
    %78 = vector.broadcast %cst_44 : f32 to vector<64x4xf32>
    %79 = arith.maximumf %77, %78 : vector<64x4xf32>
    %c1_45 = arith.constant 1 : index
    %c0_46 = arith.constant 0 : index
    %c0_47 = arith.constant 0 : index
    %80 = vector.load %arg6[%c1_45, %c0_46, %c0_47] : memref<5x4x16xf32, #tpu.memory_space<vmem>>, vector<1x4x16xf32>
    %81 = vector.shape_cast %80 : vector<1x4x16xf32> to vector<4x16xf32>
    %cst_48 = arith.constant dense<0.000000e+00> : vector<64x16xf32>
    %82 = tpu.matmul %79, %81, %cst_48 {dimension_numbers = #tpu.dot_dimension_numbers<[1], [0], [0], [1], [0, 0, 1, 1], [], []>} : vector<64x4xf32>, vector<4x16xf32>, vector<64x16xf32> -> vector<64x16xf32>
    %c1_49 = arith.constant 1 : index
    %c0_50 = arith.constant 0 : index
    %c0_51 = arith.constant 0 : index
    %83 = vector.load %arg7[%c1_49, %c0_50, %c0_51] : memref<5x1x16xf32, #tpu.memory_space<vmem>>, vector<1x1x16xf32>
    %84 = vector.shape_cast %83 : vector<1x1x16xf32> to vector<1x16xf32>
    %85 = vector.broadcast %84 : vector<1x16xf32> to vector<64x16xf32>
    %86 = arith.addf %82, %85 : vector<64x16xf32>
    %87 = arith.addf %86, %45 : vector<64x16xf32>
    %cst_52 = arith.constant 0.000000e+00 : f32
    %88 = vector.broadcast %cst_52 : f32 to vector<64x16xf32>
    %89 = arith.maximumf %87, %88 : vector<64x16xf32>
    %c2 = arith.constant 2 : index
    %c0_53 = arith.constant 0 : index
    %c0_54 = arith.constant 0 : index
    %90 = vector.load %arg2[%c2, %c0_53, %c0_54] : memref<5x16x4xf32, #tpu.memory_space<vmem>>, vector<1x16x4xf32>
    %91 = vector.shape_cast %90 : vector<1x16x4xf32> to vector<16x4xf32>
    %cst_55 = arith.constant dense<0.000000e+00> : vector<64x4xf32>
    %92 = tpu.matmul %89, %91, %cst_55 {dimension_numbers = #tpu.dot_dimension_numbers<[1], [0], [0], [1], [0, 0, 1, 1], [], []>} : vector<64x16xf32>, vector<16x4xf32>, vector<64x4xf32> -> vector<64x4xf32>
    %c2_56 = arith.constant 2 : index
    %c0_57 = arith.constant 0 : index
    %c0_58 = arith.constant 0 : index
    %93 = vector.load %arg3[%c2_56, %c0_57, %c0_58] : memref<5x1x4xf32, #tpu.memory_space<vmem>>, vector<1x1x4xf32>
    %94 = vector.shape_cast %93 : vector<1x1x4xf32> to vector<1x4xf32>
    %95 = vector.broadcast %94 : vector<1x4xf32> to vector<64x4xf32>
    %96 = arith.addf %92, %95 : vector<64x4xf32>
    %cst_59 = arith.constant 0.000000e+00 : f32
    %97 = vector.broadcast %cst_59 : f32 to vector<64x4xf32>
    %98 = arith.maximumf %96, %97 : vector<64x4xf32>
    %99 = vector.shape_cast %98 : vector<64x4xf32> to vector<8x8x4xf32>
    %cst_60 = arith.constant 0.000000e+00 : f32
    %100 = vector.broadcast %cst_60 : f32 to vector<8x1x4xf32>
    %cst_61 = arith.constant 0.000000e+00 : f32
    %101 = vector.broadcast %cst_61 : f32 to vector<1x10x4xf32>
    %102 = tpu.concatenate %100, %99, %100 in 1 : vector<8x1x4xf32>, vector<8x8x4xf32>, vector<8x1x4xf32> -> vector<8x10x4xf32>
    %103 = tpu.concatenate %101, %102, %101 in 0 : vector<1x10x4xf32>, vector<8x10x4xf32>, vector<1x10x4xf32> -> vector<10x10x4xf32>
    %104 = vector.extract_strided_slice %103 {offsets = [0, 0, 0], sizes = [8, 8, 4], strides = [1, 1, 1]} : vector<10x10x4xf32> to vector<8x8x4xf32>
    %105 = vector.extract_strided_slice %103 {offsets = [0, 1, 0], sizes = [8, 8, 4], strides = [1, 1, 1]} : vector<10x10x4xf32> to vector<8x8x4xf32>
    %106 = vector.extract_strided_slice %103 {offsets = [0, 2, 0], sizes = [8, 8, 4], strides = [1, 1, 1]} : vector<10x10x4xf32> to vector<8x8x4xf32>
    %107 = vector.extract_strided_slice %103 {offsets = [1, 0, 0], sizes = [8, 8, 4], strides = [1, 1, 1]} : vector<10x10x4xf32> to vector<8x8x4xf32>
    %108 = vector.extract_strided_slice %103 {offsets = [1, 1, 0], sizes = [8, 8, 4], strides = [1, 1, 1]} : vector<10x10x4xf32> to vector<8x8x4xf32>
    %109 = vector.extract_strided_slice %103 {offsets = [1, 2, 0], sizes = [8, 8, 4], strides = [1, 1, 1]} : vector<10x10x4xf32> to vector<8x8x4xf32>
    %110 = vector.extract_strided_slice %103 {offsets = [2, 0, 0], sizes = [8, 8, 4], strides = [1, 1, 1]} : vector<10x10x4xf32> to vector<8x8x4xf32>
    %111 = vector.extract_strided_slice %103 {offsets = [2, 1, 0], sizes = [8, 8, 4], strides = [1, 1, 1]} : vector<10x10x4xf32> to vector<8x8x4xf32>
    %112 = vector.extract_strided_slice %103 {offsets = [2, 2, 0], sizes = [8, 8, 4], strides = [1, 1, 1]} : vector<10x10x4xf32> to vector<8x8x4xf32>
    %113 = tpu.concatenate %104, %105, %106, %107, %108, %109, %110, %111, %112 in 2 : vector<8x8x4xf32>, vector<8x8x4xf32>, vector<8x8x4xf32>, vector<8x8x4xf32>, vector<8x8x4xf32>, vector<8x8x4xf32>, vector<8x8x4xf32>, vector<8x8x4xf32>, vector<8x8x4xf32> -> vector<8x8x36xf32>
    %114 = vector.shape_cast %113 : vector<8x8x36xf32> to vector<64x36xf32>
    %c2_62 = arith.constant 2 : index
    %c0_63 = arith.constant 0 : index
    %c0_64 = arith.constant 0 : index
    %115 = vector.load %arg4[%c2_62, %c0_63, %c0_64] : memref<5x36x4xf32, #tpu.memory_space<vmem>>, vector<1x36x4xf32>
    %116 = vector.shape_cast %115 : vector<1x36x4xf32> to vector<36x4xf32>
    %cst_65 = arith.constant dense<0.000000e+00> : vector<64x4xf32>
    %117 = tpu.matmul %114, %116, %cst_65 {dimension_numbers = #tpu.dot_dimension_numbers<[1], [0], [0], [1], [0, 0, 1, 1], [], []>} : vector<64x36xf32>, vector<36x4xf32>, vector<64x4xf32> -> vector<64x4xf32>
    %c2_66 = arith.constant 2 : index
    %c0_67 = arith.constant 0 : index
    %c0_68 = arith.constant 0 : index
    %118 = vector.load %arg5[%c2_66, %c0_67, %c0_68] : memref<5x1x4xf32, #tpu.memory_space<vmem>>, vector<1x1x4xf32>
    %119 = vector.shape_cast %118 : vector<1x1x4xf32> to vector<1x4xf32>
    %120 = vector.broadcast %119 : vector<1x4xf32> to vector<64x4xf32>
    %121 = arith.addf %117, %120 : vector<64x4xf32>
    %cst_69 = arith.constant 0.000000e+00 : f32
    %122 = vector.broadcast %cst_69 : f32 to vector<64x4xf32>
    %123 = arith.maximumf %121, %122 : vector<64x4xf32>
    %c2_70 = arith.constant 2 : index
    %c0_71 = arith.constant 0 : index
    %c0_72 = arith.constant 0 : index
    %124 = vector.load %arg6[%c2_70, %c0_71, %c0_72] : memref<5x4x16xf32, #tpu.memory_space<vmem>>, vector<1x4x16xf32>
    %125 = vector.shape_cast %124 : vector<1x4x16xf32> to vector<4x16xf32>
    %cst_73 = arith.constant dense<0.000000e+00> : vector<64x16xf32>
    %126 = tpu.matmul %123, %125, %cst_73 {dimension_numbers = #tpu.dot_dimension_numbers<[1], [0], [0], [1], [0, 0, 1, 1], [], []>} : vector<64x4xf32>, vector<4x16xf32>, vector<64x16xf32> -> vector<64x16xf32>
    %c2_74 = arith.constant 2 : index
    %c0_75 = arith.constant 0 : index
    %c0_76 = arith.constant 0 : index
    %127 = vector.load %arg7[%c2_74, %c0_75, %c0_76] : memref<5x1x16xf32, #tpu.memory_space<vmem>>, vector<1x1x16xf32>
    %128 = vector.shape_cast %127 : vector<1x1x16xf32> to vector<1x16xf32>
    %129 = vector.broadcast %128 : vector<1x16xf32> to vector<64x16xf32>
    %130 = arith.addf %126, %129 : vector<64x16xf32>
    %131 = arith.addf %130, %89 : vector<64x16xf32>
    %cst_77 = arith.constant 0.000000e+00 : f32
    %132 = vector.broadcast %cst_77 : f32 to vector<64x16xf32>
    %133 = arith.maximumf %131, %132 : vector<64x16xf32>
    %c3 = arith.constant 3 : index
    %c0_78 = arith.constant 0 : index
    %c0_79 = arith.constant 0 : index
    %134 = vector.load %arg2[%c3, %c0_78, %c0_79] : memref<5x16x4xf32, #tpu.memory_space<vmem>>, vector<1x16x4xf32>
    %135 = vector.shape_cast %134 : vector<1x16x4xf32> to vector<16x4xf32>
    %cst_80 = arith.constant dense<0.000000e+00> : vector<64x4xf32>
    %136 = tpu.matmul %133, %135, %cst_80 {dimension_numbers = #tpu.dot_dimension_numbers<[1], [0], [0], [1], [0, 0, 1, 1], [], []>} : vector<64x16xf32>, vector<16x4xf32>, vector<64x4xf32> -> vector<64x4xf32>
    %c3_81 = arith.constant 3 : index
    %c0_82 = arith.constant 0 : index
    %c0_83 = arith.constant 0 : index
    %137 = vector.load %arg3[%c3_81, %c0_82, %c0_83] : memref<5x1x4xf32, #tpu.memory_space<vmem>>, vector<1x1x4xf32>
    %138 = vector.shape_cast %137 : vector<1x1x4xf32> to vector<1x4xf32>
    %139 = vector.broadcast %138 : vector<1x4xf32> to vector<64x4xf32>
    %140 = arith.addf %136, %139 : vector<64x4xf32>
    %cst_84 = arith.constant 0.000000e+00 : f32
    %141 = vector.broadcast %cst_84 : f32 to vector<64x4xf32>
    %142 = arith.maximumf %140, %141 : vector<64x4xf32>
    %143 = vector.shape_cast %142 : vector<64x4xf32> to vector<8x8x4xf32>
    %cst_85 = arith.constant 0.000000e+00 : f32
    %144 = vector.broadcast %cst_85 : f32 to vector<8x1x4xf32>
    %cst_86 = arith.constant 0.000000e+00 : f32
    %145 = vector.broadcast %cst_86 : f32 to vector<1x10x4xf32>
    %146 = tpu.concatenate %144, %143, %144 in 1 : vector<8x1x4xf32>, vector<8x8x4xf32>, vector<8x1x4xf32> -> vector<8x10x4xf32>
    %147 = tpu.concatenate %145, %146, %145 in 0 : vector<1x10x4xf32>, vector<8x10x4xf32>, vector<1x10x4xf32> -> vector<10x10x4xf32>
    %148 = vector.extract_strided_slice %147 {offsets = [0, 0, 0], sizes = [8, 8, 4], strides = [1, 1, 1]} : vector<10x10x4xf32> to vector<8x8x4xf32>
    %149 = vector.extract_strided_slice %147 {offsets = [0, 1, 0], sizes = [8, 8, 4], strides = [1, 1, 1]} : vector<10x10x4xf32> to vector<8x8x4xf32>
    %150 = vector.extract_strided_slice %147 {offsets = [0, 2, 0], sizes = [8, 8, 4], strides = [1, 1, 1]} : vector<10x10x4xf32> to vector<8x8x4xf32>
    %151 = vector.extract_strided_slice %147 {offsets = [1, 0, 0], sizes = [8, 8, 4], strides = [1, 1, 1]} : vector<10x10x4xf32> to vector<8x8x4xf32>
    %152 = vector.extract_strided_slice %147 {offsets = [1, 1, 0], sizes = [8, 8, 4], strides = [1, 1, 1]} : vector<10x10x4xf32> to vector<8x8x4xf32>
    %153 = vector.extract_strided_slice %147 {offsets = [1, 2, 0], sizes = [8, 8, 4], strides = [1, 1, 1]} : vector<10x10x4xf32> to vector<8x8x4xf32>
    %154 = vector.extract_strided_slice %147 {offsets = [2, 0, 0], sizes = [8, 8, 4], strides = [1, 1, 1]} : vector<10x10x4xf32> to vector<8x8x4xf32>
    %155 = vector.extract_strided_slice %147 {offsets = [2, 1, 0], sizes = [8, 8, 4], strides = [1, 1, 1]} : vector<10x10x4xf32> to vector<8x8x4xf32>
    %156 = vector.extract_strided_slice %147 {offsets = [2, 2, 0], sizes = [8, 8, 4], strides = [1, 1, 1]} : vector<10x10x4xf32> to vector<8x8x4xf32>
    %157 = tpu.concatenate %148, %149, %150, %151, %152, %153, %154, %155, %156 in 2 : vector<8x8x4xf32>, vector<8x8x4xf32>, vector<8x8x4xf32>, vector<8x8x4xf32>, vector<8x8x4xf32>, vector<8x8x4xf32>, vector<8x8x4xf32>, vector<8x8x4xf32>, vector<8x8x4xf32> -> vector<8x8x36xf32>
    %158 = vector.shape_cast %157 : vector<8x8x36xf32> to vector<64x36xf32>
    %c3_87 = arith.constant 3 : index
    %c0_88 = arith.constant 0 : index
    %c0_89 = arith.constant 0 : index
    %159 = vector.load %arg4[%c3_87, %c0_88, %c0_89] : memref<5x36x4xf32, #tpu.memory_space<vmem>>, vector<1x36x4xf32>
    %160 = vector.shape_cast %159 : vector<1x36x4xf32> to vector<36x4xf32>
    %cst_90 = arith.constant dense<0.000000e+00> : vector<64x4xf32>
    %161 = tpu.matmul %158, %160, %cst_90 {dimension_numbers = #tpu.dot_dimension_numbers<[1], [0], [0], [1], [0, 0, 1, 1], [], []>} : vector<64x36xf32>, vector<36x4xf32>, vector<64x4xf32> -> vector<64x4xf32>
    %c3_91 = arith.constant 3 : index
    %c0_92 = arith.constant 0 : index
    %c0_93 = arith.constant 0 : index
    %162 = vector.load %arg5[%c3_91, %c0_92, %c0_93] : memref<5x1x4xf32, #tpu.memory_space<vmem>>, vector<1x1x4xf32>
    %163 = vector.shape_cast %162 : vector<1x1x4xf32> to vector<1x4xf32>
    %164 = vector.broadcast %163 : vector<1x4xf32> to vector<64x4xf32>
    %165 = arith.addf %161, %164 : vector<64x4xf32>
    %cst_94 = arith.constant 0.000000e+00 : f32
    %166 = vector.broadcast %cst_94 : f32 to vector<64x4xf32>
    %167 = arith.maximumf %165, %166 : vector<64x4xf32>
    %c3_95 = arith.constant 3 : index
    %c0_96 = arith.constant 0 : index
    %c0_97 = arith.constant 0 : index
    %168 = vector.load %arg6[%c3_95, %c0_96, %c0_97] : memref<5x4x16xf32, #tpu.memory_space<vmem>>, vector<1x4x16xf32>
    %169 = vector.shape_cast %168 : vector<1x4x16xf32> to vector<4x16xf32>
    %cst_98 = arith.constant dense<0.000000e+00> : vector<64x16xf32>
    %170 = tpu.matmul %167, %169, %cst_98 {dimension_numbers = #tpu.dot_dimension_numbers<[1], [0], [0], [1], [0, 0, 1, 1], [], []>} : vector<64x4xf32>, vector<4x16xf32>, vector<64x16xf32> -> vector<64x16xf32>
    %c3_99 = arith.constant 3 : index
    %c0_100 = arith.constant 0 : index
    %c0_101 = arith.constant 0 : index
    %171 = vector.load %arg7[%c3_99, %c0_100, %c0_101] : memref<5x1x16xf32, #tpu.memory_space<vmem>>, vector<1x1x16xf32>
    %172 = vector.shape_cast %171 : vector<1x1x16xf32> to vector<1x16xf32>
    %173 = vector.broadcast %172 : vector<1x16xf32> to vector<64x16xf32>
    %174 = arith.addf %170, %173 : vector<64x16xf32>
    %175 = arith.addf %174, %133 : vector<64x16xf32>
    %cst_102 = arith.constant 0.000000e+00 : f32
    %176 = vector.broadcast %cst_102 : f32 to vector<64x16xf32>
    %177 = arith.maximumf %175, %176 : vector<64x16xf32>
    %c4 = arith.constant 4 : index
    %c0_103 = arith.constant 0 : index
    %c0_104 = arith.constant 0 : index
    %178 = vector.load %arg2[%c4, %c0_103, %c0_104] : memref<5x16x4xf32, #tpu.memory_space<vmem>>, vector<1x16x4xf32>
    %179 = vector.shape_cast %178 : vector<1x16x4xf32> to vector<16x4xf32>
    %cst_105 = arith.constant dense<0.000000e+00> : vector<64x4xf32>
    %180 = tpu.matmul %177, %179, %cst_105 {dimension_numbers = #tpu.dot_dimension_numbers<[1], [0], [0], [1], [0, 0, 1, 1], [], []>} : vector<64x16xf32>, vector<16x4xf32>, vector<64x4xf32> -> vector<64x4xf32>
    %c4_106 = arith.constant 4 : index
    %c0_107 = arith.constant 0 : index
    %c0_108 = arith.constant 0 : index
    %181 = vector.load %arg3[%c4_106, %c0_107, %c0_108] : memref<5x1x4xf32, #tpu.memory_space<vmem>>, vector<1x1x4xf32>
    %182 = vector.shape_cast %181 : vector<1x1x4xf32> to vector<1x4xf32>
    %183 = vector.broadcast %182 : vector<1x4xf32> to vector<64x4xf32>
    %184 = arith.addf %180, %183 : vector<64x4xf32>
    %cst_109 = arith.constant 0.000000e+00 : f32
    %185 = vector.broadcast %cst_109 : f32 to vector<64x4xf32>
    %186 = arith.maximumf %184, %185 : vector<64x4xf32>
    %187 = vector.shape_cast %186 : vector<64x4xf32> to vector<8x8x4xf32>
    %cst_110 = arith.constant 0.000000e+00 : f32
    %188 = vector.broadcast %cst_110 : f32 to vector<8x1x4xf32>
    %cst_111 = arith.constant 0.000000e+00 : f32
    %189 = vector.broadcast %cst_111 : f32 to vector<1x10x4xf32>
    %190 = tpu.concatenate %188, %187, %188 in 1 : vector<8x1x4xf32>, vector<8x8x4xf32>, vector<8x1x4xf32> -> vector<8x10x4xf32>
    %191 = tpu.concatenate %189, %190, %189 in 0 : vector<1x10x4xf32>, vector<8x10x4xf32>, vector<1x10x4xf32> -> vector<10x10x4xf32>
    %192 = vector.extract_strided_slice %191 {offsets = [0, 0, 0], sizes = [8, 8, 4], strides = [1, 1, 1]} : vector<10x10x4xf32> to vector<8x8x4xf32>
    %193 = vector.extract_strided_slice %191 {offsets = [0, 1, 0], sizes = [8, 8, 4], strides = [1, 1, 1]} : vector<10x10x4xf32> to vector<8x8x4xf32>
    %194 = vector.extract_strided_slice %191 {offsets = [0, 2, 0], sizes = [8, 8, 4], strides = [1, 1, 1]} : vector<10x10x4xf32> to vector<8x8x4xf32>
    %195 = vector.extract_strided_slice %191 {offsets = [1, 0, 0], sizes = [8, 8, 4], strides = [1, 1, 1]} : vector<10x10x4xf32> to vector<8x8x4xf32>
    %196 = vector.extract_strided_slice %191 {offsets = [1, 1, 0], sizes = [8, 8, 4], strides = [1, 1, 1]} : vector<10x10x4xf32> to vector<8x8x4xf32>
    %197 = vector.extract_strided_slice %191 {offsets = [1, 2, 0], sizes = [8, 8, 4], strides = [1, 1, 1]} : vector<10x10x4xf32> to vector<8x8x4xf32>
    %198 = vector.extract_strided_slice %191 {offsets = [2, 0, 0], sizes = [8, 8, 4], strides = [1, 1, 1]} : vector<10x10x4xf32> to vector<8x8x4xf32>
    %199 = vector.extract_strided_slice %191 {offsets = [2, 1, 0], sizes = [8, 8, 4], strides = [1, 1, 1]} : vector<10x10x4xf32> to vector<8x8x4xf32>
    %200 = vector.extract_strided_slice %191 {offsets = [2, 2, 0], sizes = [8, 8, 4], strides = [1, 1, 1]} : vector<10x10x4xf32> to vector<8x8x4xf32>
    %201 = tpu.concatenate %192, %193, %194, %195, %196, %197, %198, %199, %200 in 2 : vector<8x8x4xf32>, vector<8x8x4xf32>, vector<8x8x4xf32>, vector<8x8x4xf32>, vector<8x8x4xf32>, vector<8x8x4xf32>, vector<8x8x4xf32>, vector<8x8x4xf32>, vector<8x8x4xf32> -> vector<8x8x36xf32>
    %202 = vector.shape_cast %201 : vector<8x8x36xf32> to vector<64x36xf32>
    %c4_112 = arith.constant 4 : index
    %c0_113 = arith.constant 0 : index
    %c0_114 = arith.constant 0 : index
    %203 = vector.load %arg4[%c4_112, %c0_113, %c0_114] : memref<5x36x4xf32, #tpu.memory_space<vmem>>, vector<1x36x4xf32>
    %204 = vector.shape_cast %203 : vector<1x36x4xf32> to vector<36x4xf32>
    %cst_115 = arith.constant dense<0.000000e+00> : vector<64x4xf32>
    %205 = tpu.matmul %202, %204, %cst_115 {dimension_numbers = #tpu.dot_dimension_numbers<[1], [0], [0], [1], [0, 0, 1, 1], [], []>} : vector<64x36xf32>, vector<36x4xf32>, vector<64x4xf32> -> vector<64x4xf32>
    %c4_116 = arith.constant 4 : index
    %c0_117 = arith.constant 0 : index
    %c0_118 = arith.constant 0 : index
    %206 = vector.load %arg5[%c4_116, %c0_117, %c0_118] : memref<5x1x4xf32, #tpu.memory_space<vmem>>, vector<1x1x4xf32>
    %207 = vector.shape_cast %206 : vector<1x1x4xf32> to vector<1x4xf32>
    %208 = vector.broadcast %207 : vector<1x4xf32> to vector<64x4xf32>
    %209 = arith.addf %205, %208 : vector<64x4xf32>
    %cst_119 = arith.constant 0.000000e+00 : f32
    %210 = vector.broadcast %cst_119 : f32 to vector<64x4xf32>
    %211 = arith.maximumf %209, %210 : vector<64x4xf32>
    %c4_120 = arith.constant 4 : index
    %c0_121 = arith.constant 0 : index
    %c0_122 = arith.constant 0 : index
    %212 = vector.load %arg6[%c4_120, %c0_121, %c0_122] : memref<5x4x16xf32, #tpu.memory_space<vmem>>, vector<1x4x16xf32>
    %213 = vector.shape_cast %212 : vector<1x4x16xf32> to vector<4x16xf32>
    %cst_123 = arith.constant dense<0.000000e+00> : vector<64x16xf32>
    %214 = tpu.matmul %211, %213, %cst_123 {dimension_numbers = #tpu.dot_dimension_numbers<[1], [0], [0], [1], [0, 0, 1, 1], [], []>} : vector<64x4xf32>, vector<4x16xf32>, vector<64x16xf32> -> vector<64x16xf32>
    %c4_124 = arith.constant 4 : index
    %c0_125 = arith.constant 0 : index
    %c0_126 = arith.constant 0 : index
    %215 = vector.load %arg7[%c4_124, %c0_125, %c0_126] : memref<5x1x16xf32, #tpu.memory_space<vmem>>, vector<1x1x16xf32>
    %216 = vector.shape_cast %215 : vector<1x1x16xf32> to vector<1x16xf32>
    %217 = vector.broadcast %216 : vector<1x16xf32> to vector<64x16xf32>
    %218 = arith.addf %214, %217 : vector<64x16xf32>
    %219 = arith.addf %218, %177 : vector<64x16xf32>
    %cst_127 = arith.constant 0.000000e+00 : f32
    %220 = vector.broadcast %cst_127 : f32 to vector<64x16xf32>
    %221 = arith.maximumf %219, %220 : vector<64x16xf32>
    %222 = vector.shape_cast %221 : vector<64x16xf32> to vector<1x8x8x16xf32>
    %c0_128 = arith.constant 0 : index
    %c0_129 = arith.constant 0 : index
    %c0_130 = arith.constant 0 : index
    %c0_131 = arith.constant 0 : index
    %223 = vector.load %arg8[%c0_128, %c0_129, %c0_130, %c0_131] : memref<1x8x8x16xf32, #tpu.memory_space<vmem>>, vector<1x8x8x16xf32>
    tpu.vector_store %arg8[%c0_128, %c0_129, %c0_130, %c0_131], %222 {strides = array<i32>} : memref<1x8x8x16xf32, #tpu.memory_space<vmem>>, vector<1x8x8x16xf32>,
    return
  }
  func.func @transform_0(%arg0: i32) -> (i32, i32, i32, i32) {
    %c0_i32 = arith.constant 0 : i32
    %c0_i32_0 = arith.constant 0 : i32
    %c0_i32_1 = arith.constant 0 : i32
    %c0_i32_2 = arith.constant 0 : i32
    return %arg0, %c0_i32, %c0_i32_0, %c0_i32_1 : i32, i32, i32, i32
  }
  func.func @transform_1(%arg0: i32) -> (i32, i32, i32) {
    %c0_i32 = arith.constant 0 : i32
    %c0_i32_0 = arith.constant 0 : i32
    %c0_i32_1 = arith.constant 0 : i32
    %c0_i32_2 = arith.constant 0 : i32
    return %c0_i32, %c0_i32_0, %c0_i32_1 : i32, i32, i32
  }
  func.func @transform_2(%arg0: i32) -> (i32, i32, i32) {
    %c0_i32 = arith.constant 0 : i32
    %c0_i32_0 = arith.constant 0 : i32
    %c0_i32_1 = arith.constant 0 : i32
    %c0_i32_2 = arith.constant 0 : i32
    return %c0_i32, %c0_i32_0, %c0_i32_1 : i32, i32, i32
  }
  func.func @transform_3(%arg0: i32) -> (i32, i32, i32) {
    %c0_i32 = arith.constant 0 : i32
    %c0_i32_0 = arith.constant 0 : i32
    %c0_i32_1 = arith.constant 0 : i32
    %c0_i32_2 = arith.constant 0 : i32
    return %c0_i32, %c0_i32_0, %c0_i32_1 : i32, i32, i32
  }
  func.func @transform_4(%arg0: i32) -> (i32, i32, i32) {
    %c0_i32 = arith.constant 0 : i32
    %c0_i32_0 = arith.constant 0 : i32
    %c0_i32_1 = arith.constant 0 : i32
    %c0_i32_2 = arith.constant 0 : i32
    return %c0_i32, %c0_i32_0, %c0_i32_1 : i32, i32, i32
  }
  func.func @transform_5(%arg0: i32) -> (i32, i32, i32) {
    %c0_i32 = arith.constant 0 : i32
    %c0_i32_0 = arith.constant 0 : i32
    %c0_i32_1 = arith.constant 0 : i32
    %c0_i32_2 = arith.constant 0 : i32
    return %c0_i32, %c0_i32_0, %c0_i32_1 : i32, i32, i32
  }
  func.func @transform_6(%arg0: i32) -> (i32, i32, i32) {
    %c0_i32 = arith.constant 0 : i32
    %c0_i32_0 = arith.constant 0 : i32
    %c0_i32_1 = arith.constant 0 : i32
    %c0_i32_2 = arith.constant 0 : i32
    return %c0_i32, %c0_i32_0, %c0_i32_1 : i32, i32, i32
  }
  func.func @transform_7(%arg0: i32) -> (i32, i32, i32, i32) {
    %c0_i32 = arith.constant 0 : i32
    %c0_i32_0 = arith.constant 0 : i32
    %c0_i32_1 = arith.constant 0 : i32
    %c0_i32_2 = arith.constant 0 : i32
    return %arg0, %c0_i32, %c0_i32_0, %c0_i32_1 : i32, i32, i32, i32
  }
}

</mosaic_0001>

<llo_original>
// kernel: bottleneck5_forward.1
$region0: #{bottleneck5_forward.1}
  #allocation0 [shape = 'u32[]', space=smem, size = 0x4, offset = 0x4, fixed_abs, tag = 'smem constant byte address 0x4 - core index']
  #allocation1 [shape = 'u32[144,128]{1,0:T(1,128)}', space=vmem, size = 0x12000, scoped, tag = 'internal scratch']
  %s0 = inlined_call_operand.vmem [shape: f32[2,8,8,16], index: 0, kind: input, shape index: {}, may-alias: {0,7}]
  %s1 = inlined_call_operand.vmem [shape: f32[5,16,4], index: 1, kind: input, shape index: {}]
  %s2 = inlined_call_operand.vmem [shape: f32[5,1,4], index: 2, kind: input, shape index: {}]
  %s3 = inlined_call_operand.vmem [shape: f32[5,36,4], index: 3, kind: input, shape index: {}]
  %s4 = inlined_call_operand.vmem [shape: f32[5,1,4], index: 4, kind: input, shape index: {}]
  %s5 = inlined_call_operand.vmem [shape: f32[5,4,16], index: 5, kind: input, shape index: {}]
  %s6 = inlined_call_operand.vmem [shape: f32[5,1,16], index: 6, kind: input, shape index: {}]
  %s7 = inlined_call_operand.vmem [shape: f32[2,8,8,16], index: 7, kind: output, shape index: {}, may-alias: {0,7}]
  %s8 = sld [smem:[#allocation0]]
  $region61: #{bottleneck5_forward.1} parent=0
    _
  %s10 = ssub.s32 1, %s8
  %s11 = scalar_select 0, %s10, %s8
  loop: start=0, step=1, limit=4
  $region2: #{bottleneck5_forward.1} parent=0 // loop_pre_header
    _
  $region3: #{bottleneck5_forward.1} parent=0 // loop_header
    %s13 = sphi 0, %s17
    %p14 = scmp.ge.s32.totalorder %s13, 4
    %s23 = sphi 0, %s25
    %s26 = sphi 0, %s23
    %s27 = sphi 0, %s26
    %s43 = sphi 0, %s27
    %s47 = sphi 0, %s47
    %s49 = sphi 0, %s47
    %s50 = sphi 0, %s49
    %s64 = sphi 0, %s50
    %s68 = sphi 0, %s68
    %s70 = sphi 0, %s68
    %s71 = sphi 0, %s70
    %s85 = sphi 0, %s71
    %s89 = sphi 0, %s89
    %s91 = sphi 0, %s89
    %s92 = sphi 0, %s91
    %s106 = sphi 0, %s92
    %s110 = sphi 0, %s110
    %s112 = sphi 0, %s110
    %s113 = sphi 0, %s112
    %s127 = sphi 0, %s113
    %s131 = sphi 0, %s131
    %s133 = sphi 0, %s131
    %s134 = sphi 0, %s133
    %s148 = sphi 0, %s134
    %s152 = sphi 0, %s152
    %s154 = sphi 0, %s152
    %s155 = sphi 0, %s154
    %s169 = sphi 0, %s155
    %s175 = sphi 0, %s177
    %s178 = sphi 0, %s175
    %s179 = sphi 0, %s178
    %s195 = sphi 0, %s179
  $region4: #{bottleneck5_forward.1} parent=0 // loop_header_branch
    %16 = sbr.rel (%p14) target = $region8
  $region5: #{bottleneck5_forward.1} parent=0 // loop_body
    %s18 = ssub.s32 %s13, 1
    %s19 = ssub.s32 %s13, 2
    %s20 = sadd.s32 %s13, 1
    %s21 = ssub.s32 %s13, %s20
    %p22 = scmp.eq.s32.totalorder %s21, 0
    %s24 = sadd.s32 %s23, 1
    %s25 = scalar_select %p22, %s23, %s24
    %p28 = pneg %p22
    %p29 = scmp.eq.s32.totalorder %s13, 1
    %p30 = por %p28, %p29
    %p31 = scmp.ne.s32.totalorder %s23, %s26
    %p32 = scmp.eq.s32.totalorder %s13, 0
    %p33 = por %p31, %p32
    %p34 = scmp.ne.s32.totalorder %s23, %s26
    %p35 = scmp.eq.s32.totalorder %s18, 1
    %p36 = por %p34, %p35
    %p37 = scmp.ne.s32.totalorder %s26, %s27
    %p38 = scmp.eq.s32.totalorder %s18, 0
    %p39 = por %p37, %p38
    %p40 = scmp.ne.s32.totalorder %s26, %s27
    %p41 = scmp.eq.s32.totalorder %s19, 1
    %p42 = por %p40, %p41
    %p44 = scmp.ne.s32.totalorder %s27, %s43
    %p45 = scmp.eq.s32.totalorder %s19, 0
    %p46 = por %p44, %p45
    %s48 = sadd.s32 %s47, 1
    %p51 = scmp.eq.s32.totalorder %s13, 1
    %p52 = scmp.ne.s32.totalorder %s47, %s49
    %p53 = scmp.eq.s32.totalorder %s13, 0
    %p54 = por %p52, %p53
    %p55 = scmp.ne.s32.totalorder %s47, %s49
    %p56 = scmp.eq.s32.totalorder %s18, 1
    %p57 = por %p55, %p56
    %p58 = scmp.ne.s32.totalorder %s49, %s50
    %p59 = scmp.eq.s32.totalorder %s18, 0
    %p60 = por %p58, %p59
    %p61 = scmp.ne.s32.totalorder %s49, %s50
    %p62 = scmp.eq.s32.totalorder %s19, 1
    %p63 = por %p61, %p62
    %p65 = scmp.ne.s32.totalorder %s50, %s64
    %p66 = scmp.eq.s32.totalorder %s19, 0
    %p67 = por %p65, %p66
    %s69 = sadd.s32 %s68, 1
    %p72 = scmp.eq.s32.totalorder %s13, 1
    %p73 = scmp.ne.s32.totalorder %s68, %s70
    %p74 = scmp.eq.s32.totalorder %s13, 0
    %p75 = por %p73, %p74
    %p76 = scmp.ne.s32.totalorder %s68, %s70
    %p77 = scmp.eq.s32.totalorder %s18, 1
    %p78 = por %p76, %p77
    %p79 = scmp.ne.s32.totalorder %s70, %s71
    %p80 = scmp.eq.s32.totalorder %s18, 0
    %p81 = por %p79, %p80
    %p82 = scmp.ne.s32.totalorder %s70, %s71
    %p83 = scmp.eq.s32.totalorder %s19, 1
    %p84 = por %p82, %p83
    %p86 = scmp.ne.s32.totalorder %s71, %s85
    %p87 = scmp.eq.s32.totalorder %s19, 0
    %p88 = por %p86, %p87
    %s90 = sadd.s32 %s89, 1
    %p93 = scmp.eq.s32.totalorder %s13, 1
    %p94 = scmp.ne.s32.totalorder %s89, %s91
    %p95 = scmp.eq.s32.totalorder %s13, 0
    %p96 = por %p94, %p95
    %p97 = scmp.ne.s32.totalorder %s89, %s91
    %p98 = scmp.eq.s32.totalorder %s18, 1
    %p99 = por %p97, %p98
    %p100 = scmp.ne.s32.totalorder %s91, %s92
    %p101 = scmp.eq.s32.totalorder %s18, 0
    %p102 = por %p100, %p101
    %p103 = scmp.ne.s32.totalorder %s91, %s92
    %p104 = scmp.eq.s32.totalorder %s19, 1
    %p105 = por %p103, %p104
    %p107 = scmp.ne.s32.totalorder %s92, %s106
    %p108 = scmp.eq.s32.totalorder %s19, 0
    %p109 = por %p107, %p108
    %s111 = sadd.s32 %s110, 1
    %p114 = scmp.eq.s32.totalorder %s13, 1
    %p115 = scmp.ne.s32.totalorder %s110, %s112
    %p116 = scmp.eq.s32.totalorder %s13, 0
    %p117 = por %p115, %p116
    %p118 = scmp.ne.s32.totalorder %s110, %s112
    %p119 = scmp.eq.s32.totalorder %s18, 1
    %p120 = por %p118, %p119
    %p121 = scmp.ne.s32.totalorder %s112, %s113
    %p122 = scmp.eq.s32.totalorder %s18, 0
    %p123 = por %p121, %p122
    %p124 = scmp.ne.s32.totalorder %s112, %s113
    %p125 = scmp.eq.s32.totalorder %s19, 1
    %p126 = por %p124, %p125
    %p128 = scmp.ne.s32.totalorder %s113, %s127
    %p129 = scmp.eq.s32.totalorder %s19, 0
    %p130 = por %p128, %p129
    %s132 = sadd.s32 %s131, 1
    %p135 = scmp.eq.s32.totalorder %s13, 1
    %p136 = scmp.ne.s32.totalorder %s131, %s133
    %p137 = scmp.eq.s32.totalorder %s13, 0
    %p138 = por %p136, %p137
    %p139 = scmp.ne.s32.totalorder %s131, %s133
    %p140 = scmp.eq.s32.totalorder %s18, 1
    %p141 = por %p139, %p140
    %p142 = scmp.ne.s32.totalorder %s133, %s134
    %p143 = scmp.eq.s32.totalorder %s18, 0
    %p144 = por %p142, %p143
    %p145 = scmp.ne.s32.totalorder %s133, %s134
    %p146 = scmp.eq.s32.totalorder %s19, 1
    %p147 = por %p145, %p146
    %p149 = scmp.ne.s32.totalorder %s134, %s148
    %p150 = scmp.eq.s32.totalorder %s19, 0
    %p151 = por %p149, %p150
    %s153 = sadd.s32 %s152, 1
    %p156 = scmp.eq.s32.totalorder %s13, 1
    %p157 = scmp.ne.s32.totalorder %s152, %s154
    %p158 = scmp.eq.s32.totalorder %s13, 0
    %p159 = por %p157, %p158
    %p160 = scmp.ne.s32.totalorder %s152, %s154
    %p161 = scmp.eq.s32.totalorder %s18, 1
    %p162 = por %p160, %p161
    %p163 = scmp.ne.s32.totalorder %s154, %s155
    %p164 = scmp.eq.s32.totalorder %s18, 0
    %p165 = por %p163, %p164
    %p166 = scmp.ne.s32.totalorder %s154, %s155
    %p167 = scmp.eq.s32.totalorder %s19, 1
    %p168 = por %p166, %p167
    %p170 = scmp.ne.s32.totalorder %s155, %s169
    %p171 = scmp.eq.s32.totalorder %s19, 0
    %p172 = por %p170, %p171
    %s173 = ssub.s32 %s13, %s20
    %p174 = scmp.eq.s32.totalorder %s173, 0
    %s176 = sadd.s32 %s175, 1
    %s177 = scalar_select %p174, %s175, %s176
    %p180 = pneg %p174
    %p181 = scmp.eq.s32.totalorder %s13, 1
    %p182 = por %p180, %p181
    %p183 = scmp.ne.s32.totalorder %s175, %s178
    %p184 = scmp.eq.s32.totalorder %s13, 0
    %p185 = por %p183, %p184
    %p186 = scmp.ne.s32.totalorder %s175, %s178
    %p187 = scmp.eq.s32.totalorder %s18, 1
    %p188 = por %p186, %p187
    %p189 = scmp.ne.s32.totalorder %s178, %s179
    %p190 = scmp.eq.s32.totalorder %s18, 0
    %p191 = por %p189, %p190
    %p192 = scmp.ne.s32.totalorder %s178, %s179
    %p193 = scmp.eq.s32.totalorder %s19, 1
    %p194 = por %p192, %p193
    %p196 = scmp.ne.s32.totalorder %s179, %s195
    %p197 = scmp.eq.s32.totalorder %s19, 0
    %p198 = por %p196, %p197
    %p199 = scmp.le.s32.totalorder 1, %s13
    %p200 = scmp.lt.s32.totalorder %s13, 3
    %p201 = pnand %p199, %p200
    %p202 = pneg %p201
    // Predicated region
    $region9: #{bottleneck5_forward.1} parent=5 // pred_check
      _
    $region10: #{bottleneck5_forward.1} parent=5 // pred_check_branch
      %204 = sbr.rel (%p201) target = $region12
    $region11: #{bottleneck5_forward.1} parent=5 // pred_region
      %s205 = ssub.s32 %s13, 1
      // Predicated region
      $region13: #{bottleneck5_forward.1} parent=11 // pred_check
        %p206 = pneg %p60
      $region14: #{bottleneck5_forward.1} parent=11 // pred_check_branch
        %208 = sbr.rel (%p206) target = $region16
      $region15: #{bottleneck5_forward.1} parent=11 // pred_region
        _
      $region16: #{bottleneck5_forward.1} parent=11 // pred_fallthru
        _
      // Predicated region
      $region17: #{bottleneck5_forward.1} parent=11 // pred_check
        %p209 = pneg %p81
      $region18: #{bottleneck5_forward.1} parent=11 // pred_check_branch
        %211 = sbr.rel (%p209) target = $region20
      $region19: #{bottleneck5_forward.1} parent=11 // pred_region
        _
      $region20: #{bottleneck5_forward.1} parent=11 // pred_fallthru
        _
      // Predicated region
      $region21: #{bottleneck5_forward.1} parent=11 // pred_check
        %p212 = pneg %p102
      $region22: #{bottleneck5_forward.1} parent=11 // pred_check_branch
        %214 = sbr.rel (%p212) target = $region24
      $region23: #{bottleneck5_forward.1} parent=11 // pred_region
        _
      $region24: #{bottleneck5_forward.1} parent=11 // pred_fallthru
        _
      // Predicated region
      $region25: #{bottleneck5_forward.1} parent=11 // pred_check
        %p215 = pneg %p123
      $region26: #{bottleneck5_forward.1} parent=11 // pred_check_branch
        %217 = sbr.rel (%p215) target = $region28
      $region27: #{bottleneck5_forward.1} parent=11 // pred_region
        _
      $region28: #{bottleneck5_forward.1} parent=11 // pred_fallthru
        _
      // Predicated region
      $region29: #{bottleneck5_forward.1} parent=11 // pred_check
        %p218 = pneg %p144
      $region30: #{bottleneck5_forward.1} parent=11 // pred_check_branch
        %220 = sbr.rel (%p218) target = $region32
      $region31: #{bottleneck5_forward.1} parent=11 // pred_region
        _
      $region32: #{bottleneck5_forward.1} parent=11 // pred_fallthru
        _
      // Predicated region
      $region33: #{bottleneck5_forward.1} parent=11 // pred_check
        %p221 = pneg %p165
      $region34: #{bottleneck5_forward.1} parent=11 // pred_check_branch
        %223 = sbr.rel (%p221) target = $region36
      $region35: #{bottleneck5_forward.1} parent=11 // pred_region
        _
      $region36: #{bottleneck5_forward.1} parent=11 // pred_fallthru
        _
    $region12: #{bottleneck5_forward.1} parent=5 // pred_fallthru
      _
    %p224 = scmp.lt.s32.totalorder %s13, 2
    // Predicated region
    $region37: #{bottleneck5_forward.1} parent=5 // pred_check
      %p225 = pneg %p224
    $region38: #{bottleneck5_forward.1} parent=5 // pred_check_branch
      %227 = sbr.rel (%p225) target = $region40
    $region39: #{bottleneck5_forward.1} parent=5 // pred_region
      // Predicated region
      $region41: #{bottleneck5_forward.1} parent=39 // pred_check
        %p228 = pneg %p33
      $region42: #{bottleneck5_forward.1} parent=39 // pred_check_branch
        %230 = sbr.rel (%p228) target = $region44
      $region43: #{bottleneck5_forward.1} parent=39 // pred_region
        %p231 = scmp.lt.s32.totalorder %s13, 1
        %s232 = scalar_select %p231, %s13, 1
        %s233 = smul.addr %s232, 8
        %s234 = smul.addr %s233, 8
        %s235 = scalar_lea.vmem %s0, %s234
      $region44: #{bottleneck5_forward.1} parent=39 // pred_fallthru
        _
    $region40: #{bottleneck5_forward.1} parent=5 // pred_fallthru
      _
    %p236 = scmp.le.s32.totalorder 1, %s13
    %p237 = scmp.lt.s32.totalorder %s13, 3
    %p238 = pnand %p236, %p237
    %p239 = pneg %p238
    // Predicated region
    $region45: #{bottleneck5_forward.1} parent=5 // pred_check
      _
    $region46: #{bottleneck5_forward.1} parent=5 // pred_check_branch
      %241 = sbr.rel (%p238) target = $region48
    $region47: #{bottleneck5_forward.1} parent=5 // pred_region
      %s242 = ssub.s32 %s13, 1
      %p243 = scmp.lt.s32.totalorder %s18, 1
      %s244 = scalar_select %p243, %s18, 1
      %s245 = smul.addr %s244, 8
      %s246 = smul.addr %s245, 8
      %s247 = scalar_lea.vmem %s0, %s246
      %p248 = pneg %p39
      %p249 = pneg %p36
      %p250 = pneg %p60
      %p251 = pneg %p57
      %p252 = pneg %p81
      %p253 = pneg %p78
      %p254 = pneg %p102
      %p255 = pneg %p99
      %p256 = pneg %p123
      %p257 = pneg %p120
      %p258 = pneg %p144
      %p259 = pneg %p141
      %p260 = pneg %p165
      %p261 = pneg %p162
      %p262 = pneg %p191
      %p263 = pneg %p188
      %p264 = scmp.lt.s32.totalorder %s18, 1
      %s265 = scalar_select %p264, %s18, 1
      %s266 = smul.addr %s265, 8
      %s267 = smul.addr %s266, 8
      %s268 = scalar_lea.vmem %s7, %s267
      %p269 = scmp.lt.s32.totalorder %s18, 1
      %s270 = scalar_select %p269, %s18, 1
      %s271 = smul.addr %s270, 8
      %s272 = smul.addr %s271, 8
      %s273 = scalar_lea.vmem %s0, %s272
      %p274 = scmp.lt.s32.totalorder %s18, 1
      %s275 = scalar_select %p274, %s18, 1
      %s276 = smul.addr %s275, 8
      %s277 = smul.addr %s276, 8
      %s278 = scalar_lea.vmem %s7, %s277
      %v279 = vld [vmem:[%s273] sm:$0xff]
      %v280 = vld [vmem:[%s273 + $0x8] sm:$0xff]
      %v281 = vld [vmem:[%s273 + $0x10] sm:$0xff]
      %v282 = vld [vmem:[%s273 + $0x18] sm:$0xff]
      %v283 = vld [vmem:[%s273 + $0x20] sm:$0xff]
      %v284 = vld [vmem:[%s273 + $0x28] sm:$0xff]
      %v285 = vld [vmem:[%s273 + $0x30] sm:$0xff]
      %v286 = vld [vmem:[%s273 + $0x38] sm:$0xff]
      %v287 = vld [vmem:[%s1] sm:$0xff]
      %v288 = vld [vmem:[%s1 + $0x8] sm:$0xff]
      %v289 = vld [vmem:[%s2] sm:$0x1]
      %v291 = vlaneseq
      %v292 = vshrl.u32 %v291, 7
      %v293 = vsub.s32 0, %v292
      %v294 = vrot.slane %v289, %v293
      %vm296 = vcmask 130048
      %v298 = vsel %vm296, %v279, 0
      %v301 = vsel %vm296, %v280, 0
      %v304 = vsel %vm296, %v281, 0
      %v307 = vsel %vm296, %v282, 0
      %v310 = vsel %vm296, %v283, 0
      %v313 = vsel %vm296, %v284, 0
      %v316 = vsel %vm296, %v285, 0
      %v319 = vsel %vm296, %v286, 0
      %321 = vmatprep.subr.mxu0 0.0
      %322 = vmatpush1.msra.mxu0 %v287
      %323 = vmatprep.subr.mxu0 0.0
      %324 = vmatpush1.msra.mxu0 %v288
      %325 = vmatprep.subr.mxu0 0.0
      %326 = vmatpush1.msra.mxu0 0.0
      %327 = vmatprep.subr.mxu0 0.0
      %328 = vmatpush1.msra.mxu0 0.0
      %329 = vmatprep.subr.mxu0 0.0
      %330 = vmatpush1.msra.mxu0 0.0
      %331 = vmatprep.subr.mxu0 0.0
      %332 = vmatpush1.msra.mxu0 0.0
      %333 = vmatprep.subr.mxu0 0.0
      %334 = vmatpush1.msra.mxu0 0.0
      %335 = vmatprep.subr.mxu0 0.0
      %336 = vmatpush1.msra.mxu0 0.0
      %337 = vmatprep.subr.mxu0 0.0
      %338 = vmatpush1.msra.mxu0 0.0
      %339 = vmatprep.subr.mxu0 0.0
      %340 = vmatpush1.msra.mxu0 0.0
      %341 = vmatprep.subr.mxu0 0.0
      %342 = vmatpush1.msra.mxu0 0.0
      %343 = vmatprep.subr.mxu0 0.0
      %344 = vmatpush1.msra.mxu0 0.0
      %345 = vmatprep.subr.mxu0 0.0
      %346 = vmatpush1.msra.mxu0 0.0
      %347 = vmatprep.subr.mxu0 0.0
      %348 = vmatpush1.msra.mxu0 0.0
      %349 = vmatprep.subr.mxu0 0.0
      %350 = vmatpush1.msra.mxu0 0.0
      %351 = vmatprep.subr.mxu0 0.0
      %352 = vmatpush1.msra.mxu0 0.0
      %353 = vmatprep.subr.mxu0 0.0
      %354 = vmatpush1.msra.mxu0 0.0
      %355 = vmatprep.subr.mxu0 0.0
      %356 = vmatpush1.msra.mxu0 0.0
      %357 = vmatprep.subr.mxu0 0.0
      %358 = vmatpush1.msra.mxu0 0.0
      %359 = vmatprep.subr.mxu0 0.0
      %360 = vmatpush1.msra.mxu0 0.0
      %361 = vmatprep.subr.mxu0 0.0
      %362 = vmatpush1.msra.mxu0 0.0
      %363 = vmatprep.subr.mxu0 0.0
      %364 = vmatpush1.msra.mxu0 0.0
      %365 = vmatprep.subr.mxu0 0.0
      %366 = vmatpush1.msra.mxu0 0.0
      %367 = vmatprep.subr.mxu0 0.0
      %368 = vmatpush1.msra.mxu0 0.0
      %369 = vmatprep.subr.mxu0 0.0
      %370 = vmatpush1.msra.mxu0 0.0
      %371 = vmatprep.subr.mxu0 0.0
      %372 = vmatpush1.msra.mxu0 0.0
      %373 = vmatprep.subr.mxu0 0.0
      %374 = vmatpush1.msra.mxu0 0.0
      %375 = vmatprep.subr.mxu0 0.0
      %376 = vmatpush1.msra.mxu0 0.0
      %377 = vmatprep.subr.mxu0 0.0
      %378 = vmatpush1.msra.mxu0 0.0
      %379 = vmatprep.subr.mxu0 0.0
      %380 = vmatpush1.msra.mxu0 0.0
      %381 = vmatprep.subr.mxu0 0.0
      %382 = vmatpush1.msra.mxu0 0.0
      %383 = vmatprep.subr.mxu0 0.0
      %384 = vmatpush1.msra.mxu0 0.0
      %385 = vmatprep.mubr.f32.mxu0 0.0
      %386 = vmatmul.mubr.f32.gmra.mrb[0].mxu0 %v298
      %v387 = vpop.f32.mrb[0].mxu0
      %v388 = vadd.f32 %v294, %v387
      %v389 = vpop.f32.mrb[0].mxu0
      %390 = vmatprep.mubr.f32.mxu0 0.0
      %391 = vmatmul.mubr.f32.gmra.mrb[0].mxu0 %v301
      %v392 = vpop.f32.mrb[0].mxu0
      %v393 = vadd.f32 %v294, %v392
      %v394 = vpop.f32.mrb[0].mxu0
      %395 = vmatprep.mubr.f32.mxu0 0.0
      %396 = vmatmul.mubr.f32.gmra.mrb[0].mxu0 %v304
      %v397 = vpop.f32.mrb[0].mxu0
      %v398 = vadd.f32 %v294, %v397
      %v399 = vpop.f32.mrb[0].mxu0
      %400 = vmatprep.mubr.f32.mxu0 0.0
      %401 = vmatmul.mubr.f32.gmra.mrb[0].mxu0 %v307
      %v402 = vpop.f32.mrb[0].mxu0
      %v403 = vadd.f32 %v294, %v402
      %v404 = vpop.f32.mrb[0].mxu0
      %405 = vmatprep.mubr.f32.mxu0 0.0
      %406 = vmatmul.mubr.f32.gmra.mrb[0].mxu0 %v310
      %v407 = vpop.f32.mrb[0].mxu0
      %v408 = vadd.f32 %v294, %v407
      %v409 = vpop.f32.mrb[0].mxu0
      %410 = vmatprep.mubr.f32.mxu0 0.0
      %411 = vmatmul.mubr.f32.gmra.mrb[0].mxu0 %v313
      %v412 = vpop.f32.mrb[0].mxu0
      %v413 = vadd.f32 %v294, %v412
      %v414 = vpop.f32.mrb[0].mxu0
      %415 = vmatprep.mubr.f32.mxu0 0.0
      %416 = vmatmul.mubr.f32.gmra.mrb[0].mxu0 %v316
      %v417 = vpop.f32.mrb[0].mxu0
      %v418 = vadd.f32 %v294, %v417
      %v419 = vpop.f32.mrb[0].mxu0
      %420 = vmatprep.mubr.f32.mxu0 0.0
      %421 = vmatmul.mubr.f32.gmra.mrb[0].mxu0 %v319
      %v422 = vpop.f32.mrb[0].mxu0
      %v423 = vadd.f32 %v294, %v422
      %v424 = vpop.f32.mrb[0].mxu0
      %425 = vdwg.mxu0
      %v426 = vmax.f32 %v388, 0.0
      %v427 = vmax.f32 %v393, 0.0
      %v428 = vmax.f32 %v398, 0.0
      %v429 = vmax.f32 %v403, 0.0
      %v430 = vmax.f32 %v408, 0.0
      %v431 = vmax.f32 %v413, 0.0
      %v432 = vmax.f32 %v418, 0.0
      %v433 = vmax.f32 %v423, 0.0
      %v442 = vrot.slane %v426, 7
      %v443 = vrot.slane %v427, 7
      %v444 = vrot.slane %v428, 7
      %v445 = vrot.slane %v429, 7
      %v446 = vrot.slane %v430, 7
      %v447 = vrot.slane %v431, 7
      %v448 = vrot.slane %v432, 7
      %v449 = vrot.slane %v433, 7
      %vm458 = vcmask 1040384
      %v459 = vsel %vm458, 0.0, %v442
      %v460 = vsel %vm458, 0.0, %v443
      %v461 = vsel %vm458, 0.0, %v444
      %v462 = vsel %vm458, 0.0, %v445
      %v463 = vsel %vm458, 0.0, %v446
      %v464 = vsel %vm458, 0.0, %v447
      %v465 = vsel %vm458, 0.0, %v448
      %v466 = vsel %vm458, 0.0, %v449
      %v467 = vsel %vm458, %v442, 0.0
      %v468 = vsel %vm458, %v443, 0.0
      %v469 = vsel %vm458, %v444, 0.0
      %v470 = vsel %vm458, %v445, 0.0
      %v471 = vsel %vm458, %v446, 0.0
      %v472 = vsel %vm458, %v447, 0.0
      %v473 = vsel %vm458, %v448, 0.0
      %v474 = vsel %vm458, %v449, 0.0
      %vm490 = vcmask 1046528
      %v491 = vrot.slane 0.0, 1
      %v492 = vsel %vm490, %v491, %v491
      %v493 = vrot.slane %v459, 1
      %v494 = vrot.slane %v467, 1
      %v495 = vsel %vm490, %v493, %v494
      %v496 = vrot.slane %v460, 1
      %v497 = vrot.slane %v468, 1
      %v498 = vsel %vm490, %v496, %v497
      %v499 = vrot.slane %v461, 1
      %v500 = vrot.slane %v469, 1
      %v501 = vsel %vm490, %v499, %v500
      %v502 = vrot.slane %v462, 1
      %v503 = vrot.slane %v470, 1
      %v504 = vsel %vm490, %v502, %v503
      %v505 = vrot.slane %v463, 1
      %v506 = vrot.slane %v471, 1
      %v507 = vsel %vm490, %v505, %v506
      %v508 = vrot.slane %v464, 1
      %v509 = vrot.slane %v472, 1
      %v510 = vsel %vm490, %v508, %v509
      %v511 = vrot.slane %v465, 1
      %v512 = vrot.slane %v473, 1
      %v513 = vsel %vm490, %v511, %v512
      %514 = vrot.lane.b32.xlu0 %v492, 4
      %v515 = vpop.permute.xlu0 %514
      %516 = vrot.lane.b32.xlu0 %v495, 4
      %v517 = vpop.permute.xlu0 %516
      %518 = vrot.lane.b32.xlu0 %v498, 4
      %v519 = vpop.permute.xlu0 %518
      %520 = vrot.lane.b32.xlu0 %v501, 4
      %v521 = vpop.permute.xlu0 %520
      %522 = vrot.lane.b32.xlu0 %v504, 4
      %v523 = vpop.permute.xlu0 %522
      %524 = vrot.lane.b32.xlu0 %v507, 4
      %v525 = vpop.permute.xlu0 %524
      %526 = vrot.lane.b32.xlu0 %v510, 4
      %v527 = vpop.permute.xlu0 %526
      %528 = vrot.lane.b32.xlu0 %v513, 4
      %v529 = vpop.permute.xlu0 %528
      %vm538 = vcmask 1045504
      %v539 = vrot.slane 0.0, 2
      %v540 = vsel %vm538, %v539, %v539
      %v541 = vrot.slane %v459, 2
      %v542 = vrot.slane %v467, 2
      %v543 = vsel %vm538, %v541, %v542
      %v544 = vrot.slane %v460, 2
      %v545 = vrot.slane %v468, 2
      %v546 = vsel %vm538, %v544, %v545
      %v547 = vrot.slane %v461, 2
      %v548 = vrot.slane %v469, 2
      %v549 = vsel %vm538, %v547, %v548
      %v550 = vrot.slane %v462, 2
      %v551 = vrot.slane %v470, 2
      %v552 = vsel %vm538, %v550, %v551
      %v553 = vrot.slane %v463, 2
      %v554 = vrot.slane %v471, 2
      %v555 = vsel %vm538, %v553, %v554
      %v556 = vrot.slane %v464, 2
      %v557 = vrot.slane %v472, 2
      %v558 = vsel %vm538, %v556, %v557
      %v559 = vrot.slane %v465, 2
      %v560 = vrot.slane %v473, 2
      %v561 = vsel %vm538, %v559, %v560
      %562 = vrot.lane.b32.xlu0 %v540, 8
      %v563 = vpop.permute.xlu0 %562
      %564 = vrot.lane.b32.xlu0 %v543, 8
      %v565 = vpop.permute.xlu0 %564
      %566 = vrot.lane.b32.xlu0 %v546, 8
      %v567 = vpop.permute.xlu0 %566
      %568 = vrot.lane.b32.xlu0 %v549, 8
      %v569 = vpop.permute.xlu0 %568
      %570 = vrot.lane.b32.xlu0 %v552, 8
      %v571 = vpop.permute.xlu0 %570
      %572 = vrot.lane.b32.xlu0 %v555, 8
      %v573 = vpop.permute.xlu0 %572
      %574 = vrot.lane.b32.xlu0 %v558, 8
      %v575 = vpop.permute.xlu0 %574
      %576 = vrot.lane.b32.xlu0 %v561, 8
      %v577 = vpop.permute.xlu0 %576
      %587 = vrot.lane.b32.xlu0 %v459, 12
      %v588 = vpop.permute.xlu0 %587
      %589 = vrot.lane.b32.xlu0 %v460, 12
      %v590 = vpop.permute.xlu0 %589
      %591 = vrot.lane.b32.xlu0 %v461, 12
      %v592 = vpop.permute.xlu0 %591
      %593 = vrot.lane.b32.xlu0 %v462, 12
      %v594 = vpop.permute.xlu0 %593
      %595 = vrot.lane.b32.xlu0 %v463, 12
      %v596 = vpop.permute.xlu0 %595
      %597 = vrot.lane.b32.xlu0 %v464, 12
      %v598 = vpop.permute.xlu0 %597
      %599 = vrot.lane.b32.xlu0 %v465, 12
      %v600 = vpop.permute.xlu0 %599
      %601 = vrot.lane.b32.xlu0 %v466, 12
      %v602 = vpop.permute.xlu0 %601
      %v612 = vrot.slane %v466, 1
      %v613 = vrot.slane %v474, 1
      %v614 = vsel %vm490, %v612, %v613
      %615 = vrot.lane.b32.xlu0 %v495, 16
      %v616 = vpop.permute.xlu0 %615
      %617 = vrot.lane.b32.xlu0 %v498, 16
      %v618 = vpop.permute.xlu0 %617
      %619 = vrot.lane.b32.xlu0 %v501, 16
      %v620 = vpop.permute.xlu0 %619
      %621 = vrot.lane.b32.xlu0 %v504, 16
      %v622 = vpop.permute.xlu0 %621
      %623 = vrot.lane.b32.xlu0 %v507, 16
      %v624 = vpop.permute.xlu0 %623
      %625 = vrot.lane.b32.xlu0 %v510, 16
      %v626 = vpop.permute.xlu0 %625
      %627 = vrot.lane.b32.xlu0 %v513, 16
      %v628 = vpop.permute.xlu0 %627
      %629 = vrot.lane.b32.xlu0 %v614, 16
      %v630 = vpop.permute.xlu0 %629
      %v639 = vrot.slane %v466, 2
      %v640 = vrot.slane %v474, 2
      %v641 = vsel %vm538, %v639, %v640
      %642 = vrot.lane.b32.xlu0 %v543, 20
      %v643 = vpop.permute.xlu0 %642
      %644 = vrot.lane.b32.xlu0 %v546, 20
      %v645 = vpop.permute.xlu0 %644
      %646 = vrot.lane.b32.xlu0 %v549, 20
      %v647 = vpop.permute.xlu0 %646
      %648 = vrot.lane.b32.xlu0 %v552, 20
      %v649 = vpop.permute.xlu0 %648
      %650 = vrot.lane.b32.xlu0 %v555, 20
      %v651 = vpop.permute.xlu0 %650
      %652 = vrot.lane.b32.xlu0 %v558, 20
      %v653 = vpop.permute.xlu0 %652
      %654 = vrot.lane.b32.xlu0 %v561, 20
      %v655 = vpop.permute.xlu0 %654
      %656 = vrot.lane.b32.xlu0 %v641, 20
      %v657 = vpop.permute.xlu0 %656
      %666 = vrot.lane.b32.xlu0 %v460, 24
      %v667 = vpop.permute.xlu0 %666
      %668 = vrot.lane.b32.xlu0 %v461, 24
      %v669 = vpop.permute.xlu0 %668
      %670 = vrot.lane.b32.xlu0 %v462, 24
      %v671 = vpop.permute.xlu0 %670
      %672 = vrot.lane.b32.xlu0 %v463, 24
      %v673 = vpop.permute.xlu0 %672
      %674 = vrot.lane.b32.xlu0 %v464, 24
      %v675 = vpop.permute.xlu0 %674
      %676 = vrot.lane.b32.xlu0 %v465, 24
      %v677 = vpop.permute.xlu0 %676
      %678 = vrot.lane.b32.xlu0 %v466, 24
      %v679 = vpop.permute.xlu0 %678
      %680 = vrot.lane.b32.xlu0 0.0, 24
      %v681 = vpop.permute.xlu0 %680
      %690 = vrot.lane.b32.xlu0 %v498, 28
      %v691 = vpop.permute.xlu0 %690
      %692 = vrot.lane.b32.xlu0 %v501, 28
      %v693 = vpop.permute.xlu0 %692
      %694 = vrot.lane.b32.xlu0 %v504, 28
      %v695 = vpop.permute.xlu0 %694
      %696 = vrot.lane.b32.xlu0 %v507, 28
      %v697 = vpop.permute.xlu0 %696
      %698 = vrot.lane.b32.xlu0 %v510, 28
      %v699 = vpop.permute.xlu0 %698
      %700 = vrot.lane.b32.xlu0 %v513, 28
      %v701 = vpop.permute.xlu0 %700
      %702 = vrot.lane.b32.xlu0 %v614, 28
      %v703 = vpop.permute.xlu0 %702
      %704 = vrot.lane.b32.xlu0 %v492, 28
      %v705 = vpop.permute.xlu0 %704
      %714 = vrot.lane.b32.xlu0 %v546, 32
      %v715 = vpop.permute.xlu0 %714
      %716 = vrot.lane.b32.xlu0 %v549, 32
      %v717 = vpop.permute.xlu0 %716
      %718 = vrot.lane.b32.xlu0 %v552, 32
      %v719 = vpop.permute.xlu0 %718
      %720 = vrot.lane.b32.xlu0 %v555, 32
      %v721 = vpop.permute.xlu0 %720
      %722 = vrot.lane.b32.xlu0 %v558, 32
      %v723 = vpop.permute.xlu0 %722
      %724 = vrot.lane.b32.xlu0 %v561, 32
      %v725 = vpop.permute.xlu0 %724
      %726 = vrot.lane.b32.xlu0 %v641, 32
      %v727 = vpop.permute.xlu0 %726
      %728 = vrot.lane.b32.xlu0 %v540, 32
      %v729 = vpop.permute.xlu0 %728
      %vm738 = vcmask 31744
      %v739 = vsel %vm738, 0.0, %v515
      %v740 = vsel %vm738, %v459, %v517
      %v741 = vsel %vm738, %v460, %v519
      %v742 = vsel %vm738, %v461, %v521
      %v743 = vsel %vm738, %v462, %v523
      %v744 = vsel %vm738, %v463, %v525
      %v745 = vsel %vm738, %v464, %v527
      %v746 = vsel %vm738, %v465, %v529
      %vm747 = vcmask 64512
      %v748 = vsel %vm747, %v739, %v563
      %v749 = vsel %vm747, %v740, %v565
      %v750 = vsel %vm747, %v741, %v567
      %v751 = vsel %vm747, %v742, %v569
      %v752 = vsel %vm747, %v743, %v571
      %v753 = vsel %vm747, %v744, %v573
      %v754 = vsel %vm747, %v745, %v575
      %v755 = vsel %vm747, %v746, %v577
      %vm756 = vcmask 97280
      %v757 = vsel %vm756, %v748, %v588
      %v758 = vsel %vm756, %v749, %v590
      %v759 = vsel %vm756, %v750, %v592
      %v760 = vsel %vm756, %v751, %v594
      %v761 = vsel %vm756, %v752, %v596
      %v762 = vsel %vm756, %v753, %v598
      %v763 = vsel %vm756, %v754, %v600
      %v764 = vsel %vm756, %v755, %v602
      %v765 = vsel %vm296, %v757, %v616
      %v766 = vsel %vm296, %v758, %v618
      %v767 = vsel %vm296, %v759, %v620
      %v768 = vsel %vm296, %v760, %v622
      %v769 = vsel %vm296, %v761, %v624
      %v770 = vsel %vm296, %v762, %v626
      %v771 = vsel %vm296, %v763, %v628
      %v772 = vsel %vm296, %v764, %v630
      %vm773 = vcmask 162816
      %v774 = vsel %vm773, %v765, %v643
      %v775 = vsel %vm773, %v766, %v645
      %v776 = vsel %vm773, %v767, %v647
      %v777 = vsel %vm773, %v768, %v649
      %v778 = vsel %vm773, %v769, %v651
      %v779 = vsel %vm773, %v770, %v653
      %v780 = vsel %vm773, %v771, %v655
      %v781 = vsel %vm773, %v772, %v657
      %vm782 = vcmask 195584
      %v783 = vsel %vm782, %v774, %v667
      %v784 = vsel %vm782, %v775, %v669
      %v785 = vsel %vm782, %v776, %v671
      %v786 = vsel %vm782, %v777, %v673
      %v787 = vsel %vm782, %v778, %v675
      %v788 = vsel %vm782, %v779, %v677
      %v789 = vsel %vm782, %v780, %v679
      %v790 = vsel %vm782, %v781, %v681
      %vm791 = vcmask 228352
      %v792 = vsel %vm791, %v783, %v691
      %v793 = vsel %vm791, %v784, %v693
      %v794 = vsel %vm791, %v785, %v695
      %v795 = vsel %vm791, %v786, %v697
      %v796 = vsel %vm791, %v787, %v699
      %v797 = vsel %vm791, %v788, %v701
      %v798 = vsel %vm791, %v789, %v703
      %v799 = vsel %vm791, %v790, %v705
      %vm800 = vcmask 261120
      %v801 = vsel %vm800, %v792, %v715
      %v802 = vsel %vm800, %v793, %v717
      %v803 = vsel %vm800, %v794, %v719
      %v804 = vsel %vm800, %v795, %v721
      %v805 = vsel %vm800, %v796, %v723
      %v806 = vsel %vm800, %v797, %v725
      %v807 = vsel %vm800, %v798, %v727
      %v808 = vsel %vm800, %v799, %v729
      %v809 = vld [vmem:[%s3] sm:$0xff]
      %v810 = vld [vmem:[%s3 + $0x8] sm:$0xff]
      %v811 = vld [vmem:[%s3 + $0x10] sm:$0xff]
      %v812 = vld [vmem:[%s3 + $0x18] sm:$0xff]
      %v813 = vld [vmem:[%s3 + $0x20] sm:$0xf]
      %v814 = vld [vmem:[%s4] sm:$0x1]
      %v816 = vlaneseq
      %v817 = vshrl.u32 %v816, 7
      %v818 = vsub.s32 0, %v817
      %v819 = vrot.slane %v814, %v818
      %vm821 = vcmask 293888
      %v823 = vsel %vm821, %v801, 0
      %v826 = vsel %vm821, %v802, 0
      %v829 = vsel %vm821, %v803, 0
      %v832 = vsel %vm821, %v804, 0
      %v835 = vsel %vm821, %v805, 0
      %v838 = vsel %vm821, %v806, 0
      %v841 = vsel %vm821, %v807, 0
      %v844 = vsel %vm821, %v808, 0
      %vm846 = vcmask 1043456
      %v848 = vsel %vm846, %v813, 0
      %850 = vmatprep.subr.mxu0 0.0
      %851 = vmatpush1.msra.mxu0 %v809
      %852 = vmatprep.subr.mxu0 0.0
      %853 = vmatpush1.msra.mxu0 %v810
      %854 = vmatprep.subr.mxu0 0.0
      %855 = vmatpush1.msra.mxu0 %v811
      %856 = vmatprep.subr.mxu0 0.0
      %857 = vmatpush1.msra.mxu0 %v812
      %858 = vmatprep.subr.mxu0 0.0
      %859 = vmatpush1.msra.mxu0 %v848
      %860 = vmatprep.subr.mxu0 0.0
      %861 = vmatpush1.msra.mxu0 0.0
      %862 = vmatprep.subr.mxu0 0.0
      %863 = vmatpush1.msra.mxu0 0.0
      %864 = vmatprep.subr.mxu0 0.0
      %865 = vmatpush1.msra.mxu0 0.0
      %866 = vmatprep.subr.mxu0 0.0
      %867 = vmatpush1.msra.mxu0 0.0
      %868 = vmatprep.subr.mxu0 0.0
      %869 = vmatpush1.msra.mxu0 0.0
      %870 = vmatprep.subr.mxu0 0.0
      %871 = vmatpush1.msra.mxu0 0.0
      %872 = vmatprep.subr.mxu0 0.0
      %873 = vmatpush1.msra.mxu0 0.0
      %874 = vmatprep.subr.mxu0 0.0
      %875 = vmatpush1.msra.mxu0 0.0
      %876 = vmatprep.subr.mxu0 0.0
      %877 = vmatpush1.msra.mxu0 0.0
      %878 = vmatprep.subr.mxu0 0.0
      %879 = vmatpush1.msra.mxu0 0.0
      %880 = vmatprep.subr.mxu0 0.0
      %881 = vmatpush1.msra.mxu0 0.0
      %882 = vmatprep.subr.mxu0 0.0
      %883 = vmatpush1.msra.mxu0 0.0
      %884 = vmatprep.subr.mxu0 0.0
      %885 = vmatpush1.msra.mxu0 0.0
      %886 = vmatprep.subr.mxu0 0.0
      %887 = vmatpush1.msra.mxu0 0.0
      %888 = vmatprep.subr.mxu0 0.0
      %889 = vmatpush1.msra.mxu0 0.0
      %890 = vmatprep.subr.mxu0 0.0
      %891 = vmatpush1.msra.mxu0 0.0
      %892 = vmatprep.subr.mxu0 0.0
      %893 = vmatpush1.msra.mxu0 0.0
      %894 = vmatprep.subr.mxu0 0.0
      %895 = vmatpush1.msra.mxu0 0.0
      %896 = vmatprep.subr.mxu0 0.0
      %897 = vmatpush1.msra.mxu0 0.0
      %898 = vmatprep.subr.mxu0 0.0
      %899 = vmatpush1.msra.mxu0 0.0
      %900 = vmatprep.subr.mxu0 0.0
      %901 = vmatpush1.msra.mxu0 0.0
      %902 = vmatprep.subr.mxu0 0.0
      %903 = vmatpush1.msra.mxu0 0.0
      %904 = vmatprep.subr.mxu0 0.0
      %905 = vmatpush1.msra.mxu0 0.0
      %906 = vmatprep.subr.mxu0 0.0
      %907 = vmatpush1.msra.mxu0 0.0
      %908 = vmatprep.subr.mxu0 0.0
      %909 = vmatpush1.msra.mxu0 0.0
      %910 = vmatprep.subr.mxu0 0.0
      %911 = vmatpush1.msra.mxu0 0.0
      %912 = vmatprep.subr.mxu0 0.0
      %913 = vmatpush1.msra.mxu0 0.0
      %914 = vmatprep.mubr.f32.mxu0 0.0
      %915 = vmatmul.mubr.f32.gmra.mrb[0].mxu0 %v823
      %v916 = vpop.f32.mrb[0].mxu0
      %v917 = vadd.f32 %v819, %v916
      %v918 = vpop.f32.mrb[0].mxu0
      %919 = vmatprep.mubr.f32.mxu0 0.0
      %920 = vmatmul.mubr.f32.gmra.mrb[0].mxu0 %v826
      %v921 = vpop.f32.mrb[0].mxu0
      %v922 = vadd.f32 %v819, %v921
      %v923 = vpop.f32.mrb[0].mxu0
      %924 = vmatprep.mubr.f32.mxu0 0.0
      %925 = vmatmul.mubr.f32.gmra.mrb[0].mxu0 %v829
      %v926 = vpop.f32.mrb[0].mxu0
      %v927 = vadd.f32 %v819, %v926
      %v928 = vpop.f32.mrb[0].mxu0
      %929 = vmatprep.mubr.f32.mxu0 0.0
      %930 = vmatmul.mubr.f32.gmra.mrb[0].mxu0 %v832
      %v931 = vpop.f32.mrb[0].mxu0
      %v932 = vadd.f32 %v819, %v931
      %v933 = vpop.f32.mrb[0].mxu0
      %934 = vmatprep.mubr.f32.mxu0 0.0
      %935 = vmatmul.mubr.f32.gmra.mrb[0].mxu0 %v835
      %v936 = vpop.f32.mrb[0].mxu0
      %v937 = vadd.f32 %v819, %v936
      %v938 = vpop.f32.mrb[0].mxu0
      %939 = vmatprep.mubr.f32.mxu0 0.0
      %940 = vmatmul.mubr.f32.gmra.mrb[0].mxu0 %v838
      %v941 = vpop.f32.mrb[0].mxu0
      %v942 = vadd.f32 %v819, %v941
      %v943 = vpop.f32.mrb[0].mxu0
      %944 = vmatprep.mubr.f32.mxu0 0.0
      %945 = vmatmul.mubr.f32.gmra.mrb[0].mxu0 %v841
      %v946 = vpop.f32.mrb[0].mxu0
      %v947 = vadd.f32 %v819, %v946
      %v948 = vpop.f32.mrb[0].mxu0
      %949 = vmatprep.mubr.f32.mxu0 0.0
      %950 = vmatmul.mubr.f32.gmra.mrb[0].mxu0 %v844
      %v951 = vpop.f32.mrb[0].mxu0
      %v952 = vadd.f32 %v819, %v951
      %v953 = vpop.f32.mrb[0].mxu0
      %954 = vdwg.mxu0
      %v955 = vmax.f32 %v917, 0.0
      %v956 = vmax.f32 %v922, 0.0
      %v957 = vmax.f32 %v927, 0.0
      %v958 = vmax.f32 %v932, 0.0
      %v959 = vmax.f32 %v937, 0.0
      %v960 = vmax.f32 %v942, 0.0
      %v961 = vmax.f32 %v947, 0.0
      %v962 = vmax.f32 %v952, 0.0
      %v963 = vld [vmem:[%s5] sm:$0xf]
      %v964 = vld [vmem:[%s6] sm:$0x1]
      %v966 = vlaneseq
      %v967 = vshrl.u32 %v966, 7
      %v968 = vsub.s32 0, %v967
      %v969 = vrot.slane %v964, %v968
      %v972 = vsel %vm738, %v955, 0
      %v975 = vsel %vm738, %v956, 0
      %v978 = vsel %vm738, %v957, 0
      %v981 = vsel %vm738, %v958, 0
      %v984 = vsel %vm738, %v959, 0
      %v987 = vsel %vm738, %v960, 0
      %v990 = vsel %vm738, %v961, 0
      %v993 = vsel %vm738, %v962, 0
      %v996 = vsel %vm846, %v963, 0
      %998 = vmatprep.subr.mxu0 0.0
      %999 = vmatpush1.msra.mxu0 %v996
      %1000 = vmatprep.subr.mxu0 0.0
      %1001 = vmatpush1.msra.mxu0 0.0
      %1002 = vmatprep.subr.mxu0 0.0
      %1003 = vmatpush1.msra.mxu0 0.0
      %1004 = vmatprep.subr.mxu0 0.0
      %1005 = vmatpush1.msra.mxu0 0.0
      %1006 = vmatprep.subr.mxu0 0.0
      %1007 = vmatpush1.msra.mxu0 0.0
      %1008 = vmatprep.subr.mxu0 0.0
      %1009 = vmatpush1.msra.mxu0 0.0
      %1010 = vmatprep.subr.mxu0 0.0
      %1011 = vmatpush1.msra.mxu0 0.0
      %1012 = vmatprep.subr.mxu0 0.0
      %1013 = vmatpush1.msra.mxu0 0.0
      %1014 = vmatprep.subr.mxu0 0.0
      %1015 = vmatpush1.msra.mxu0 0.0
      %1016 = vmatprep.subr.mxu0 0.0
      %1017 = vmatpush1.msra.mxu0 0.0
      %1018 = vmatprep.subr.mxu0 0.0
      %1019 = vmatpush1.msra.mxu0 0.0
      %1020 = vmatprep.subr.mxu0 0.0
      %1021 = vmatpush1.msra.mxu0 0.0
      %1022 = vmatprep.subr.mxu0 0.0
      %1023 = vmatpush1.msra.mxu0 0.0
      %1024 = vmatprep.subr.mxu0 0.0
      %1025 = vmatpush1.msra.mxu0 0.0
      %1026 = vmatprep.subr.mxu0 0.0
      %1027 = vmatpush1.msra.mxu0 0.0
      %1028 = vmatprep.subr.mxu0 0.0
      %1029 = vmatpush1.msra.mxu0 0.0
      %1030 = vmatprep.subr.mxu0 0.0
      %1031 = vmatpush1.msra.mxu0 0.0
      %1032 = vmatprep.subr.mxu0 0.0
      %1033 = vmatpush1.msra.mxu0 0.0
      %1034 = vmatprep.subr.mxu0 0.0
      %1035 = vmatpush1.msra.mxu0 0.0
      %1036 = vmatprep.subr.mxu0 0.0
      %1037 = vmatpush1.msra.mxu0 0.0
      %1038 = vmatprep.subr.mxu0 0.0
      %1039 = vmatpush1.msra.mxu0 0.0
      %1040 = vmatprep.subr.mxu0 0.0
      %1041 = vmatpush1.msra.mxu0 0.0
      %1042 = vmatprep.subr.mxu0 0.0
      %1043 = vmatpush1.msra.mxu0 0.0
      %1044 = vmatprep.subr.mxu0 0.0
      %1045 = vmatpush1.msra.mxu0 0.0
      %1046 = vmatprep.subr.mxu0 0.0
      %1047 = vmatpush1.msra.mxu0 0.0
      %1048 = vmatprep.subr.mxu0 0.0
      %1049 = vmatpush1.msra.mxu0 0.0
      %1050 = vmatprep.subr.mxu0 0.0
      %1051 = vmatpush1.msra.mxu0 0.0
      %1052 = vmatprep.subr.mxu0 0.0
      %1053 = vmatpush1.msra.mxu0 0.0
      %1054 = vmatprep.subr.mxu0 0.0
      %1055 = vmatpush1.msra.mxu0 0.0
      %1056 = vmatprep.subr.mxu0 0.0
      %1057 = vmatpush1.msra.mxu0 0.0
      %1058 = vmatprep.subr.mxu0 0.0
      %1059 = vmatpush1.msra.mxu0 0.0
      %1060 = vmatprep.subr.mxu0 0.0
      %1061 = vmatpush1.msra.mxu0 0.0
      %1062 = vmatprep.mubr.f32.mxu0 0.0
      %1063 = vmatmul.mubr.f32.gmra.mrb[0].mxu0 %v972
      %v1064 = vpop.f32.mrb[0].mxu0
      %v1065 = vadd.f32 %v969, %v1064
      %v1066 = vpop.f32.mrb[0].mxu0
      %1067 = vmatprep.mubr.f32.mxu0 0.0
      %1068 = vmatmul.mubr.f32.gmra.mrb[0].mxu0 %v975
      %v1069 = vpop.f32.mrb[0].mxu0
      %v1070 = vadd.f32 %v969, %v1069
      %v1071 = vpop.f32.mrb[0].mxu0
      %1072 = vmatprep.mubr.f32.mxu0 0.0
      %1073 = vmatmul.mubr.f32.gmra.mrb[0].mxu0 %v978
      %v1074 = vpop.f32.mrb[0].mxu0
      %v1075 = vadd.f32 %v969, %v1074
      %v1076 = vpop.f32.mrb[0].mxu0
      %1077 = vmatprep.mubr.f32.mxu0 0.0
      %1078 = vmatmul.mubr.f32.gmra.mrb[0].mxu0 %v981
      %v1079 = vpop.f32.mrb[0].mxu0
      %v1080 = vadd.f32 %v969, %v1079
      %v1081 = vpop.f32.mrb[0].mxu0
      %1082 = vmatprep.mubr.f32.mxu0 0.0
      %1083 = vmatmul.mubr.f32.gmra.mrb[0].mxu0 %v984
      %v1084 = vpop.f32.mrb[0].mxu0
      %v1085 = vadd.f32 %v969, %v1084
      %v1086 = vpop.f32.mrb[0].mxu0
      %1087 = vmatprep.mubr.f32.mxu0 0.0
      %1088 = vmatmul.mubr.f32.gmra.mrb[0].mxu0 %v987
      %v1089 = vpop.f32.mrb[0].mxu0
      %v1090 = vadd.f32 %v969, %v1089
      %v1091 = vpop.f32.mrb[0].mxu0
      %1092 = vmatprep.mubr.f32.mxu0 0.0
      %1093 = vmatmul.mubr.f32.gmra.mrb[0].mxu0 %v990
      %v1094 = vpop.f32.mrb[0].mxu0
      %v1095 = vadd.f32 %v969, %v1094
      %v1096 = vpop.f32.mrb[0].mxu0
      %1097 = vmatprep.mubr.f32.mxu0 0.0
      %1098 = vmatmul.mubr.f32.gmra.mrb[0].mxu0 %v993
      %v1099 = vpop.f32.mrb[0].mxu0
      %v1100 = vadd.f32 %v969, %v1099
      %v1101 = vpop.f32.mrb[0].mxu0
      %1102 = vdwg.mxu0
      %v1103 = vadd.f32 %v1065, %v279
      %v1104 = vadd.f32 %v1070, %v280
      %v1105 = vadd.f32 %v1075, %v281
      %v1106 = vadd.f32 %v1080, %v282
      %v1107 = vadd.f32 %v1085, %v283
      %v1108 = vadd.f32 %v1090, %v284
      %v1109 = vadd.f32 %v1095, %v285
      %v1110 = vadd.f32 %v1100, %v286
      %v1111 = vmax.f32 %v1103, 0.0
      %v1112 = vmax.f32 %v1104, 0.0
      %v1113 = vmax.f32 %v1105, 0.0
      %v1114 = vmax.f32 %v1106, 0.0
      %v1115 = vmax.f32 %v1107, 0.0
      %v1116 = vmax.f32 %v1108, 0.0
      %v1117 = vmax.f32 %v1109, 0.0
      %v1118 = vmax.f32 %v1110, 0.0
      %s1119 = scalar_lea.vmem %s1, 16
      %v1120 = vld [vmem:[%s1119] sm:$0xff]
      %v1121 = vld [vmem:[%s1119 + $0x8] sm:$0xff]
      %s1122 = scalar_lea.vmem %s2, 1
      %v1123 = vld [vmem:[%s1122] sm:$0x1]
      %v1125 = vlaneseq
      %v1126 = vshrl.u32 %v1125, 7
      %v1127 = vsub.s32 0, %v1126
      %v1128 = vrot.slane %v1123, %v1127
      %v1131 = vsel %vm296, %v1111, 0
      %v1134 = vsel %vm296, %v1112, 0
      %v1137 = vsel %vm296, %v1113, 0
      %v1140 = vsel %vm296, %v1114, 0
      %v1143 = vsel %vm296, %v1115, 0
      %v1146 = vsel %vm296, %v1116, 0
      %v1149 = vsel %vm296, %v1117, 0
      %v1152 = vsel %vm296, %v1118, 0
      %1154 = vmatprep.subr.mxu0 0.0
      %1155 = vmatpush1.msra.mxu0 %v1120
      %1156 = vmatprep.subr.mxu0 0.0
      %1157 = vmatpush1.msra.mxu0 %v1121
      %1158 = vmatprep.subr.mxu0 0.0
      %1159 = vmatpush1.msra.mxu0 0.0
      %1160 = vmatprep.subr.mxu0 0.0
      %1161 = vmatpush1.msra.mxu0 0.0
      %1162 = vmatprep.subr.mxu0 0.0
      %1163 = vmatpush1.msra.mxu0 0.0
      %1164 = vmatprep.subr.mxu0 0.0
      %1165 = vmatpush1.msra.mxu0 0.0
      %1166 = vmatprep.subr.mxu0 0.0
      %1167 = vmatpush1.msra.mxu0 0.0
      %1168 = vmatprep.subr.mxu0 0.0
      %1169 = vmatpush1.msra.mxu0 0.0
      %1170 = vmatprep.subr.mxu0 0.0
      %1171 = vmatpush1.msra.mxu0 0.0
      %1172 = vmatprep.subr.mxu0 0.0
      %1173 = vmatpush1.msra.mxu0 0.0
      %1174 = vmatprep.subr.mxu0 0.0
      %1175 = vmatpush1.msra.mxu0 0.0
      %1176 = vmatprep.subr.mxu0 0.0
      %1177 = vmatpush1.msra.mxu0 0.0
      %1178 = vmatprep.subr.mxu0 0.0
      %1179 = vmatpush1.msra.mxu0 0.0
      %1180 = vmatprep.subr.mxu0 0.0
      %1181 = vmatpush1.msra.mxu0 0.0
      %1182 = vmatprep.subr.mxu0 0.0
      %1183 = vmatpush1.msra.mxu0 0.0
      %1184 = vmatprep.subr.mxu0 0.0
      %1185 = vmatpush1.msra.mxu0 0.0
      %1186 = vmatprep.subr.mxu0 0.0
      %1187 = vmatpush1.msra.mxu0 0.0
      %1188 = vmatprep.subr.mxu0 0.0
      %1189 = vmatpush1.msra.mxu0 0.0
      %1190 = vmatprep.subr.mxu0 0.0
      %1191 = vmatpush1.msra.mxu0 0.0
      %1192 = vmatprep.subr.mxu0 0.0
      %1193 = vmatpush1.msra.mxu0 0.0
      %1194 = vmatprep.subr.mxu0 0.0
      %1195 = vmatpush1.msra.mxu0 0.0
      %1196 = vmatprep.subr.mxu0 0.0
      %1197 = vmatpush1.msra.mxu0 0.0
      %1198 = vmatprep.subr.mxu0 0.0
      %1199 = vmatpush1.msra.mxu0 0.0
      %1200 = vmatprep.subr.mxu0 0.0
      %1201 = vmatpush1.msra.mxu0 0.0
      %1202 = vmatprep.subr.mxu0 0.0
      %1203 = vmatpush1.msra.mxu0 0.0
      %1204 = vmatprep.subr.mxu0 0.0
      %1205 = vmatpush1.msra.mxu0 0.0
      %1206 = vmatprep.subr.mxu0 0.0
      %1207 = vmatpush1.msra.mxu0 0.0
      %1208 = vmatprep.subr.mxu0 0.0
      %1209 = vmatpush1.msra.mxu0 0.0
      %1210 = vmatprep.subr.mxu0 0.0
      %1211 = vmatpush1.msra.mxu0 0.0
      %1212 = vmatprep.subr.mxu0 0.0
      %1213 = vmatpush1.msra.mxu0 0.0
      %1214 = vmatprep.subr.mxu0 0.0
      %1215 = vmatpush1.msra.mxu0 0.0
      %1216 = vmatprep.subr.mxu0 0.0
      %1217 = vmatpush1.msra.mxu0 0.0
      %1218 = vmatprep.mubr.f32.mxu0 0.0
      %1219 = vmatmul.mubr.f32.gmra.mrb[0].mxu0 %v1131
      %v1220 = vpop.f32.mrb[0].mxu0
      %v1221 = vadd.f32 %v1128, %v1220
      %v1222 = vpop.f32.mrb[0].mxu0
      %1223 = vmatprep.mubr.f32.mxu0 0.0
      %1224 = vmatmul.mubr.f32.gmra.mrb[0].mxu0 %v1134
      %v1225 = vpop.f32.mrb[0].mxu0
      %v1226 = vadd.f32 %v1128, %v1225
      %v1227 = vpop.f32.mrb[0].mxu0
      %1228 = vmatprep.mubr.f32.mxu0 0.0
      %1229 = vmatmul.mubr.f32.gmra.mrb[0].mxu0 %v1137
      %v1230 = vpop.f32.mrb[0].mxu0
      %v1231 = vadd.f32 %v1128, %v1230
      %v1232 = vpop.f32.mrb[0].mxu0
      %1233 = vmatprep.mubr.f32.mxu0 0.0
      %1234 = vmatmul.mubr.f32.gmra.mrb[0].mxu0 %v1140
      %v1235 = vpop.f32.mrb[0].mxu0
      %v1236 = vadd.f32 %v1128, %v1235
      %v1237 = vpop.f32.mrb[0].mxu0
      %1238 = vmatprep.mubr.f32.mxu0 0.0
      %1239 = vmatmul.mubr.f32.gmra.mrb[0].mxu0 %v1143
      %v1240 = vpop.f32.mrb[0].mxu0
      %v1241 = vadd.f32 %v1128, %v1240
      %v1242 = vpop.f32.mrb[0].mxu0
      %1243 = vmatprep.mubr.f32.mxu0 0.0
      %1244 = vmatmul.mubr.f32.gmra.mrb[0].mxu0 %v1146
      %v1245 = vpop.f32.mrb[0].mxu0
      %v1246 = vadd.f32 %v1128, %v1245
      %v1247 = vpop.f32.mrb[0].mxu0
      %1248 = vmatprep.mubr.f32.mxu0 0.0
      %1249 = vmatmul.mubr.f32.gmra.mrb[0].mxu0 %v1149
      %v1250 = vpop.f32.mrb[0].mxu0
      %v1251 = vadd.f32 %v1128, %v1250
      %v1252 = vpop.f32.mrb[0].mxu0
      %1253 = vmatprep.mubr.f32.mxu0 0.0
      %1254 = vmatmul.mubr.f32.gmra.mrb[0].mxu0 %v1152
      %v1255 = vpop.f32.mrb[0].mxu0
      %v1256 = vadd.f32 %v1128, %v1255
      %v1257 = vpop.f32.mrb[0].mxu0
      %1258 = vdwg.mxu0
      %v1259 = vmax.f32 %v1221, 0.0
      %v1260 = vmax.f32 %v1226, 0.0
      %v1261 = vmax.f32 %v1231, 0.0
      %v1262 = vmax.f32 %v1236, 0.0
      %v1263 = vmax.f32 %v1241, 0.0
      %v1264 = vmax.f32 %v1246, 0.0
      %v1265 = vmax.f32 %v1251, 0.0
      %v1266 = vmax.f32 %v1256, 0.0
      %v1275 = vrot.slane %v1259, 7
      %v1276 = vrot.slane %v1260, 7
      %v1277 = vrot.slane %v1261, 7
      %v1278 = vrot.slane %v1262, 7
      %v1279 = vrot.slane %v1263, 7
      %v1280 = vrot.slane %v1264, 7
      %v1281 = vrot.slane %v1265, 7
      %v1282 = vrot.slane %v1266, 7
      %v1291 = vsel %vm458, 0.0, %v1275
      %v1292 = vsel %vm458, 0.0, %v1276
      %v1293 = vsel %vm458, 0.0, %v1277
      %v1294 = vsel %vm458, 0.0, %v1278
      %v1295 = vsel %vm458, 0.0, %v1279
      %v1296 = vsel %vm458, 0.0, %v1280
      %v1297 = vsel %vm458, 0.0, %v1281
      %v1298 = vsel %vm458, 0.0, %v1282
      %v1299 = vsel %vm458, %v1275, 0.0
      %v1300 = vsel %vm458, %v1276, 0.0
      %v1301 = vsel %vm458, %v1277, 0.0
      %v1302 = vsel %vm458, %v1278, 0.0
      %v1303 = vsel %vm458, %v1279, 0.0
      %v1304 = vsel %vm458, %v1280, 0.0
      %v1305 = vsel %vm458, %v1281, 0.0
      %v1306 = vsel %vm458, %v1282, 0.0
      %v1321 = vrot.slane %v1291, 1
      %v1322 = vrot.slane %v1299, 1
      %v1323 = vsel %vm490, %v1321, %v1322
      %v1324 = vrot.slane %v1292, 1
      %v1325 = vrot.slane %v1300, 1
      %v1326 = vsel %vm490, %v1324, %v1325
      %v1327 = vrot.slane %v1293, 1
      %v1328 = vrot.slane %v1301, 1
      %v1329 = vsel %vm490, %v1327, %v1328
      %v1330 = vrot.slane %v1294, 1
      %v1331 = vrot.slane %v1302, 1
      %v1332 = vsel %vm490, %v1330, %v1331
      %v1333 = vrot.slane %v1295, 1
      %v1334 = vrot.slane %v1303, 1
      %v1335 = vsel %vm490, %v1333, %v1334
      %v1336 = vrot.slane %v1296, 1
      %v1337 = vrot.slane %v1304, 1
      %v1338 = vsel %vm490, %v1336, %v1337
      %v1339 = vrot.slane %v1297, 1
      %v1340 = vrot.slane %v1305, 1
      %v1341 = vsel %vm490, %v1339, %v1340
      %1342 = vrot.lane.b32.xlu0 %v1323, 4
      %v1343 = vpop.permute.xlu0 %1342
      %1344 = vrot.lane.b32.xlu0 %v1326, 4
      %v1345 = vpop.permute.xlu0 %1344
      %1346 = vrot.lane.b32.xlu0 %v1329, 4
      %v1347 = vpop.permute.xlu0 %1346
      %1348 = vrot.lane.b32.xlu0 %v1332, 4
      %v1349 = vpop.permute.xlu0 %1348
      %1350 = vrot.lane.b32.xlu0 %v1335, 4
      %v1351 = vpop.permute.xlu0 %1350
      %1352 = vrot.lane.b32.xlu0 %v1338, 4
      %v1353 = vpop.permute.xlu0 %1352
      %1354 = vrot.lane.b32.xlu0 %v1341, 4
      %v1355 = vpop.permute.xlu0 %1354
      %v1363 = vrot.slane %v1291, 2
      %v1364 = vrot.slane %v1299, 2
      %v1365 = vsel %vm538, %v1363, %v1364
      %v1366 = vrot.slane %v1292, 2
      %v1367 = vrot.slane %v1300, 2
      %v1368 = vsel %vm538, %v1366, %v1367
      %v1369 = vrot.slane %v1293, 2
      %v1370 = vrot.slane %v1301, 2
      %v1371 = vsel %vm538, %v1369, %v1370
      %v1372 = vrot.slane %v1294, 2
      %v1373 = vrot.slane %v1302, 2
      %v1374 = vsel %vm538, %v1372, %v1373
      %v1375 = vrot.slane %v1295, 2
      %v1376 = vrot.slane %v1303, 2
      %v1377 = vsel %vm538, %v1375, %v1376
      %v1378 = vrot.slane %v1296, 2
      %v1379 = vrot.slane %v1304, 2
      %v1380 = vsel %vm538, %v1378, %v1379
      %v1381 = vrot.slane %v1297, 2
      %v1382 = vrot.slane %v1305, 2
      %v1383 = vsel %vm538, %v1381, %v1382
      %1384 = vrot.lane.b32.xlu0 %v1365, 8
      %v1385 = vpop.permute.xlu0 %1384
      %1386 = vrot.lane.b32.xlu0 %v1368, 8
      %v1387 = vpop.permute.xlu0 %1386
      %1388 = vrot.lane.b32.xlu0 %v1371, 8
      %v1389 = vpop.permute.xlu0 %1388
      %1390 = vrot.lane.b32.xlu0 %v1374, 8
      %v1391 = vpop.permute.xlu0 %1390
      %1392 = vrot.lane.b32.xlu0 %v1377, 8
      %v1393 = vpop.permute.xlu0 %1392
      %1394 = vrot.lane.b32.xlu0 %v1380, 8
      %v1395 = vpop.permute.xlu0 %1394
      %1396 = vrot.lane.b32.xlu0 %v1383, 8
      %v1397 = vpop.permute.xlu0 %1396
      %1406 = vrot.lane.b32.xlu0 %v1291, 12
      %v1407 = vpop.permute.xlu0 %1406
      %1408 = vrot.lane.b32.xlu0 %v1292, 12
      %v1409 = vpop.permute.xlu0 %1408
      %1410 = vrot.lane.b32.xlu0 %v1293, 12
      %v1411 = vpop.permute.xlu0 %1410
      %1412 = vrot.lane.b32.xlu0 %v1294, 12
      %v1413 = vpop.permute.xlu0 %1412
      %1414 = vrot.lane.b32.xlu0 %v1295, 12
      %v1415 = vpop.permute.xlu0 %1414
      %1416 = vrot.lane.b32.xlu0 %v1296, 12
      %v1417 = vpop.permute.xlu0 %1416
      %1418 = vrot.lane.b32.xlu0 %v1297, 12
      %v1419 = vpop.permute.xlu0 %1418
      %1420 = vrot.lane.b32.xlu0 %v1298, 12
      %v1421 = vpop.permute.xlu0 %1420
      %v1431 = vrot.slane %v1298, 1
      %v1432 = vrot.slane %v1306, 1
      %v1433 = vsel %vm490, %v1431, %v1432
      %1434 = vrot.lane.b32.xlu0 %v1323, 16
      %v1435 = vpop.permute.xlu0 %1434
      %1436 = vrot.lane.b32.xlu0 %v1326, 16
      %v1437 = vpop.permute.xlu0 %1436
      %1438 = vrot.lane.b32.xlu0 %v1329, 16
      %v1439 = vpop.permute.xlu0 %1438
      %1440 = vrot.lane.b32.xlu0 %v1332, 16
      %v1441 = vpop.permute.xlu0 %1440
      %1442 = vrot.lane.b32.xlu0 %v1335, 16
      %v1443 = vpop.permute.xlu0 %1442
      %1444 = vrot.lane.b32.xlu0 %v1338, 16
      %v1445 = vpop.permute.xlu0 %1444
      %1446 = vrot.lane.b32.xlu0 %v1341, 16
      %v1447 = vpop.permute.xlu0 %1446
      %1448 = vrot.lane.b32.xlu0 %v1433, 16
      %v1449 = vpop.permute.xlu0 %1448
      %v1458 = vrot.slane %v1298, 2
      %v1459 = vrot.slane %v1306, 2
      %v1460 = vsel %vm538, %v1458, %v1459
      %1461 = vrot.lane.b32.xlu0 %v1365, 20
      %v1462 = vpop.permute.xlu0 %1461
      %1463 = vrot.lane.b32.xlu0 %v1368, 20
      %v1464 = vpop.permute.xlu0 %1463
      %1465 = vrot.lane.b32.xlu0 %v1371, 20
      %v1466 = vpop.permute.xlu0 %1465
      %1467 = vrot.lane.b32.xlu0 %v1374, 20
      %v1468 = vpop.permute.xlu0 %1467
      %1469 = vrot.lane.b32.xlu0 %v1377, 20
      %v1470 = vpop.permute.xlu0 %1469
      %1471 = vrot.lane.b32.xlu0 %v1380, 20
      %v1472 = vpop.permute.xlu0 %1471
      %1473 = vrot.lane.b32.xlu0 %v1383, 20
      %v1474 = vpop.permute.xlu0 %1473
      %1475 = vrot.lane.b32.xlu0 %v1460, 20
      %v1476 = vpop.permute.xlu0 %1475
      %1485 = vrot.lane.b32.xlu0 %v1292, 24
      %v1486 = vpop.permute.xlu0 %1485
      %1487 = vrot.lane.b32.xlu0 %v1293, 24
      %v1488 = vpop.permute.xlu0 %1487
      %1489 = vrot.lane.b32.xlu0 %v1294, 24
      %v1490 = vpop.permute.xlu0 %1489
      %1491 = vrot.lane.b32.xlu0 %v1295, 24
      %v1492 = vpop.permute.xlu0 %1491
      %1493 = vrot.lane.b32.xlu0 %v1296, 24
      %v1494 = vpop.permute.xlu0 %1493
      %1495 = vrot.lane.b32.xlu0 %v1297, 24
      %v1496 = vpop.permute.xlu0 %1495
      %1497 = vrot.lane.b32.xlu0 %v1298, 24
      %v1498 = vpop.permute.xlu0 %1497
      %1506 = vrot.lane.b32.xlu0 %v1326, 28
      %v1507 = vpop.permute.xlu0 %1506
      %1508 = vrot.lane.b32.xlu0 %v1329, 28
      %v1509 = vpop.permute.xlu0 %1508
      %1510 = vrot.lane.b32.xlu0 %v1332, 28
      %v1511 = vpop.permute.xlu0 %1510
      %1512 = vrot.lane.b32.xlu0 %v1335, 28
      %v1513 = vpop.permute.xlu0 %1512
      %1514 = vrot.lane.b32.xlu0 %v1338, 28
      %v1515 = vpop.permute.xlu0 %1514
      %1516 = vrot.lane.b32.xlu0 %v1341, 28
      %v1517 = vpop.permute.xlu0 %1516
      %1518 = vrot.lane.b32.xlu0 %v1433, 28
      %v1519 = vpop.permute.xlu0 %1518
      %1527 = vrot.lane.b32.xlu0 %v1368, 32
      %v1528 = vpop.permute.xlu0 %1527
      %1529 = vrot.lane.b32.xlu0 %v1371, 32
      %v1530 = vpop.permute.xlu0 %1529
      %1531 = vrot.lane.b32.xlu0 %v1374, 32
      %v1532 = vpop.permute.xlu0 %1531
      %1533 = vrot.lane.b32.xlu0 %v1377, 32
      %v1534 = vpop.permute.xlu0 %1533
      %1535 = vrot.lane.b32.xlu0 %v1380, 32
      %v1536 = vpop.permute.xlu0 %1535
      %1537 = vrot.lane.b32.xlu0 %v1383, 32
      %v1538 = vpop.permute.xlu0 %1537
      %1539 = vrot.lane.b32.xlu0 %v1460, 32
      %v1540 = vpop.permute.xlu0 %1539
      %v1548 = vsel %vm738, %v1291, %v1343
      %v1549 = vsel %vm738, %v1292, %v1345
      %v1550 = vsel %vm738, %v1293, %v1347
      %v1551 = vsel %vm738, %v1294, %v1349
      %v1552 = vsel %vm738, %v1295, %v1351
      %v1553 = vsel %vm738, %v1296, %v1353
      %v1554 = vsel %vm738, %v1297, %v1355
      %v1555 = vsel %vm747, %v1548, %v1385
      %v1556 = vsel %vm747, %v1549, %v1387
      %v1557 = vsel %vm747, %v1550, %v1389
      %v1558 = vsel %vm747, %v1551, %v1391
      %v1559 = vsel %vm747, %v1552, %v1393
      %v1560 = vsel %vm747, %v1553, %v1395
      %v1561 = vsel %vm747, %v1554, %v1397
      %v1562 = vsel %vm756, %v748, %v1407
      %v1563 = vsel %vm756, %v1555, %v1409
      %v1564 = vsel %vm756, %v1556, %v1411
      %v1565 = vsel %vm756, %v1557, %v1413
      %v1566 = vsel %vm756, %v1558, %v1415
      %v1567 = vsel %vm756, %v1559, %v1417
      %v1568 = vsel %vm756, %v1560, %v1419
      %v1569 = vsel %vm756, %v1561, %v1421
      %v1570 = vsel %vm296, %v1562, %v1435
      %v1571 = vsel %vm296, %v1563, %v1437
      %v1572 = vsel %vm296, %v1564, %v1439
      %v1573 = vsel %vm296, %v1565, %v1441
      %v1574 = vsel %vm296, %v1566, %v1443
      %v1575 = vsel %vm296, %v1567, %v1445
      %v1576 = vsel %vm296, %v1568, %v1447
      %v1577 = vsel %vm296, %v1569, %v1449
      %v1578 = vsel %vm773, %v1570, %v1462
      %v1579 = vsel %vm773, %v1571, %v1464
      %v1580 = vsel %vm773, %v1572, %v1466
      %v1581 = vsel %vm773, %v1573, %v1468
      %v1582 = vsel %vm773, %v1574, %v1470
      %v1583 = vsel %vm773, %v1575, %v1472
      %v1584 = vsel %vm773, %v1576, %v1474
      %v1585 = vsel %vm773, %v1577, %v1476
      %v1586 = vsel %vm782, %v1578, %v1486
      %v1587 = vsel %vm782, %v1579, %v1488
      %v1588 = vsel %vm782, %v1580, %v1490
      %v1589 = vsel %vm782, %v1581, %v1492
      %v1590 = vsel %vm782, %v1582, %v1494
      %v1591 = vsel %vm782, %v1583, %v1496
      %v1592 = vsel %vm782, %v1584, %v1498
      %v1593 = vsel %vm782, %v1585, %v681
      %v1594 = vsel %vm791, %v1586, %v1507
      %v1595 = vsel %vm791, %v1587, %v1509
      %v1596 = vsel %vm791, %v1588, %v1511
      %v1597 = vsel %vm791, %v1589, %v1513
      %v1598 = vsel %vm791, %v1590, %v1515
      %v1599 = vsel %vm791, %v1591, %v1517
      %v1600 = vsel %vm791, %v1592, %v1519
      %v1601 = vsel %vm791, %v1593, %v705
      %v1602 = vsel %vm800, %v1594, %v1528
      %v1603 = vsel %vm800, %v1595, %v1530
      %v1604 = vsel %vm800, %v1596, %v1532
      %v1605 = vsel %vm800, %v1597, %v1534
      %v1606 = vsel %vm800, %v1598, %v1536
      %v1607 = vsel %vm800, %v1599, %v1538
      %v1608 = vsel %vm800, %v1600, %v1540
      %v1609 = vsel %vm800, %v1601, %v729
      %s1610 = scalar_lea.vmem %s3, 40
      %v1611 = vld [vmem:[%s1610] sm:$0xff]
      %v1612 = vld [vmem:[%s1610 + $0x8] sm:$0xff]
      %v1613 = vld [vmem:[%s1610 + $0x10] sm:$0xff]
      %v1614 = vld [vmem:[%s1610 + $0x18] sm:$0xff]
      %v1615 = vld [vmem:[%s1610 + $0x20] sm:$0xf]
      %s1616 = scalar_lea.vmem %s4, 1
      %v1617 = vld [vmem:[%s1616] sm:$0x1]
      %v1619 = vlaneseq
      %v1620 = vshrl.u32 %v1619, 7
      %v1621 = vsub.s32 0, %v1620
      %v1622 = vrot.slane %v1617, %v1621
      %v1625 = vsel %vm821, %v1602, 0
      %v1628 = vsel %vm821, %v1603, 0
      %v1631 = vsel %vm821, %v1604, 0
      %v1634 = vsel %vm821, %v1605, 0
      %v1637 = vsel %vm821, %v1606, 0
      %v1640 = vsel %vm821, %v1607, 0
      %v1643 = vsel %vm821, %v1608, 0
      %v1646 = vsel %vm821, %v1609, 0
      %v1649 = vsel %vm846, %v1615, 0
      %1651 = vmatprep.subr.mxu0 0.0
      %1652 = vmatpush1.msra.mxu0 %v1611
      %1653 = vmatprep.subr.mxu0 0.0
      %1654 = vmatpush1.msra.mxu0 %v1612
      %1655 = vmatprep.subr.mxu0 0.0
      %1656 = vmatpush1.msra.mxu0 %v1613
      %1657 = vmatprep.subr.mxu0 0.0
      %1658 = vmatpush1.msra.mxu0 %v1614
      %1659 = vmatprep.subr.mxu0 0.0
      %1660 = vmatpush1.msra.mxu0 %v1649
      %1661 = vmatprep.subr.mxu0 0.0
      %1662 = vmatpush1.msra.mxu0 0.0
      %1663 = vmatprep.subr.mxu0 0.0
      %1664 = vmatpush1.msra.mxu0 0.0
      %1665 = vmatprep.subr.mxu0 0.0
      %1666 = vmatpush1.msra.mxu0 0.0
      %1667 = vmatprep.subr.mxu0 0.0
      %1668 = vmatpush1.msra.mxu0 0.0
      %1669 = vmatprep.subr.mxu0 0.0
      %1670 = vmatpush1.msra.mxu0 0.0
      %1671 = vmatprep.subr.mxu0 0.0
      %1672 = vmatpush1.msra.mxu0 0.0
      %1673 = vmatprep.subr.mxu0 0.0
      %1674 = vmatpush1.msra.mxu0 0.0
      %1675 = vmatprep.subr.mxu0 0.0
      %1676 = vmatpush1.msra.mxu0 0.0
      %1677 = vmatprep.subr.mxu0 0.0
      %1678 = vmatpush1.msra.mxu0 0.0
      %1679 = vmatprep.subr.mxu0 0.0
      %1680 = vmatpush1.msra.mxu0 0.0
      %1681 = vmatprep.subr.mxu0 0.0
      %1682 = vmatpush1.msra.mxu0 0.0
      %1683 = vmatprep.subr.mxu0 0.0
      %1684 = vmatpush1.msra.mxu0 0.0
      %1685 = vmatprep.subr.mxu0 0.0
      %1686 = vmatpush1.msra.mxu0 0.0
      %1687 = vmatprep.subr.mxu0 0.0
      %1688 = vmatpush1.msra.mxu0 0.0
      %1689 = vmatprep.subr.mxu0 0.0
      %1690 = vmatpush1.msra.mxu0 0.0
      %1691 = vmatprep.subr.mxu0 0.0
      %1692 = vmatpush1.msra.mxu0 0.0
      %1693 = vmatprep.subr.mxu0 0.0
      %1694 = vmatpush1.msra.mxu0 0.0
      %1695 = vmatprep.subr.mxu0 0.0
      %1696 = vmatpush1.msra.mxu0 0.0
      %1697 = vmatprep.subr.mxu0 0.0
      %1698 = vmatpush1.msra.mxu0 0.0
      %1699 = vmatprep.subr.mxu0 0.0
      %1700 = vmatpush1.msra.mxu0 0.0
      %1701 = vmatprep.subr.mxu0 0.0
      %1702 = vmatpush1.msra.mxu0 0.0
      %1703 = vmatprep.subr.mxu0 0.0
      %1704 = vmatpush1.msra.mxu0 0.0
      %1705 = vmatprep.subr.mxu0 0.0
      %1706 = vmatpush1.msra.mxu0 0.0
      %1707 = vmatprep.subr.mxu0 0.0
      %1708 = vmatpush1.msra.mxu0 0.0
      %1709 = vmatprep.subr.mxu0 0.0
      %1710 = vmatpush1.msra.mxu0 0.0
      %1711 = vmatprep.subr.mxu0 0.0
      %1712 = vmatpush1.msra.mxu0 0.0
      %1713 = vmatprep.subr.mxu0 0.0
      %1714 = vmatpush1.msra.mxu0 0.0
      %1715 = vmatprep.mubr.f32.mxu0 0.0
      %1716 = vmatmul.mubr.f32.gmra.mrb[0].mxu0 %v1625
      %v1717 = vpop.f32.mrb[0].mxu0
      %v1718 = vadd.f32 %v1622, %v1717
      %v1719 = vpop.f32.mrb[0].mxu0
      %1720 = vmatprep.mubr.f32.mxu0 0.0
      %1721 = vmatmul.mubr.f32.gmra.mrb[0].mxu0 %v1628
      %v1722 = vpop.f32.mrb[0].mxu0
      %v1723 = vadd.f32 %v1622, %v1722
      %v1724 = vpop.f32.mrb[0].mxu0
      %1725 = vmatprep.mubr.f32.mxu0 0.0
      %1726 = vmatmul.mubr.f32.gmra.mrb[0].mxu0 %v1631
      %v1727 = vpop.f32.mrb[0].mxu0
      %v1728 = vadd.f32 %v1622, %v1727
      %v1729 = vpop.f32.mrb[0].mxu0
      %1730 = vmatprep.mubr.f32.mxu0 0.0
      %1731 = vmatmul.mubr.f32.gmra.mrb[0].mxu0 %v1634
      %v1732 = vpop.f32.mrb[0].mxu0
      %v1733 = vadd.f32 %v1622, %v1732
      %v1734 = vpop.f32.mrb[0].mxu0
      %1735 = vmatprep.mubr.f32.mxu0 0.0
      %1736 = vmatmul.mubr.f32.gmra.mrb[0].mxu0 %v1637
      %v1737 = vpop.f32.mrb[0].mxu0
      %v1738 = vadd.f32 %v1622, %v1737
      %v1739 = vpop.f32.mrb[0].mxu0
      %1740 = vmatprep.mubr.f32.mxu0 0.0
      %1741 = vmatmul.mubr.f32.gmra.mrb[0].mxu0 %v1640
      %v1742 = vpop.f32.mrb[0].mxu0
      %v1743 = vadd.f32 %v1622, %v1742
      %v1744 = vpop.f32.mrb[0].mxu0
      %1745 = vmatprep.mubr.f32.mxu0 0.0
      %1746 = vmatmul.mubr.f32.gmra.mrb[0].mxu0 %v1643
      %v1747 = vpop.f32.mrb[0].mxu0
      %v1748 = vadd.f32 %v1622, %v1747
      %v1749 = vpop.f32.mrb[0].mxu0
      %1750 = vmatprep.mubr.f32.mxu0 0.0
      %1751 = vmatmul.mubr.f32.gmra.mrb[0].mxu0 %v1646
      %v1752 = vpop.f32.mrb[0].mxu0
      %v1753 = vadd.f32 %v1622, %v1752
      %v1754 = vpop.f32.mrb[0].mxu0
      %1755 = vdwg.mxu0
      %v1756 = vmax.f32 %v1718, 0.0
      %v1757 = vmax.f32 %v1723, 0.0
      %v1758 = vmax.f32 %v1728, 0.0
      %v1759 = vmax.f32 %v1733, 0.0
      %v1760 = vmax.f32 %v1738, 0.0
      %v1761 = vmax.f32 %v1743, 0.0
      %v1762 = vmax.f32 %v1748, 0.0
      %v1763 = vmax.f32 %v1753, 0.0
      %s1764 = scalar_lea.vmem %s5, 4
      %v1765 = vld [vmem:[%s1764] sm:$0xf]
      %s1766 = scalar_lea.vmem %s6, 1
      %v1767 = vld [vmem:[%s1766] sm:$0x1]
      %v1769 = vlaneseq
      %v1770 = vshrl.u32 %v1769, 7
      %v1771 = vsub.s32 0, %v1770
      %v1772 = vrot.slane %v1767, %v1771
      %v1775 = vsel %vm738, %v1756, 0
      %v1778 = vsel %vm738, %v1757, 0
      %v1781 = vsel %vm738, %v1758, 0
      %v1784 = vsel %vm738, %v1759, 0
      %v1787 = vsel %vm738, %v1760, 0
      %v1790 = vsel %vm738, %v1761, 0
      %v1793 = vsel %vm738, %v1762, 0
      %v1796 = vsel %vm738, %v1763, 0
      %v1799 = vsel %vm846, %v1765, 0
      %1801 = vmatprep.subr.mxu0 0.0
      %1802 = vmatpush1.msra.mxu0 %v1799
      %1803 = vmatprep.subr.mxu0 0.0
      %1804 = vmatpush1.msra.mxu0 0.0
      %1805 = vmatprep.subr.mxu0 0.0
      %1806 = vmatpush1.msra.mxu0 0.0
      %1807 = vmatprep.subr.mxu0 0.0
      %1808 = vmatpush1.msra.mxu0 0.0
      %1809 = vmatprep.subr.mxu0 0.0
      %1810 = vmatpush1.msra.mxu0 0.0
      %1811 = vmatprep.subr.mxu0 0.0
      %1812 = vmatpush1.msra.mxu0 0.0
      %1813 = vmatprep.subr.mxu0 0.0
      %1814 = vmatpush1.msra.mxu0 0.0
      %1815 = vmatprep.subr.mxu0 0.0
      %1816 = vmatpush1.msra.mxu0 0.0
      %1817 = vmatprep.subr.mxu0 0.0
      %1818 = vmatpush1.msra.mxu0 0.0
      %1819 = vmatprep.subr.mxu0 0.0
      %1820 = vmatpush1.msra.mxu0 0.0
      %1821 = vmatprep.subr.mxu0 0.0
      %1822 = vmatpush1.msra.mxu0 0.0
      %1823 = vmatprep.subr.mxu0 0.0
      %1824 = vmatpush1.msra.mxu0 0.0
      %1825 = vmatprep.subr.mxu0 0.0
      %1826 = vmatpush1.msra.mxu0 0.0
      %1827 = vmatprep.subr.mxu0 0.0
      %1828 = vmatpush1.msra.mxu0 0.0
      %1829 = vmatprep.subr.mxu0 0.0
      %1830 = vmatpush1.msra.mxu0 0.0
      %1831 = vmatprep.subr.mxu0 0.0
      %1832 = vmatpush1.msra.mxu0 0.0
      %1833 = vmatprep.subr.mxu0 0.0
      %1834 = vmatpush1.msra.mxu0 0.0
      %1835 = vmatprep.subr.mxu0 0.0
      %1836 = vmatpush1.msra.mxu0 0.0
      %1837 = vmatprep.subr.mxu0 0.0
      %1838 = vmatpush1.msra.mxu0 0.0
      %1839 = vmatprep.subr.mxu0 0.0
      %1840 = vmatpush1.msra.mxu0 0.0
      %1841 = vmatprep.subr.mxu0 0.0
      %1842 = vmatpush1.msra.mxu0 0.0
      %1843 = vmatprep.subr.mxu0 0.0
      %1844 = vmatpush1.msra.mxu0 0.0
      %1845 = vmatprep.subr.mxu0 0.0
      %1846 = vmatpush1.msra.mxu0 0.0
      %1847 = vmatprep.subr.mxu0 0.0
      %1848 = vmatpush1.msra.mxu0 0.0
      %1849 = vmatprep.subr.mxu0 0.0
      %1850 = vmatpush1.msra.mxu0 0.0
      %1851 = vmatprep.subr.mxu0 0.0
      %1852 = vmatpush1.msra.mxu0 0.0
      %1853 = vmatprep.subr.mxu0 0.0
      %1854 = vmatpush1.msra.mxu0 0.0
      %1855 = vmatprep.subr.mxu0 0.0
      %1856 = vmatpush1.msra.mxu0 0.0
      %1857 = vmatprep.subr.mxu0 0.0
      %1858 = vmatpush1.msra.mxu0 0.0
      %1859 = vmatprep.subr.mxu0 0.0
      %1860 = vmatpush1.msra.mxu0 0.0
      %1861 = vmatprep.subr.mxu0 0.0
      %1862 = vmatpush1.msra.mxu0 0.0
      %1863 = vmatprep.subr.mxu0 0.0
      %1864 = vmatpush1.msra.mxu0 0.0
      %1865 = vmatprep.mubr.f32.mxu0 0.0
      %1866 = vmatmul.mubr.f32.gmra.mrb[0].mxu0 %v1775
      %v1867 = vpop.f32.mrb[0].mxu0
      %v1868 = vadd.f32 %v1772, %v1867
      %v1869 = vpop.f32.mrb[0].mxu0
      %1870 = vmatprep.mubr.f32.mxu0 0.0
      %1871 = vmatmul.mubr.f32.gmra.mrb[0].mxu0 %v1778
      %v1872 = vpop.f32.mrb[0].mxu0
      %v1873 = vadd.f32 %v1772, %v1872
      %v1874 = vpop.f32.mrb[0].mxu0
      %1875 = vmatprep.mubr.f32.mxu0 0.0
      %1876 = vmatmul.mubr.f32.gmra.mrb[0].mxu0 %v1781
      %v1877 = vpop.f32.mrb[0].mxu0
      %v1878 = vadd.f32 %v1772, %v1877
      %v1879 = vpop.f32.mrb[0].mxu0
      %1880 = vmatprep.mubr.f32.mxu0 0.0
      %1881 = vmatmul.mubr.f32.gmra.mrb[0].mxu0 %v1784
      %v1882 = vpop.f32.mrb[0].mxu0
      %v1883 = vadd.f32 %v1772, %v1882
      %v1884 = vpop.f32.mrb[0].mxu0
      %1885 = vmatprep.mubr.f32.mxu0 0.0
      %1886 = vmatmul.mubr.f32.gmra.mrb[0].mxu0 %v1787
      %v1887 = vpop.f32.mrb[0].mxu0
      %v1888 = vadd.f32 %v1772, %v1887
      %v1889 = vpop.f32.mrb[0].mxu0
      %1890 = vmatprep.mubr.f32.mxu0 0.0
      %1891 = vmatmul.mubr.f32.gmra.mrb[0].mxu0 %v1790
      %v1892 = vpop.f32.mrb[0].mxu0
      %v1893 = vadd.f32 %v1772, %v1892
      %v1894 = vpop.f32.mrb[0].mxu0
      %1895 = vmatprep.mubr.f32.mxu0 0.0
      %1896 = vmatmul.mubr.f32.gmra.mrb[0].mxu0 %v1793
      %v1897 = vpop.f32.mrb[0].mxu0
      %v1898 = vadd.f32 %v1772, %v1897
      %v1899 = vpop.f32.mrb[0].mxu0
      %1900 = vmatprep.mubr.f32.mxu0 0.0
      %1901 = vmatmul.mubr.f32.gmra.mrb[0].mxu0 %v1796
      %v1902 = vpop.f32.mrb[0].mxu0
      %v1903 = vadd.f32 %v1772, %v1902
      %v1904 = vpop.f32.mrb[0].mxu0
      %1905 = vdwg.mxu0
      %v1906 = vadd.f32 %v1868, %v1111
      %v1907 = vadd.f32 %v1873, %v1112
      %v1908 = vadd.f32 %v1878, %v1113
      %v1909 = vadd.f32 %v1883, %v1114
      %v1910 = vadd.f32 %v1888, %v1115
      %v1911 = vadd.f32 %v1893, %v1116
      %v1912 = vadd.f32 %v1898, %v1117
      %v1913 = vadd.f32 %v1903, %v1118
      %v1914 = vmax.f32 %v1906, 0.0
      %v1915 = vmax.f32 %v1907, 0.0
      %v1916 = vmax.f32 %v1908, 0.0
      %v1917 = vmax.f32 %v1909, 0.0
      %v1918 = vmax.f32 %v1910, 0.0
      %v1919 = vmax.f32 %v1911, 0.0
      %v1920 = vmax.f32 %v1912, 0.0
      %v1921 = vmax.f32 %v1913, 0.0
      %s1922 = scalar_lea.vmem %s1, 32
      %v1923 = vld [vmem:[%s1922] sm:$0xff]
      %v1924 = vld [vmem:[%s1922 + $0x8] sm:$0xff]
      %s1925 = scalar_lea.vmem %s2, 2
      %v1926 = vld [vmem:[%s1925] sm:$0x1]
      %v1928 = vlaneseq
      %v1929 = vshrl.u32 %v1928, 7
      %v1930 = vsub.s32 0, %v1929
      %v1931 = vrot.slane %v1926, %v1930
      %v1934 = vsel %vm296, %v1914, 0
      %v1937 = vsel %vm296, %v1915, 0
      %v1940 = vsel %vm296, %v1916, 0
      %v1943 = vsel %vm296, %v1917, 0
      %v1946 = vsel %vm296, %v1918, 0
      %v1949 = vsel %vm296, %v1919, 0
      %v1952 = vsel %vm296, %v1920, 0
      %v1955 = vsel %vm296, %v1921, 0
      %1957 = vmatprep.subr.mxu0 0.0
      %1958 = vmatpush1.msra.mxu0 %v1923
      %1959 = vmatprep.subr.mxu0 0.0
      %1960 = vmatpush1.msra.mxu0 %v1924
      %1961 = vmatprep.subr.mxu0 0.0
      %1962 = vmatpush1.msra.mxu0 0.0
      %1963 = vmatprep.subr.mxu0 0.0
      %1964 = vmatpush1.msra.mxu0 0.0
      %1965 = vmatprep.subr.mxu0 0.0
      %1966 = vmatpush1.msra.mxu0 0.0
      %1967 = vmatprep.subr.mxu0 0.0
      %1968 = vmatpush1.msra.mxu0 0.0
      %1969 = vmatprep.subr.mxu0 0.0
      %1970 = vmatpush1.msra.mxu0 0.0
      %1971 = vmatprep.subr.mxu0 0.0
      %1972 = vmatpush1.msra.mxu0 0.0
      %1973 = vmatprep.subr.mxu0 0.0
      %1974 = vmatpush1.msra.mxu0 0.0
      %1975 = vmatprep.subr.mxu0 0.0
      %1976 = vmatpush1.msra.mxu0 0.0
      %1977 = vmatprep.subr.mxu0 0.0
      %1978 = vmatpush1.msra.mxu0 0.0
      %1979 = vmatprep.subr.mxu0 0.0
      %1980 = vmatpush1.msra.mxu0 0.0
      %1981 = vmatprep.subr.mxu0 0.0
      %1982 = vmatpush1.msra.mxu0 0.0
      %1983 = vmatprep.subr.mxu0 0.0
      %1984 = vmatpush1.msra.mxu0 0.0
      %1985 = vmatprep.subr.mxu0 0.0
      %1986 = vmatpush1.msra.mxu0 0.0
      %1987 = vmatprep.subr.mxu0 0.0
      %1988 = vmatpush1.msra.mxu0 0.0
      %1989 = vmatprep.subr.mxu0 0.0
      %1990 = vmatpush1.msra.mxu0 0.0
      %1991 = vmatprep.subr.mxu0 0.0
      %1992 = vmatpush1.msra.mxu0 0.0
      %1993 = vmatprep.subr.mxu0 0.0
      %1994 = vmatpush1.msra.mxu0 0.0
      %1995 = vmatprep.subr.mxu0 0.0
      %1996 = vmatpush1.msra.mxu0 0.0
      %1997 = vmatprep.subr.mxu0 0.0
      %1998 = vmatpush1.msra.mxu0 0.0
      %1999 = vmatprep.subr.mxu0 0.0
      %2000 = vmatpush1.msra.mxu0 0.0
      %2001 = vmatprep.subr.mxu0 0.0
      %2002 = vmatpush1.msra.mxu0 0.0
      %2003 = vmatprep.subr.mxu0 0.0
      %2004 = vmatpush1.msra.mxu0 0.0
      %2005 = vmatprep.subr.mxu0 0.0
      %2006 = vmatpush1.msra.mxu0 0.0
      %2007 = vmatprep.subr.mxu0 0.0
      %2008 = vmatpush1.msra.mxu0 0.0
      %2009 = vmatprep.subr.mxu0 0.0
      %2010 = vmatpush1.msra.mxu0 0.0
      %2011 = vmatprep.subr.mxu0 0.0
      %2012 = vmatpush1.msra.mxu0 0.0
      %2013 = vmatprep.subr.mxu0 0.0
      %2014 = vmatpush1.msra.mxu0 0.0
      %2015 = vmatprep.subr.mxu0 0.0
      %2016 = vmatpush1.msra.mxu0 0.0
      %2017 = vmatprep.subr.mxu0 0.0
      %2018 = vmatpush1.msra.mxu0 0.0
      %2019 = vmatprep.subr.mxu0 0.0
      %2020 = vmatpush1.msra.mxu0 0.0
      %2021 = vmatprep.mubr.f32.mxu0 0.0
      %2022 = vmatmul.mubr.f32.gmra.mrb[0].mxu0 %v1934
      %v2023 = vpop.f32.mrb[0].mxu0
      %v2024 = vadd.f32 %v1931, %v2023
      %v2025 = vpop.f32.mrb[0].mxu0
      %2026 = vmatprep.mubr.f32.mxu0 0.0
      %2027 = vmatmul.mubr.f32.gmra.mrb[0].mxu0 %v1937
      %v2028 = vpop.f32.mrb[0].mxu0
      %v2029 = vadd.f32 %v1931, %v2028
      %v2030 = vpop.f32.mrb[0].mxu0
      %2031 = vmatprep.mubr.f32.mxu0 0.0
      %2032 = vmatmul.mubr.f32.gmra.mrb[0].mxu0 %v1940
      %v2033 = vpop.f32.mrb[0].mxu0
      %v2034 = vadd.f32 %v1931, %v2033
      %v2035 = vpop.f32.mrb[0].mxu0
      %2036 = vmatprep.mubr.f32.mxu0 0.0
      %2037 = vmatmul.mubr.f32.gmra.mrb[0].mxu0 %v1943
      %v2038 = vpop.f32.mrb[0].mxu0
      %v2039 = vadd.f32 %v1931, %v2038
      %v2040 = vpop.f32.mrb[0].mxu0
      %2041 = vmatprep.mubr.f32.mxu0 0.0
      %2042 = vmatmul.mubr.f32.gmra.mrb[0].mxu0 %v1946
      %v2043 = vpop.f32.mrb[0].mxu0
      %v2044 = vadd.f32 %v1931, %v2043
      %v2045 = vpop.f32.mrb[0].mxu0
      %2046 = vmatprep.mubr.f32.mxu0 0.0
      %2047 = vmatmul.mubr.f32.gmra.mrb[0].mxu0 %v1949
      %v2048 = vpop.f32.mrb[0].mxu0
      %v2049 = vadd.f32 %v1931, %v2048
      %v2050 = vpop.f32.mrb[0].mxu0
      %2051 = vmatprep.mubr.f32.mxu0 0.0
      %2052 = vmatmul.mubr.f32.gmra.mrb[0].mxu0 %v1952
      %v2053 = vpop.f32.mrb[0].mxu0
      %v2054 = vadd.f32 %v1931, %v2053
      %v2055 = vpop.f32.mrb[0].mxu0
      %2056 = vmatprep.mubr.f32.mxu0 0.0
      %2057 = vmatmul.mubr.f32.gmra.mrb[0].mxu0 %v1955
      %v2058 = vpop.f32.mrb[0].mxu0
      %v2059 = vadd.f32 %v1931, %v2058
      %v2060 = vpop.f32.mrb[0].mxu0
      %2061 = vdwg.mxu0
      %v2062 = vmax.f32 %v2024, 0.0
      %v2063 = vmax.f32 %v2029, 0.0
      %v2064 = vmax.f32 %v2034, 0.0
      %v2065 = vmax.f32 %v2039, 0.0
      %v2066 = vmax.f32 %v2044, 0.0
      %v2067 = vmax.f32 %v2049, 0.0
      %v2068 = vmax.f32 %v2054, 0.0
      %v2069 = vmax.f32 %v2059, 0.0
      %v2078 = vrot.slane %v2062, 7
      %v2079 = vrot.slane %v2063, 7
      %v2080 = vrot.slane %v2064, 7
      %v2081 = vrot.slane %v2065, 7
      %v2082 = vrot.slane %v2066, 7
      %v2083 = vrot.slane %v2067, 7
      %v2084 = vrot.slane %v2068, 7
      %v2085 = vrot.slane %v2069, 7
      %v2094 = vsel %vm458, 0.0, %v2078
      %v2095 = vsel %vm458, 0.0, %v2079
      %v2096 = vsel %vm458, 0.0, %v2080
      %v2097 = vsel %vm458, 0.0, %v2081
      %v2098 = vsel %vm458, 0.0, %v2082
      %v2099 = vsel %vm458, 0.0, %v2083
      %v2100 = vsel %vm458, 0.0, %v2084
      %v2101 = vsel %vm458, 0.0, %v2085
      %v2102 = vsel %vm458, %v2078, 0.0
      %v2103 = vsel %vm458, %v2079, 0.0
      %v2104 = vsel %vm458, %v2080, 0.0
      %v2105 = vsel %vm458, %v2081, 0.0
      %v2106 = vsel %vm458, %v2082, 0.0
      %v2107 = vsel %vm458, %v2083, 0.0
      %v2108 = vsel %vm458, %v2084, 0.0
      %v2109 = vsel %vm458, %v2085, 0.0
      %v2124 = vrot.slane %v2094, 1
      %v2125 = vrot.slane %v2102, 1
      %v2126 = vsel %vm490, %v2124, %v2125
      %v2127 = vrot.slane %v2095, 1
      %v2128 = vrot.slane %v2103, 1
      %v2129 = vsel %vm490, %v2127, %v2128
      %v2130 = vrot.slane %v2096, 1
      %v2131 = vrot.slane %v2104, 1
      %v2132 = vsel %vm490, %v2130, %v2131
      %v2133 = vrot.slane %v2097, 1
      %v2134 = vrot.slane %v2105, 1
      %v2135 = vsel %vm490, %v2133, %v2134
      %v2136 = vrot.slane %v2098, 1
      %v2137 = vrot.slane %v2106, 1
      %v2138 = vsel %vm490, %v2136, %v2137
      %v2139 = vrot.slane %v2099, 1
      %v2140 = vrot.slane %v2107, 1
      %v2141 = vsel %vm490, %v2139, %v2140
      %v2142 = vrot.slane %v2100, 1
      %v2143 = vrot.slane %v2108, 1
      %v2144 = vsel %vm490, %v2142, %v2143
      %2145 = vrot.lane.b32.xlu0 %v2126, 4
      %v2146 = vpop.permute.xlu0 %2145
      %2147 = vrot.lane.b32.xlu0 %v2129, 4
      %v2148 = vpop.permute.xlu0 %2147
      %2149 = vrot.lane.b32.xlu0 %v2132, 4
      %v2150 = vpop.permute.xlu0 %2149
      %2151 = vrot.lane.b32.xlu0 %v2135, 4
      %v2152 = vpop.permute.xlu0 %2151
      %2153 = vrot.lane.b32.xlu0 %v2138, 4
      %v2154 = vpop.permute.xlu0 %2153
      %2155 = vrot.lane.b32.xlu0 %v2141, 4
      %v2156 = vpop.permute.xlu0 %2155
      %2157 = vrot.lane.b32.xlu0 %v2144, 4
      %v2158 = vpop.permute.xlu0 %2157
      %v2166 = vrot.slane %v2094, 2
      %v2167 = vrot.slane %v2102, 2
      %v2168 = vsel %vm538, %v2166, %v2167
      %v2169 = vrot.slane %v2095, 2
      %v2170 = vrot.slane %v2103, 2
      %v2171 = vsel %vm538, %v2169, %v2170
      %v2172 = vrot.slane %v2096, 2
      %v2173 = vrot.slane %v2104, 2
      %v2174 = vsel %vm538, %v2172, %v2173
      %v2175 = vrot.slane %v2097, 2
      %v2176 = vrot.slane %v2105, 2
      %v2177 = vsel %vm538, %v2175, %v2176
      %v2178 = vrot.slane %v2098, 2
      %v2179 = vrot.slane %v2106, 2
      %v2180 = vsel %vm538, %v2178, %v2179
      %v2181 = vrot.slane %v2099, 2
      %v2182 = vrot.slane %v2107, 2
      %v2183 = vsel %vm538, %v2181, %v2182
      %v2184 = vrot.slane %v2100, 2
      %v2185 = vrot.slane %v2108, 2
      %v2186 = vsel %vm538, %v2184, %v2185
      %2187 = vrot.lane.b32.xlu0 %v2168, 8
      %v2188 = vpop.permute.xlu0 %2187
      %2189 = vrot.lane.b32.xlu0 %v2171, 8
      %v2190 = vpop.permute.xlu0 %2189
      %2191 = vrot.lane.b32.xlu0 %v2174, 8
      %v2192 = vpop.permute.xlu0 %2191
      %2193 = vrot.lane.b32.xlu0 %v2177, 8
      %v2194 = vpop.permute.xlu0 %2193
      %2195 = vrot.lane.b32.xlu0 %v2180, 8
      %v2196 = vpop.permute.xlu0 %2195
      %2197 = vrot.lane.b32.xlu0 %v2183, 8
      %v2198 = vpop.permute.xlu0 %2197
      %2199 = vrot.lane.b32.xlu0 %v2186, 8
      %v2200 = vpop.permute.xlu0 %2199
      %2209 = vrot.lane.b32.xlu0 %v2094, 12
      %v2210 = vpop.permute.xlu0 %2209
      %2211 = vrot.lane.b32.xlu0 %v2095, 12
      %v2212 = vpop.permute.xlu0 %2211
      %2213 = vrot.lane.b32.xlu0 %v2096, 12
      %v2214 = vpop.permute.xlu0 %2213
      %2215 = vrot.lane.b32.xlu0 %v2097, 12
      %v2216 = vpop.permute.xlu0 %2215
      %2217 = vrot.lane.b32.xlu0 %v2098, 12
      %v2218 = vpop.permute.xlu0 %2217
      %2219 = vrot.lane.b32.xlu0 %v2099, 12
      %v2220 = vpop.permute.xlu0 %2219
      %2221 = vrot.lane.b32.xlu0 %v2100, 12
      %v2222 = vpop.permute.xlu0 %2221
      %2223 = vrot.lane.b32.xlu0 %v2101, 12
      %v2224 = vpop.permute.xlu0 %2223
      %v2234 = vrot.slane %v2101, 1
      %v2235 = vrot.slane %v2109, 1
      %v2236 = vsel %vm490, %v2234, %v2235
      %2237 = vrot.lane.b32.xlu0 %v2126, 16
      %v2238 = vpop.permute.xlu0 %2237
      %2239 = vrot.lane.b32.xlu0 %v2129, 16
      %v2240 = vpop.permute.xlu0 %2239
      %2241 = vrot.lane.b32.xlu0 %v2132, 16
      %v2242 = vpop.permute.xlu0 %2241
      %2243 = vrot.lane.b32.xlu0 %v2135, 16
      %v2244 = vpop.permute.xlu0 %2243
      %2245 = vrot.lane.b32.xlu0 %v2138, 16
      %v2246 = vpop.permute.xlu0 %2245
      %2247 = vrot.lane.b32.xlu0 %v2141, 16
      %v2248 = vpop.permute.xlu0 %2247
      %2249 = vrot.lane.b32.xlu0 %v2144, 16
      %v2250 = vpop.permute.xlu0 %2249
      %2251 = vrot.lane.b32.xlu0 %v2236, 16
      %v2252 = vpop.permute.xlu0 %2251
      %v2261 = vrot.slane %v2101, 2
      %v2262 = vrot.slane %v2109, 2
      %v2263 = vsel %vm538, %v2261, %v2262
      %2264 = vrot.lane.b32.xlu0 %v2168, 20
      %v2265 = vpop.permute.xlu0 %2264
      %2266 = vrot.lane.b32.xlu0 %v2171, 20
      %v2267 = vpop.permute.xlu0 %2266
      %2268 = vrot.lane.b32.xlu0 %v2174, 20
      %v2269 = vpop.permute.xlu0 %2268
      %2270 = vrot.lane.b32.xlu0 %v2177, 20
      %v2271 = vpop.permute.xlu0 %2270
      %2272 = vrot.lane.b32.xlu0 %v2180, 20
      %v2273 = vpop.permute.xlu0 %2272
      %2274 = vrot.lane.b32.xlu0 %v2183, 20
      %v2275 = vpop.permute.xlu0 %2274
      %2276 = vrot.lane.b32.xlu0 %v2186, 20
      %v2277 = vpop.permute.xlu0 %2276
      %2278 = vrot.lane.b32.xlu0 %v2263, 20
      %v2279 = vpop.permute.xlu0 %2278
      %2288 = vrot.lane.b32.xlu0 %v2095, 24
      %v2289 = vpop.permute.xlu0 %2288
      %2290 = vrot.lane.b32.xlu0 %v2096, 24
      %v2291 = vpop.permute.xlu0 %2290
      %2292 = vrot.lane.b32.xlu0 %v2097, 24
      %v2293 = vpop.permute.xlu0 %2292
      %2294 = vrot.lane.b32.xlu0 %v2098, 24
      %v2295 = vpop.permute.xlu0 %2294
      %2296 = vrot.lane.b32.xlu0 %v2099, 24
      %v2297 = vpop.permute.xlu0 %2296
      %2298 = vrot.lane.b32.xlu0 %v2100, 24
      %v2299 = vpop.permute.xlu0 %2298
      %2300 = vrot.lane.b32.xlu0 %v2101, 24
      %v2301 = vpop.permute.xlu0 %2300
      %2309 = vrot.lane.b32.xlu0 %v2129, 28
      %v2310 = vpop.permute.xlu0 %2309
      %2311 = vrot.lane.b32.xlu0 %v2132, 28
      %v2312 = vpop.permute.xlu0 %2311
      %2313 = vrot.lane.b32.xlu0 %v2135, 28
      %v2314 = vpop.permute.xlu0 %2313
      %2315 = vrot.lane.b32.xlu0 %v2138, 28
      %v2316 = vpop.permute.xlu0 %2315
      %2317 = vrot.lane.b32.xlu0 %v2141, 28
      %v2318 = vpop.permute.xlu0 %2317
      %2319 = vrot.lane.b32.xlu0 %v2144, 28
      %v2320 = vpop.permute.xlu0 %2319
      %2321 = vrot.lane.b32.xlu0 %v2236, 28
      %v2322 = vpop.permute.xlu0 %2321
      %2330 = vrot.lane.b32.xlu0 %v2171, 32
      %v2331 = vpop.permute.xlu0 %2330
      %2332 = vrot.lane.b32.xlu0 %v2174, 32
      %v2333 = vpop.permute.xlu0 %2332
      %2334 = vrot.lane.b32.xlu0 %v2177, 32
      %v2335 = vpop.permute.xlu0 %2334
      %2336 = vrot.lane.b32.xlu0 %v2180, 32
      %v2337 = vpop.permute.xlu0 %2336
      %2338 = vrot.lane.b32.xlu0 %v2183, 32
      %v2339 = vpop.permute.xlu0 %2338
      %2340 = vrot.lane.b32.xlu0 %v2186, 32
      %v2341 = vpop.permute.xlu0 %2340
      %2342 = vrot.lane.b32.xlu0 %v2263, 32
      %v2343 = vpop.permute.xlu0 %2342
      %v2351 = vsel %vm738, %v2094, %v2146
      %v2352 = vsel %vm738, %v2095, %v2148
      %v2353 = vsel %vm738, %v2096, %v2150
      %v2354 = vsel %vm738, %v2097, %v2152
      %v2355 = vsel %vm738, %v2098, %v2154
      %v2356 = vsel %vm738, %v2099, %v2156
      %v2357 = vsel %vm738, %v2100, %v2158
      %v2358 = vsel %vm747, %v2351, %v2188
      %v2359 = vsel %vm747, %v2352, %v2190
      %v2360 = vsel %vm747, %v2353, %v2192
      %v2361 = vsel %vm747, %v2354, %v2194
      %v2362 = vsel %vm747, %v2355, %v2196
      %v2363 = vsel %vm747, %v2356, %v2198
      %v2364 = vsel %vm747, %v2357, %v2200
      %v2365 = vsel %vm756, %v748, %v2210
      %v2366 = vsel %vm756, %v2358, %v2212
      %v2367 = vsel %vm756, %v2359, %v2214
      %v2368 = vsel %vm756, %v2360, %v2216
      %v2369 = vsel %vm756, %v2361, %v2218
      %v2370 = vsel %vm756, %v2362, %v2220
      %v2371 = vsel %vm756, %v2363, %v2222
      %v2372 = vsel %vm756, %v2364, %v2224
      %v2373 = vsel %vm296, %v2365, %v2238
      %v2374 = vsel %vm296, %v2366, %v2240
      %v2375 = vsel %vm296, %v2367, %v2242
      %v2376 = vsel %vm296, %v2368, %v2244
      %v2377 = vsel %vm296, %v2369, %v2246
      %v2378 = vsel %vm296, %v2370, %v2248
      %v2379 = vsel %vm296, %v2371, %v2250
      %v2380 = vsel %vm296, %v2372, %v2252
      %v2381 = vsel %vm773, %v2373, %v2265
      %v2382 = vsel %vm773, %v2374, %v2267
      %v2383 = vsel %vm773, %v2375, %v2269
      %v2384 = vsel %vm773, %v2376, %v2271
      %v2385 = vsel %vm773, %v2377, %v2273
      %v2386 = vsel %vm773, %v2378, %v2275
      %v2387 = vsel %vm773, %v2379, %v2277
      %v2388 = vsel %vm773, %v2380, %v2279
      %v2389 = vsel %vm782, %v2381, %v2289
      %v2390 = vsel %vm782, %v2382, %v2291
      %v2391 = vsel %vm782, %v2383, %v2293
      %v2392 = vsel %vm782, %v2384, %v2295
      %v2393 = vsel %vm782, %v2385, %v2297
      %v2394 = vsel %vm782, %v2386, %v2299
      %v2395 = vsel %vm782, %v2387, %v2301
      %v2396 = vsel %vm782, %v2388, %v681
      %v2397 = vsel %vm791, %v2389, %v2310
      %v2398 = vsel %vm791, %v2390, %v2312
      %v2399 = vsel %vm791, %v2391, %v2314
      %v2400 = vsel %vm791, %v2392, %v2316
      %v2401 = vsel %vm791, %v2393, %v2318
      %v2402 = vsel %vm791, %v2394, %v2320
      %v2403 = vsel %vm791, %v2395, %v2322
      %v2404 = vsel %vm791, %v2396, %v705
      %v2405 = vsel %vm800, %v2397, %v2331
      %v2406 = vsel %vm800, %v2398, %v2333
      %v2407 = vsel %vm800, %v2399, %v2335
      %v2408 = vsel %vm800, %v2400, %v2337
      %v2409 = vsel %vm800, %v2401, %v2339
      %v2410 = vsel %vm800, %v2402, %v2341
      %v2411 = vsel %vm800, %v2403, %v2343
      %v2412 = vsel %vm800, %v2404, %v729
      %s2413 = scalar_lea.vmem %s3, 80
      %v2414 = vld [vmem:[%s2413] sm:$0xff]
      %v2415 = vld [vmem:[%s2413 + $0x8] sm:$0xff]
      %v2416 = vld [vmem:[%s2413 + $0x10] sm:$0xff]
      %v2417 = vld [vmem:[%s2413 + $0x18] sm:$0xff]
      %v2418 = vld [vmem:[%s2413 + $0x20] sm:$0xf]
      %s2419 = scalar_lea.vmem %s4, 2
      %v2420 = vld [vmem:[%s2419] sm:$0x1]
      %v2422 = vlaneseq
      %v2423 = vshrl.u32 %v2422, 7
      %v2424 = vsub.s32 0, %v2423
      %v2425 = vrot.slane %v2420, %v2424
      %v2428 = vsel %vm821, %v2405, 0
      %v2431 = vsel %vm821, %v2406, 0
      %v2434 = vsel %vm821, %v2407, 0
      %v2437 = vsel %vm821, %v2408, 0
      %v2440 = vsel %vm821, %v2409, 0
      %v2443 = vsel %vm821, %v2410, 0
      %v2446 = vsel %vm821, %v2411, 0
      %v2449 = vsel %vm821, %v2412, 0
      %v2452 = vsel %vm846, %v2418, 0
      %2454 = vmatprep.subr.mxu0 0.0
      %2455 = vmatpush1.msra.mxu0 %v2414
      %2456 = vmatprep.subr.mxu0 0.0
      %2457 = vmatpush1.msra.mxu0 %v2415
      %2458 = vmatprep.subr.mxu0 0.0
      %2459 = vmatpush1.msra.mxu0 %v2416
      %2460 = vmatprep.subr.mxu0 0.0
      %2461 = vmatpush1.msra.mxu0 %v2417
      %2462 = vmatprep.subr.mxu0 0.0
      %2463 = vmatpush1.msra.mxu0 %v2452
      %2464 = vmatprep.subr.mxu0 0.0
      %2465 = vmatpush1.msra.mxu0 0.0
      %2466 = vmatprep.subr.mxu0 0.0
      %2467 = vmatpush1.msra.mxu0 0.0
      %2468 = vmatprep.subr.mxu0 0.0
      %2469 = vmatpush1.msra.mxu0 0.0
      %2470 = vmatprep.subr.mxu0 0.0
      %2471 = vmatpush1.msra.mxu0 0.0
      %2472 = vmatprep.subr.mxu0 0.0
      %2473 = vmatpush1.msra.mxu0 0.0
      %2474 = vmatprep.subr.mxu0 0.0
      %2475 = vmatpush1.msra.mxu0 0.0
      %2476 = vmatprep.subr.mxu0 0.0
      %2477 = vmatpush1.msra.mxu0 0.0
      %2478 = vmatprep.subr.mxu0 0.0
      %2479 = vmatpush1.msra.mxu0 0.0
      %2480 = vmatprep.subr.mxu0 0.0
      %2481 = vmatpush1.msra.mxu0 0.0
      %2482 = vmatprep.subr.mxu0 0.0
      %2483 = vmatpush1.msra.mxu0 0.0
      %2484 = vmatprep.subr.mxu0 0.0
      %2485 = vmatpush1.msra.mxu0 0.0
      %2486 = vmatprep.subr.mxu0 0.0
      %2487 = vmatpush1.msra.mxu0 0.0
      %2488 = vmatprep.subr.mxu0 0.0
      %2489 = vmatpush1.msra.mxu0 0.0
      %2490 = vmatprep.subr.mxu0 0.0
      %2491 = vmatpush1.msra.mxu0 0.0
      %2492 = vmatprep.subr.mxu0 0.0
      %2493 = vmatpush1.msra.mxu0 0.0
      %2494 = vmatprep.subr.mxu0 0.0
      %2495 = vmatpush1.msra.mxu0 0.0
      %2496 = vmatprep.subr.mxu0 0.0
      %2497 = vmatpush1.msra.mxu0 0.0
      %2498 = vmatprep.subr.mxu0 0.0
      %2499 = vmatpush1.msra.mxu0 0.0
      %2500 = vmatprep.subr.mxu0 0.0
      %2501 = vmatpush1.msra.mxu0 0.0
      %2502 = vmatprep.subr.mxu0 0.0
      %2503 = vmatpush1.msra.mxu0 0.0
      %2504 = vmatprep.subr.mxu0 0.0
      %2505 = vmatpush1.msra.mxu0 0.0
      %2506 = vmatprep.subr.mxu0 0.0
      %2507 = vmatpush1.msra.mxu0 0.0
      %2508 = vmatprep.subr.mxu0 0.0
      %2509 = vmatpush1.msra.mxu0 0.0
      %2510 = vmatprep.subr.mxu0 0.0
      %2511 = vmatpush1.msra.mxu0 0.0
      %2512 = vmatprep.subr.mxu0 0.0
      %2513 = vmatpush1.msra.mxu0 0.0
      %2514 = vmatprep.subr.mxu0 0.0
      %2515 = vmatpush1.msra.mxu0 0.0
      %2516 = vmatprep.subr.mxu0 0.0
      %2517 = vmatpush1.msra.mxu0 0.0
      %2518 = vmatprep.mubr.f32.mxu0 0.0
      %2519 = vmatmul.mubr.f32.gmra.mrb[0].mxu0 %v2428
      %v2520 = vpop.f32.mrb[0].mxu0
      %v2521 = vadd.f32 %v2425, %v2520
      %v2522 = vpop.f32.mrb[0].mxu0
      %2523 = vmatprep.mubr.f32.mxu0 0.0
      %2524 = vmatmul.mubr.f32.gmra.mrb[0].mxu0 %v2431
      %v2525 = vpop.f32.mrb[0].mxu0
      %v2526 = vadd.f32 %v2425, %v2525
      %v2527 = vpop.f32.mrb[0].mxu0
      %2528 = vmatprep.mubr.f32.mxu0 0.0
      %2529 = vmatmul.mubr.f32.gmra.mrb[0].mxu0 %v2434
      %v2530 = vpop.f32.mrb[0].mxu0
      %v2531 = vadd.f32 %v2425, %v2530
      %v2532 = vpop.f32.mrb[0].mxu0
      %2533 = vmatprep.mubr.f32.mxu0 0.0
      %2534 = vmatmul.mubr.f32.gmra.mrb[0].mxu0 %v2437
      %v2535 = vpop.f32.mrb[0].mxu0
      %v2536 = vadd.f32 %v2425, %v2535
      %v2537 = vpop.f32.mrb[0].mxu0
      %2538 = vmatprep.mubr.f32.mxu0 0.0
      %2539 = vmatmul.mubr.f32.gmra.mrb[0].mxu0 %v2440
      %v2540 = vpop.f32.mrb[0].mxu0
      %v2541 = vadd.f32 %v2425, %v2540
      %v2542 = vpop.f32.mrb[0].mxu0
      %2543 = vmatprep.mubr.f32.mxu0 0.0
      %2544 = vmatmul.mubr.f32.gmra.mrb[0].mxu0 %v2443
      %v2545 = vpop.f32.mrb[0].mxu0
      %v2546 = vadd.f32 %v2425, %v2545
      %v2547 = vpop.f32.mrb[0].mxu0
      %2548 = vmatprep.mubr.f32.mxu0 0.0
      %2549 = vmatmul.mubr.f32.gmra.mrb[0].mxu0 %v2446
      %v2550 = vpop.f32.mrb[0].mxu0
      %v2551 = vadd.f32 %v2425, %v2550
      %v2552 = vpop.f32.mrb[0].mxu0
      %2553 = vmatprep.mubr.f32.mxu0 0.0
      %2554 = vmatmul.mubr.f32.gmra.mrb[0].mxu0 %v2449
      %v2555 = vpop.f32.mrb[0].mxu0
      %v2556 = vadd.f32 %v2425, %v2555
      %v2557 = vpop.f32.mrb[0].mxu0
      %2558 = vdwg.mxu0
      %v2559 = vmax.f32 %v2521, 0.0
      %v2560 = vmax.f32 %v2526, 0.0
      %v2561 = vmax.f32 %v2531, 0.0
      %v2562 = vmax.f32 %v2536, 0.0
      %v2563 = vmax.f32 %v2541, 0.0
      %v2564 = vmax.f32 %v2546, 0.0
      %v2565 = vmax.f32 %v2551, 0.0
      %v2566 = vmax.f32 %v2556, 0.0
      %s2567 = scalar_lea.vmem %s5, 8
      %v2568 = vld [vmem:[%s2567] sm:$0xf]
      %s2569 = scalar_lea.vmem %s6, 2
      %v2570 = vld [vmem:[%s2569] sm:$0x1]
      %v2572 = vlaneseq
      %v2573 = vshrl.u32 %v2572, 7
      %v2574 = vsub.s32 0, %v2573
      %v2575 = vrot.slane %v2570, %v2574
      %v2578 = vsel %vm738, %v2559, 0
      %v2581 = vsel %vm738, %v2560, 0
      %v2584 = vsel %vm738, %v2561, 0
      %v2587 = vsel %vm738, %v2562, 0
      %v2590 = vsel %vm738, %v2563, 0
      %v2593 = vsel %vm738, %v2564, 0
      %v2596 = vsel %vm738, %v2565, 0
      %v2599 = vsel %vm738, %v2566, 0
      %v2602 = vsel %vm846, %v2568, 0
      %2604 = vmatprep.subr.mxu0 0.0
      %2605 = vmatpush1.msra.mxu0 %v2602
      %2606 = vmatprep.subr.mxu0 0.0
      %2607 = vmatpush1.msra.mxu0 0.0
      %2608 = vmatprep.subr.mxu0 0.0
      %2609 = vmatpush1.msra.mxu0 0.0
      %2610 = vmatprep.subr.mxu0 0.0
      %2611 = vmatpush1.msra.mxu0 0.0
      %2612 = vmatprep.subr.mxu0 0.0
      %2613 = vmatpush1.msra.mxu0 0.0
      %2614 = vmatprep.subr.mxu0 0.0
      %2615 = vmatpush1.msra.mxu0 0.0
      %2616 = vmatprep.subr.mxu0 0.0
      %2617 = vmatpush1.msra.mxu0 0.0
      %2618 = vmatprep.subr.mxu0 0.0
      %2619 = vmatpush1.msra.mxu0 0.0
      %2620 = vmatprep.subr.mxu0 0.0
      %2621 = vmatpush1.msra.mxu0 0.0
      %2622 = vmatprep.subr.mxu0 0.0
      %2623 = vmatpush1.msra.mxu0 0.0
      %2624 = vmatprep.subr.mxu0 0.0
      %2625 = vmatpush1.msra.mxu0 0.0
      %2626 = vmatprep.subr.mxu0 0.0
      %2627 = vmatpush1.msra.mxu0 0.0
      %2628 = vmatprep.subr.mxu0 0.0
      %2629 = vmatpush1.msra.mxu0 0.0
      %2630 = vmatprep.subr.mxu0 0.0
      %2631 = vmatpush1.msra.mxu0 0.0
      %2632 = vmatprep.subr.mxu0 0.0
      %2633 = vmatpush1.msra.mxu0 0.0
      %2634 = vmatprep.subr.mxu0 0.0
      %2635 = vmatpush1.msra.mxu0 0.0
      %2636 = vmatprep.subr.mxu0 0.0
      %2637 = vmatpush1.msra.mxu0 0.0
      %2638 = vmatprep.subr.mxu0 0.0
      %2639 = vmatpush1.msra.mxu0 0.0
      %2640 = vmatprep.subr.mxu0 0.0
      %2641 = vmatpush1.msra.mxu0 0.0
      %2642 = vmatprep.subr.mxu0 0.0
      %2643 = vmatpush1.msra.mxu0 0.0
      %2644 = vmatprep.subr.mxu0 0.0
      %2645 = vmatpush1.msra.mxu0 0.0
      %2646 = vmatprep.subr.mxu0 0.0
      %2647 = vmatpush1.msra.mxu0 0.0
      %2648 = vmatprep.subr.mxu0 0.0
      %2649 = vmatpush1.msra.mxu0 0.0
      %2650 = vmatprep.subr.mxu0 0.0
      %2651 = vmatpush1.msra.mxu0 0.0
      %2652 = vmatprep.subr.mxu0 0.0
      %2653 = vmatpush1.msra.mxu0 0.0
      %2654 = vmatprep.subr.mxu0 0.0
      %2655 = vmatpush1.msra.mxu0 0.0
      %2656 = vmatprep.subr.mxu0 0.0
      %2657 = vmatpush1.msra.mxu0 0.0
      %2658 = vmatprep.subr.mxu0 0.0
      %2659 = vmatpush1.msra.mxu0 0.0
      %2660 = vmatprep.subr.mxu0 0.0
      %2661 = vmatpush1.msra.mxu0 0.0
      %2662 = vmatprep.subr.mxu0 0.0
      %2663 = vmatpush1.msra.mxu0 0.0
      %2664 = vmatprep.subr.mxu0 0.0
      %2665 = vmatpush1.msra.mxu0 0.0
      %2666 = vmatprep.subr.mxu0 0.0
      %2667 = vmatpush1.msra.mxu0 0.0
      %2668 = vmatprep.mubr.f32.mxu0 0.0
      %2669 = vmatmul.mubr.f32.gmra.mrb[0].mxu0 %v2578
      %v2670 = vpop.f32.mrb[0].mxu0
      %v2671 = vadd.f32 %v2575, %v2670
      %v2672 = vpop.f32.mrb[0].mxu0
      %2673 = vmatprep.mubr.f32.mxu0 0.0
      %2674 = vmatmul.mubr.f32.gmra.mrb[0].mxu0 %v2581
      %v2675 = vpop.f32.mrb[0].mxu0
      %v2676 = vadd.f32 %v2575, %v2675
      %v2677 = vpop.f32.mrb[0].mxu0
      %2678 = vmatprep.mubr.f32.mxu0 0.0
      %2679 = vmatmul.mubr.f32.gmra.mrb[0].mxu0 %v2584
      %v2680 = vpop.f32.mrb[0].mxu0
      %v2681 = vadd.f32 %v2575, %v2680
      %v2682 = vpop.f32.mrb[0].mxu0
      %2683 = vmatprep.mubr.f32.mxu0 0.0
      %2684 = vmatmul.mubr.f32.gmra.mrb[0].mxu0 %v2587
      %v2685 = vpop.f32.mrb[0].mxu0
      %v2686 = vadd.f32 %v2575, %v2685
      %v2687 = vpop.f32.mrb[0].mxu0
      %2688 = vmatprep.mubr.f32.mxu0 0.0
      %2689 = vmatmul.mubr.f32.gmra.mrb[0].mxu0 %v2590
      %v2690 = vpop.f32.mrb[0].mxu0
      %v2691 = vadd.f32 %v2575, %v2690
      %v2692 = vpop.f32.mrb[0].mxu0
      %2693 = vmatprep.mubr.f32.mxu0 0.0
      %2694 = vmatmul.mubr.f32.gmra.mrb[0].mxu0 %v2593
      %v2695 = vpop.f32.mrb[0].mxu0
      %v2696 = vadd.f32 %v2575, %v2695
      %v2697 = vpop.f32.mrb[0].mxu0
      %2698 = vmatprep.mubr.f32.mxu0 0.0
      %2699 = vmatmul.mubr.f32.gmra.mrb[0].mxu0 %v2596
      %v2700 = vpop.f32.mrb[0].mxu0
      %v2701 = vadd.f32 %v2575, %v2700
      %v2702 = vpop.f32.mrb[0].mxu0
      %2703 = vmatprep.mubr.f32.mxu0 0.0
      %2704 = vmatmul.mubr.f32.gmra.mrb[0].mxu0 %v2599
      %v2705 = vpop.f32.mrb[0].mxu0
      %v2706 = vadd.f32 %v2575, %v2705
      %v2707 = vpop.f32.mrb[0].mxu0
      %2708 = vdwg.mxu0
      %v2709 = vadd.f32 %v2671, %v1914
      %v2710 = vadd.f32 %v2676, %v1915
      %v2711 = vadd.f32 %v2681, %v1916
      %v2712 = vadd.f32 %v2686, %v1917
      %v2713 = vadd.f32 %v2691, %v1918
      %v2714 = vadd.f32 %v2696, %v1919
      %v2715 = vadd.f32 %v2701, %v1920
      %v2716 = vadd.f32 %v2706, %v1921
      %v2717 = vmax.f32 %v2709, 0.0
      %v2718 = vmax.f32 %v2710, 0.0
      %v2719 = vmax.f32 %v2711, 0.0
      %v2720 = vmax.f32 %v2712, 0.0
      %v2721 = vmax.f32 %v2713, 0.0
      %v2722 = vmax.f32 %v2714, 0.0
      %v2723 = vmax.f32 %v2715, 0.0
      %v2724 = vmax.f32 %v2716, 0.0
      %s2725 = scalar_lea.vmem %s1, 48
      %v2726 = vld [vmem:[%s2725] sm:$0xff]
      %v2727 = vld [vmem:[%s2725 + $0x8] sm:$0xff]
      %s2728 = scalar_lea.vmem %s2, 3
      %v2729 = vld [vmem:[%s2728] sm:$0x1]
      %v2731 = vlaneseq
      %v2732 = vshrl.u32 %v2731, 7
      %v2733 = vsub.s32 0, %v2732
      %v2734 = vrot.slane %v2729, %v2733
      %v2737 = vsel %vm296, %v2717, 0
      %v2740 = vsel %vm296, %v2718, 0
      %v2743 = vsel %vm296, %v2719, 0
      %v2746 = vsel %vm296, %v2720, 0
      %v2749 = vsel %vm296, %v2721, 0
      %v2752 = vsel %vm296, %v2722, 0
      %v2755 = vsel %vm296, %v2723, 0
      %v2758 = vsel %vm296, %v2724, 0
      %2760 = vmatprep.subr.mxu0 0.0
      %2761 = vmatpush1.msra.mxu0 %v2726
      %2762 = vmatprep.subr.mxu0 0.0
      %2763 = vmatpush1.msra.mxu0 %v2727
      %2764 = vmatprep.subr.mxu0 0.0
      %2765 = vmatpush1.msra.mxu0 0.0
      %2766 = vmatprep.subr.mxu0 0.0
      %2767 = vmatpush1.msra.mxu0 0.0
      %2768 = vmatprep.subr.mxu0 0.0
      %2769 = vmatpush1.msra.mxu0 0.0
      %2770 = vmatprep.subr.mxu0 0.0
      %2771 = vmatpush1.msra.mxu0 0.0
      %2772 = vmatprep.subr.mxu0 0.0
      %2773 = vmatpush1.msra.mxu0 0.0
      %2774 = vmatprep.subr.mxu0 0.0
      %2775 = vmatpush1.msra.mxu0 0.0
      %2776 = vmatprep.subr.mxu0 0.0
      %2777 = vmatpush1.msra.mxu0 0.0
      %2778 = vmatprep.subr.mxu0 0.0
      %2779 = vmatpush1.msra.mxu0 0.0
      %2780 = vmatprep.subr.mxu0 0.0
      %2781 = vmatpush1.msra.mxu0 0.0
      %2782 = vmatprep.subr.mxu0 0.0
      %2783 = vmatpush1.msra.mxu0 0.0
      %2784 = vmatprep.subr.mxu0 0.0
      %2785 = vmatpush1.msra.mxu0 0.0
      %2786 = vmatprep.subr.mxu0 0.0
      %2787 = vmatpush1.msra.mxu0 0.0
      %2788 = vmatprep.subr.mxu0 0.0
      %2789 = vmatpush1.msra.mxu0 0.0
      %2790 = vmatprep.subr.mxu0 0.0
      %2791 = vmatpush1.msra.mxu0 0.0
      %2792 = vmatprep.subr.mxu0 0.0
      %2793 = vmatpush1.msra.mxu0 0.0
      %2794 = vmatprep.subr.mxu0 0.0
      %2795 = vmatpush1.msra.mxu0 0.0
      %2796 = vmatprep.subr.mxu0 0.0
      %2797 = vmatpush1.msra.mxu0 0.0
      %2798 = vmatprep.subr.mxu0 0.0
      %2799 = vmatpush1.msra.mxu0 0.0
      %2800 = vmatprep.subr.mxu0 0.0
      %2801 = vmatpush1.msra.mxu0 0.0
      %2802 = vmatprep.subr.mxu0 0.0
      %2803 = vmatpush1.msra.mxu0 0.0
      %2804 = vmatprep.subr.mxu0 0.0
      %2805 = vmatpush1.msra.mxu0 0.0
      %2806 = vmatprep.subr.mxu0 0.0
      %2807 = vmatpush1.msra.mxu0 0.0
      %2808 = vmatprep.subr.mxu0 0.0
      %2809 = vmatpush1.msra.mxu0 0.0
      %2810 = vmatprep.subr.mxu0 0.0
      %2811 = vmatpush1.msra.mxu0 0.0
      %2812 = vmatprep.subr.mxu0 0.0
      %2813 = vmatpush1.msra.mxu0 0.0
      %2814 = vmatprep.subr.mxu0 0.0
      %2815 = vmatpush1.msra.mxu0 0.0
      %2816 = vmatprep.subr.mxu0 0.0
      %2817 = vmatpush1.msra.mxu0 0.0
      %2818 = vmatprep.subr.mxu0 0.0
      %2819 = vmatpush1.msra.mxu0 0.0
      %2820 = vmatprep.subr.mxu0 0.0
      %2821 = vmatpush1.msra.mxu0 0.0
      %2822 = vmatprep.subr.mxu0 0.0
      %2823 = vmatpush1.msra.mxu0 0.0
      %2824 = vmatprep.mubr.f32.mxu0 0.0
      %2825 = vmatmul.mubr.f32.gmra.mrb[0].mxu0 %v2737
      %v2826 = vpop.f32.mrb[0].mxu0
      %v2827 = vadd.f32 %v2734, %v2826
      %v2828 = vpop.f32.mrb[0].mxu0
      %2829 = vmatprep.mubr.f32.mxu0 0.0
      %2830 = vmatmul.mubr.f32.gmra.mrb[0].mxu0 %v2740
      %v2831 = vpop.f32.mrb[0].mxu0
      %v2832 = vadd.f32 %v2734, %v2831
      %v2833 = vpop.f32.mrb[0].mxu0
      %2834 = vmatprep.mubr.f32.mxu0 0.0
      %2835 = vmatmul.mubr.f32.gmra.mrb[0].mxu0 %v2743
      %v2836 = vpop.f32.mrb[0].mxu0
      %v2837 = vadd.f32 %v2734, %v2836
      %v2838 = vpop.f32.mrb[0].mxu0
      %2839 = vmatprep.mubr.f32.mxu0 0.0
      %2840 = vmatmul.mubr.f32.gmra.mrb[0].mxu0 %v2746
      %v2841 = vpop.f32.mrb[0].mxu0
      %v2842 = vadd.f32 %v2734, %v2841
      %v2843 = vpop.f32.mrb[0].mxu0
      %2844 = vmatprep.mubr.f32.mxu0 0.0
      %2845 = vmatmul.mubr.f32.gmra.mrb[0].mxu0 %v2749
      %v2846 = vpop.f32.mrb[0].mxu0
      %v2847 = vadd.f32 %v2734, %v2846
      %v2848 = vpop.f32.mrb[0].mxu0
      %2849 = vmatprep.mubr.f32.mxu0 0.0
      %2850 = vmatmul.mubr.f32.gmra.mrb[0].mxu0 %v2752
      %v2851 = vpop.f32.mrb[0].mxu0
      %v2852 = vadd.f32 %v2734, %v2851
      %v2853 = vpop.f32.mrb[0].mxu0
      %2854 = vmatprep.mubr.f32.mxu0 0.0
      %2855 = vmatmul.mubr.f32.gmra.mrb[0].mxu0 %v2755
      %v2856 = vpop.f32.mrb[0].mxu0
      %v2857 = vadd.f32 %v2734, %v2856
      %v2858 = vpop.f32.mrb[0].mxu0
      %2859 = vmatprep.mubr.f32.mxu0 0.0
      %2860 = vmatmul.mubr.f32.gmra.mrb[0].mxu0 %v2758
      %v2861 = vpop.f32.mrb[0].mxu0
      %v2862 = vadd.f32 %v2734, %v2861
      %v2863 = vpop.f32.mrb[0].mxu0
      %2864 = vdwg.mxu0
      %v2865 = vmax.f32 %v2827, 0.0
      %v2866 = vmax.f32 %v2832, 0.0
      %v2867 = vmax.f32 %v2837, 0.0
      %v2868 = vmax.f32 %v2842, 0.0
      %v2869 = vmax.f32 %v2847, 0.0
      %v2870 = vmax.f32 %v2852, 0.0
      %v2871 = vmax.f32 %v2857, 0.0
      %v2872 = vmax.f32 %v2862, 0.0
      %v2881 = vrot.slane %v2865, 7
      %v2882 = vrot.slane %v2866, 7
      %v2883 = vrot.slane %v2867, 7
      %v2884 = vrot.slane %v2868, 7
      %v2885 = vrot.slane %v2869, 7
      %v2886 = vrot.slane %v2870, 7
      %v2887 = vrot.slane %v2871, 7
      %v2888 = vrot.slane %v2872, 7
      %v2897 = vsel %vm458, 0.0, %v2881
      %v2898 = vsel %vm458, 0.0, %v2882
      %v2899 = vsel %vm458, 0.0, %v2883
      %v2900 = vsel %vm458, 0.0, %v2884
      %v2901 = vsel %vm458, 0.0, %v2885
      %v2902 = vsel %vm458, 0.0, %v2886
      %v2903 = vsel %vm458, 0.0, %v2887
      %v2904 = vsel %vm458, 0.0, %v2888
      %v2905 = vsel %vm458, %v2881, 0.0
      %v2906 = vsel %vm458, %v2882, 0.0
      %v2907 = vsel %vm458, %v2883, 0.0
      %v2908 = vsel %vm458, %v2884, 0.0
      %v2909 = vsel %vm458, %v2885, 0.0
      %v2910 = vsel %vm458, %v2886, 0.0
      %v2911 = vsel %vm458, %v2887, 0.0
      %v2912 = vsel %vm458, %v2888, 0.0
      %v2927 = vrot.slane %v2897, 1
      %v2928 = vrot.slane %v2905, 1
      %v2929 = vsel %vm490, %v2927, %v2928
      %v2930 = vrot.slane %v2898, 1
      %v2931 = vrot.slane %v2906, 1
      %v2932 = vsel %vm490, %v2930, %v2931
      %v2933 = vrot.slane %v2899, 1
      %v2934 = vrot.slane %v2907, 1
      %v2935 = vsel %vm490, %v2933, %v2934
      %v2936 = vrot.slane %v2900, 1
      %v2937 = vrot.slane %v2908, 1
      %v2938 = vsel %vm490, %v2936, %v2937
      %v2939 = vrot.slane %v2901, 1
      %v2940 = vrot.slane %v2909, 1
      %v2941 = vsel %vm490, %v2939, %v2940
      %v2942 = vrot.slane %v2902, 1
      %v2943 = vrot.slane %v2910, 1
      %v2944 = vsel %vm490, %v2942, %v2943
      %v2945 = vrot.slane %v2903, 1
      %v2946 = vrot.slane %v2911, 1
      %v2947 = vsel %vm490, %v2945, %v2946
      %2948 = vrot.lane.b32.xlu0 %v2929, 4
      %v2949 = vpop.permute.xlu0 %2948
      %2950 = vrot.lane.b32.xlu0 %v2932, 4
      %v2951 = vpop.permute.xlu0 %2950
      %2952 = vrot.lane.b32.xlu0 %v2935, 4
      %v2953 = vpop.permute.xlu0 %2952
      %2954 = vrot.lane.b32.xlu0 %v2938, 4
      %v2955 = vpop.permute.xlu0 %2954
      %2956 = vrot.lane.b32.xlu0 %v2941, 4
      %v2957 = vpop.permute.xlu0 %2956
      %2958 = vrot.lane.b32.xlu0 %v2944, 4
      %v2959 = vpop.permute.xlu0 %2958
      %2960 = vrot.lane.b32.xlu0 %v2947, 4
      %v2961 = vpop.permute.xlu0 %2960
      %v2969 = vrot.slane %v2897, 2
      %v2970 = vrot.slane %v2905, 2
      %v2971 = vsel %vm538, %v2969, %v2970
      %v2972 = vrot.slane %v2898, 2
      %v2973 = vrot.slane %v2906, 2
      %v2974 = vsel %vm538, %v2972, %v2973
      %v2975 = vrot.slane %v2899, 2
      %v2976 = vrot.slane %v2907, 2
      %v2977 = vsel %vm538, %v2975, %v2976
      %v2978 = vrot.slane %v2900, 2
      %v2979 = vrot.slane %v2908, 2
      %v2980 = vsel %vm538, %v2978, %v2979
      %v2981 = vrot.slane %v2901, 2
      %v2982 = vrot.slane %v2909, 2
      %v2983 = vsel %vm538, %v2981, %v2982
      %v2984 = vrot.slane %v2902, 2
      %v2985 = vrot.slane %v2910, 2
      %v2986 = vsel %vm538, %v2984, %v2985
      %v2987 = vrot.slane %v2903, 2
      %v2988 = vrot.slane %v2911, 2
      %v2989 = vsel %vm538, %v2987, %v2988
      %2990 = vrot.lane.b32.xlu0 %v2971, 8
      %v2991 = vpop.permute.xlu0 %2990
      %2992 = vrot.lane.b32.xlu0 %v2974, 8
      %v2993 = vpop.permute.xlu0 %2992
      %2994 = vrot.lane.b32.xlu0 %v2977, 8
      %v2995 = vpop.permute.xlu0 %2994
      %2996 = vrot.lane.b32.xlu0 %v2980, 8
      %v2997 = vpop.permute.xlu0 %2996
      %2998 = vrot.lane.b32.xlu0 %v2983, 8
      %v2999 = vpop.permute.xlu0 %2998
      %3000 = vrot.lane.b32.xlu0 %v2986, 8
      %v3001 = vpop.permute.xlu0 %3000
      %3002 = vrot.lane.b32.xlu0 %v2989, 8
      %v3003 = vpop.permute.xlu0 %3002
      %3012 = vrot.lane.b32.xlu0 %v2897, 12
      %v3013 = vpop.permute.xlu0 %3012
      %3014 = vrot.lane.b32.xlu0 %v2898, 12
      %v3015 = vpop.permute.xlu0 %3014
      %3016 = vrot.lane.b32.xlu0 %v2899, 12
      %v3017 = vpop.permute.xlu0 %3016
      %3018 = vrot.lane.b32.xlu0 %v2900, 12
      %v3019 = vpop.permute.xlu0 %3018
      %3020 = vrot.lane.b32.xlu0 %v2901, 12
      %v3021 = vpop.permute.xlu0 %3020
      %3022 = vrot.lane.b32.xlu0 %v2902, 12
      %v3023 = vpop.permute.xlu0 %3022
      %3024 = vrot.lane.b32.xlu0 %v2903, 12
      %v3025 = vpop.permute.xlu0 %3024
      %3026 = vrot.lane.b32.xlu0 %v2904, 12
      %v3027 = vpop.permute.xlu0 %3026
      %v3037 = vrot.slane %v2904, 1
      %v3038 = vrot.slane %v2912, 1
      %v3039 = vsel %vm490, %v3037, %v3038
      %3040 = vrot.lane.b32.xlu0 %v2929, 16
      %v3041 = vpop.permute.xlu0 %3040
      %3042 = vrot.lane.b32.xlu0 %v2932, 16
      %v3043 = vpop.permute.xlu0 %3042
      %3044 = vrot.lane.b32.xlu0 %v2935, 16
      %v3045 = vpop.permute.xlu0 %3044
      %3046 = vrot.lane.b32.xlu0 %v2938, 16
      %v3047 = vpop.permute.xlu0 %3046
      %3048 = vrot.lane.b32.xlu0 %v2941, 16
      %v3049 = vpop.permute.xlu0 %3048
      %3050 = vrot.lane.b32.xlu0 %v2944, 16
      %v3051 = vpop.permute.xlu0 %3050
      %3052 = vrot.lane.b32.xlu0 %v2947, 16
      %v3053 = vpop.permute.xlu0 %3052
      %3054 = vrot.lane.b32.xlu0 %v3039, 16
      %v3055 = vpop.permute.xlu0 %3054
      %v3064 = vrot.slane %v2904, 2
      %v3065 = vrot.slane %v2912, 2
      %v3066 = vsel %vm538, %v3064, %v3065
      %3067 = vrot.lane.b32.xlu0 %v2971, 20
      %v3068 = vpop.permute.xlu0 %3067
      %3069 = vrot.lane.b32.xlu0 %v2974, 20
      %v3070 = vpop.permute.xlu0 %3069
      %3071 = vrot.lane.b32.xlu0 %v2977, 20
      %v3072 = vpop.permute.xlu0 %3071
      %3073 = vrot.lane.b32.xlu0 %v2980, 20
      %v3074 = vpop.permute.xlu0 %3073
      %3075 = vrot.lane.b32.xlu0 %v2983, 20
      %v3076 = vpop.permute.xlu0 %3075
      %3077 = vrot.lane.b32.xlu0 %v2986, 20
      %v3078 = vpop.permute.xlu0 %3077
      %3079 = vrot.lane.b32.xlu0 %v2989, 20
      %v3080 = vpop.permute.xlu0 %3079
      %3081 = vrot.lane.b32.xlu0 %v3066, 20
      %v3082 = vpop.permute.xlu0 %3081
      %3091 = vrot.lane.b32.xlu0 %v2898, 24
      %v3092 = vpop.permute.xlu0 %3091
      %3093 = vrot.lane.b32.xlu0 %v2899, 24
      %v3094 = vpop.permute.xlu0 %3093
      %3095 = vrot.lane.b32.xlu0 %v2900, 24
      %v3096 = vpop.permute.xlu0 %3095
      %3097 = vrot.lane.b32.xlu0 %v2901, 24
      %v3098 = vpop.permute.xlu0 %3097
      %3099 = vrot.lane.b32.xlu0 %v2902, 24
      %v3100 = vpop.permute.xlu0 %3099
      %3101 = vrot.lane.b32.xlu0 %v2903, 24
      %v3102 = vpop.permute.xlu0 %3101
      %3103 = vrot.lane.b32.xlu0 %v2904, 24
      %v3104 = vpop.permute.xlu0 %3103
      %3112 = vrot.lane.b32.xlu0 %v2932, 28
      %v3113 = vpop.permute.xlu0 %3112
      %3114 = vrot.lane.b32.xlu0 %v2935, 28
      %v3115 = vpop.permute.xlu0 %3114
      %3116 = vrot.lane.b32.xlu0 %v2938, 28
      %v3117 = vpop.permute.xlu0 %3116
      %3118 = vrot.lane.b32.xlu0 %v2941, 28
      %v3119 = vpop.permute.xlu0 %3118
      %3120 = vrot.lane.b32.xlu0 %v2944, 28
      %v3121 = vpop.permute.xlu0 %3120
      %3122 = vrot.lane.b32.xlu0 %v2947, 28
      %v3123 = vpop.permute.xlu0 %3122
      %3124 = vrot.lane.b32.xlu0 %v3039, 28
      %v3125 = vpop.permute.xlu0 %3124
      %3133 = vrot.lane.b32.xlu0 %v2974, 32
      %v3134 = vpop.permute.xlu0 %3133
      %3135 = vrot.lane.b32.xlu0 %v2977, 32
      %v3136 = vpop.permute.xlu0 %3135
      %3137 = vrot.lane.b32.xlu0 %v2980, 32
      %v3138 = vpop.permute.xlu0 %3137
      %3139 = vrot.lane.b32.xlu0 %v2983, 32
      %v3140 = vpop.permute.xlu0 %3139
      %3141 = vrot.lane.b32.xlu0 %v2986, 32
      %v3142 = vpop.permute.xlu0 %3141
      %3143 = vrot.lane.b32.xlu0 %v2989, 32
      %v3144 = vpop.permute.xlu0 %3143
      %3145 = vrot.lane.b32.xlu0 %v3066, 32
      %v3146 = vpop.permute.xlu0 %3145
      %v3154 = vsel %vm738, %v2897, %v2949
      %v3155 = vsel %vm738, %v2898, %v2951
      %v3156 = vsel %vm738, %v2899, %v2953
      %v3157 = vsel %vm738, %v2900, %v2955
      %v3158 = vsel %vm738, %v2901, %v2957
      %v3159 = vsel %vm738, %v2902, %v2959
      %v3160 = vsel %vm738, %v2903, %v2961
      %v3161 = vsel %vm747, %v3154, %v2991
      %v3162 = vsel %vm747, %v3155, %v2993
      %v3163 = vsel %vm747, %v3156, %v2995
      %v3164 = vsel %vm747, %v3157, %v2997
      %v3165 = vsel %vm747, %v3158, %v2999
      %v3166 = vsel %vm747, %v3159, %v3001
      %v3167 = vsel %vm747, %v3160, %v3003
      %v3168 = vsel %vm756, %v748, %v3013
      %v3169 = vsel %vm756, %v3161, %v3015
      %v3170 = vsel %vm756, %v3162, %v3017
      %v3171 = vsel %vm756, %v3163, %v3019
      %v3172 = vsel %vm756, %v3164, %v3021
      %v3173 = vsel %vm756, %v3165, %v3023
      %v3174 = vsel %vm756, %v3166, %v3025
      %v3175 = vsel %vm756, %v3167, %v3027
      %v3176 = vsel %vm296, %v3168, %v3041
      %v3177 = vsel %vm296, %v3169, %v3043
      %v3178 = vsel %vm296, %v3170, %v3045
      %v3179 = vsel %vm296, %v3171, %v3047
      %v3180 = vsel %vm296, %v3172, %v3049
      %v3181 = vsel %vm296, %v3173, %v3051
      %v3182 = vsel %vm296, %v3174, %v3053
      %v3183 = vsel %vm296, %v3175, %v3055
      %v3184 = vsel %vm773, %v3176, %v3068
      %v3185 = vsel %vm773, %v3177, %v3070
      %v3186 = vsel %vm773, %v3178, %v3072
      %v3187 = vsel %vm773, %v3179, %v3074
      %v3188 = vsel %vm773, %v3180, %v3076
      %v3189 = vsel %vm773, %v3181, %v3078
      %v3190 = vsel %vm773, %v3182, %v3080
      %v3191 = vsel %vm773, %v3183, %v3082
      %v3192 = vsel %vm782, %v3184, %v3092
      %v3193 = vsel %vm782, %v3185, %v3094
      %v3194 = vsel %vm782, %v3186, %v3096
      %v3195 = vsel %vm782, %v3187, %v3098
      %v3196 = vsel %vm782, %v3188, %v3100
      %v3197 = vsel %vm782, %v3189, %v3102
      %v3198 = vsel %vm782, %v3190, %v3104
      %v3199 = vsel %vm782, %v3191, %v681
      %v3200 = vsel %vm791, %v3192, %v3113
      %v3201 = vsel %vm791, %v3193, %v3115
      %v3202 = vsel %vm791, %v3194, %v3117
      %v3203 = vsel %vm791, %v3195, %v3119
      %v3204 = vsel %vm791, %v3196, %v3121
      %v3205 = vsel %vm791, %v3197, %v3123
      %v3206 = vsel %vm791, %v3198, %v3125
      %v3207 = vsel %vm791, %v3199, %v705
      %v3208 = vsel %vm800, %v3200, %v3134
      %v3209 = vsel %vm800, %v3201, %v3136
      %v3210 = vsel %vm800, %v3202, %v3138
      %v3211 = vsel %vm800, %v3203, %v3140
      %v3212 = vsel %vm800, %v3204, %v3142
      %v3213 = vsel %vm800, %v3205, %v3144
      %v3214 = vsel %vm800, %v3206, %v3146
      %v3215 = vsel %vm800, %v3207, %v729
      %s3216 = scalar_lea.vmem %s3, 120
      %v3217 = vld [vmem:[%s3216] sm:$0xff]
      %v3218 = vld [vmem:[%s3216 + $0x8] sm:$0xff]
      %v3219 = vld [vmem:[%s3216 + $0x10] sm:$0xff]
      %v3220 = vld [vmem:[%s3216 + $0x18] sm:$0xff]
      %v3221 = vld [vmem:[%s3216 + $0x20] sm:$0xf]
      %s3222 = scalar_lea.vmem %s4, 3
      %v3223 = vld [vmem:[%s3222] sm:$0x1]
      %v3225 = vlaneseq
      %v3226 = vshrl.u32 %v3225, 7
      %v3227 = vsub.s32 0, %v3226
      %v3228 = vrot.slane %v3223, %v3227
      %v3231 = vsel %vm821, %v3208, 0
      %v3234 = vsel %vm821, %v3209, 0
      %v3237 = vsel %vm821, %v3210, 0
      %v3240 = vsel %vm821, %v3211, 0
      %v3243 = vsel %vm821, %v3212, 0
      %v3246 = vsel %vm821, %v3213, 0
      %v3249 = vsel %vm821, %v3214, 0
      %v3252 = vsel %vm821, %v3215, 0
      %v3255 = vsel %vm846, %v3221, 0
      %3257 = vmatprep.subr.mxu0 0.0
      %3258 = vmatpush1.msra.mxu0 %v3217
      %3259 = vmatprep.subr.mxu0 0.0
      %3260 = vmatpush1.msra.mxu0 %v3218
      %3261 = vmatprep.subr.mxu0 0.0
      %3262 = vmatpush1.msra.mxu0 %v3219
      %3263 = vmatprep.subr.mxu0 0.0
      %3264 = vmatpush1.msra.mxu0 %v3220
      %3265 = vmatprep.subr.mxu0 0.0
      %3266 = vmatpush1.msra.mxu0 %v3255
      %3267 = vmatprep.subr.mxu0 0.0
      %3268 = vmatpush1.msra.mxu0 0.0
      %3269 = vmatprep.subr.mxu0 0.0
      %3270 = vmatpush1.msra.mxu0 0.0
      %3271 = vmatprep.subr.mxu0 0.0
      %3272 = vmatpush1.msra.mxu0 0.0
      %3273 = vmatprep.subr.mxu0 0.0
      %3274 = vmatpush1.msra.mxu0 0.0
      %3275 = vmatprep.subr.mxu0 0.0
      %3276 = vmatpush1.msra.mxu0 0.0
      %3277 = vmatprep.subr.mxu0 0.0
      %3278 = vmatpush1.msra.mxu0 0.0
      %3279 = vmatprep.subr.mxu0 0.0
      %3280 = vmatpush1.msra.mxu0 0.0
      %3281 = vmatprep.subr.mxu0 0.0
      %3282 = vmatpush1.msra.mxu0 0.0
      %3283 = vmatprep.subr.mxu0 0.0
      %3284 = vmatpush1.msra.mxu0 0.0
      %3285 = vmatprep.subr.mxu0 0.0
      %3286 = vmatpush1.msra.mxu0 0.0
      %3287 = vmatprep.subr.mxu0 0.0
      %3288 = vmatpush1.msra.mxu0 0.0
      %3289 = vmatprep.subr.mxu0 0.0
      %3290 = vmatpush1.msra.mxu0 0.0
      %3291 = vmatprep.subr.mxu0 0.0
      %3292 = vmatpush1.msra.mxu0 0.0
      %3293 = vmatprep.subr.mxu0 0.0
      %3294 = vmatpush1.msra.mxu0 0.0
      %3295 = vmatprep.subr.mxu0 0.0
      %3296 = vmatpush1.msra.mxu0 0.0
      %3297 = vmatprep.subr.mxu0 0.0
      %3298 = vmatpush1.msra.mxu0 0.0
      %3299 = vmatprep.subr.mxu0 0.0
      %3300 = vmatpush1.msra.mxu0 0.0
      %3301 = vmatprep.subr.mxu0 0.0
      %3302 = vmatpush1.msra.mxu0 0.0
      %3303 = vmatprep.subr.mxu0 0.0
      %3304 = vmatpush1.msra.mxu0 0.0
      %3305 = vmatprep.subr.mxu0 0.0
      %3306 = vmatpush1.msra.mxu0 0.0
      %3307 = vmatprep.subr.mxu0 0.0
      %3308 = vmatpush1.msra.mxu0 0.0
      %3309 = vmatprep.subr.mxu0 0.0
      %3310 = vmatpush1.msra.mxu0 0.0
      %3311 = vmatprep.subr.mxu0 0.0
      %3312 = vmatpush1.msra.mxu0 0.0
      %3313 = vmatprep.subr.mxu0 0.0
      %3314 = vmatpush1.msra.mxu0 0.0
      %3315 = vmatprep.subr.mxu0 0.0
      %3316 = vmatpush1.msra.mxu0 0.0
      %3317 = vmatprep.subr.mxu0 0.0
      %3318 = vmatpush1.msra.mxu0 0.0
      %3319 = vmatprep.subr.mxu0 0.0
      %3320 = vmatpush1.msra.mxu0 0.0
      %3321 = vmatprep.mubr.f32.mxu0 0.0
      %3322 = vmatmul.mubr.f32.gmra.mrb[0].mxu0 %v3231
      %v3323 = vpop.f32.mrb[0].mxu0
      %v3324 = vadd.f32 %v3228, %v3323
      %v3325 = vpop.f32.mrb[0].mxu0
      %3326 = vmatprep.mubr.f32.mxu0 0.0
      %3327 = vmatmul.mubr.f32.gmra.mrb[0].mxu0 %v3234
      %v3328 = vpop.f32.mrb[0].mxu0
      %v3329 = vadd.f32 %v3228, %v3328
      %v3330 = vpop.f32.mrb[0].mxu0
      %3331 = vmatprep.mubr.f32.mxu0 0.0
      %3332 = vmatmul.mubr.f32.gmra.mrb[0].mxu0 %v3237
      %v3333 = vpop.f32.mrb[0].mxu0
      %v3334 = vadd.f32 %v3228, %v3333
      %v3335 = vpop.f32.mrb[0].mxu0
      %3336 = vmatprep.mubr.f32.mxu0 0.0
      %3337 = vmatmul.mubr.f32.gmra.mrb[0].mxu0 %v3240
      %v3338 = vpop.f32.mrb[0].mxu0
      %v3339 = vadd.f32 %v3228, %v3338
      %v3340 = vpop.f32.mrb[0].mxu0
      %3341 = vmatprep.mubr.f32.mxu0 0.0
      %3342 = vmatmul.mubr.f32.gmra.mrb[0].mxu0 %v3243
      %v3343 = vpop.f32.mrb[0].mxu0
      %v3344 = vadd.f32 %v3228, %v3343
      %v3345 = vpop.f32.mrb[0].mxu0
      %3346 = vmatprep.mubr.f32.mxu0 0.0
      %3347 = vmatmul.mubr.f32.gmra.mrb[0].mxu0 %v3246
      %v3348 = vpop.f32.mrb[0].mxu0
      %v3349 = vadd.f32 %v3228, %v3348
      %v3350 = vpop.f32.mrb[0].mxu0
      %3351 = vmatprep.mubr.f32.mxu0 0.0
      %3352 = vmatmul.mubr.f32.gmra.mrb[0].mxu0 %v3249
      %v3353 = vpop.f32.mrb[0].mxu0
      %v3354 = vadd.f32 %v3228, %v3353
      %v3355 = vpop.f32.mrb[0].mxu0
      %3356 = vmatprep.mubr.f32.mxu0 0.0
      %3357 = vmatmul.mubr.f32.gmra.mrb[0].mxu0 %v3252
      %v3358 = vpop.f32.mrb[0].mxu0
      %v3359 = vadd.f32 %v3228, %v3358
      %v3360 = vpop.f32.mrb[0].mxu0
      %3361 = vdwg.mxu0
      %v3362 = vmax.f32 %v3324, 0.0
      %v3363 = vmax.f32 %v3329, 0.0
      %v3364 = vmax.f32 %v3334, 0.0
      %v3365 = vmax.f32 %v3339, 0.0
      %v3366 = vmax.f32 %v3344, 0.0
      %v3367 = vmax.f32 %v3349, 0.0
      %v3368 = vmax.f32 %v3354, 0.0
      %v3369 = vmax.f32 %v3359, 0.0
      %s3370 = scalar_lea.vmem %s5, 12
      %v3371 = vld [vmem:[%s3370] sm:$0xf]
      %s3372 = scalar_lea.vmem %s6, 3
      %v3373 = vld [vmem:[%s3372] sm:$0x1]
      %v3375 = vlaneseq
      %v3376 = vshrl.u32 %v3375, 7
      %v3377 = vsub.s32 0, %v3376
      %v3378 = vrot.slane %v3373, %v3377
      %v3381 = vsel %vm738, %v3362, 0
      %v3384 = vsel %vm738, %v3363, 0
      %v3387 = vsel %vm738, %v3364, 0
      %v3390 = vsel %vm738, %v3365, 0
      %v3393 = vsel %vm738, %v3366, 0
      %v3396 = vsel %vm738, %v3367, 0
      %v3399 = vsel %vm738, %v3368, 0
      %v3402 = vsel %vm738, %v3369, 0
      %v3405 = vsel %vm846, %v3371, 0
      %3407 = vmatprep.subr.mxu0 0.0
      %3408 = vmatpush1.msra.mxu0 %v3405
      %3409 = vmatprep.subr.mxu0 0.0
      %3410 = vmatpush1.msra.mxu0 0.0
      %3411 = vmatprep.subr.mxu0 0.0
      %3412 = vmatpush1.msra.mxu0 0.0
      %3413 = vmatprep.subr.mxu0 0.0
      %3414 = vmatpush1.msra.mxu0 0.0
      %3415 = vmatprep.subr.mxu0 0.0
      %3416 = vmatpush1.msra.mxu0 0.0
      %3417 = vmatprep.subr.mxu0 0.0
      %3418 = vmatpush1.msra.mxu0 0.0
      %3419 = vmatprep.subr.mxu0 0.0
      %3420 = vmatpush1.msra.mxu0 0.0
      %3421 = vmatprep.subr.mxu0 0.0
      %3422 = vmatpush1.msra.mxu0 0.0
      %3423 = vmatprep.subr.mxu0 0.0
      %3424 = vmatpush1.msra.mxu0 0.0
      %3425 = vmatprep.subr.mxu0 0.0
      %3426 = vmatpush1.msra.mxu0 0.0
      %3427 = vmatprep.subr.mxu0 0.0
      %3428 = vmatpush1.msra.mxu0 0.0
      %3429 = vmatprep.subr.mxu0 0.0
      %3430 = vmatpush1.msra.mxu0 0.0
      %3431 = vmatprep.subr.mxu0 0.0
      %3432 = vmatpush1.msra.mxu0 0.0
      %3433 = vmatprep.subr.mxu0 0.0
      %3434 = vmatpush1.msra.mxu0 0.0
      %3435 = vmatprep.subr.mxu0 0.0
      %3436 = vmatpush1.msra.mxu0 0.0
      %3437 = vmatprep.subr.mxu0 0.0
      %3438 = vmatpush1.msra.mxu0 0.0
      %3439 = vmatprep.subr.mxu0 0.0
      %3440 = vmatpush1.msra.mxu0 0.0
      %3441 = vmatprep.subr.mxu0 0.0
      %3442 = vmatpush1.msra.mxu0 0.0
      %3443 = vmatprep.subr.mxu0 0.0
      %3444 = vmatpush1.msra.mxu0 0.0
      %3445 = vmatprep.subr.mxu0 0.0
      %3446 = vmatpush1.msra.mxu0 0.0
      %3447 = vmatprep.subr.mxu0 0.0
      %3448 = vmatpush1.msra.mxu0 0.0
      %3449 = vmatprep.subr.mxu0 0.0
      %3450 = vmatpush1.msra.mxu0 0.0
      %3451 = vmatprep.subr.mxu0 0.0
      %3452 = vmatpush1.msra.mxu0 0.0
      %3453 = vmatprep.subr.mxu0 0.0
      %3454 = vmatpush1.msra.mxu0 0.0
      %3455 = vmatprep.subr.mxu0 0.0
      %3456 = vmatpush1.msra.mxu0 0.0
      %3457 = vmatprep.subr.mxu0 0.0
      %3458 = vmatpush1.msra.mxu0 0.0
      %3459 = vmatprep.subr.mxu0 0.0
      %3460 = vmatpush1.msra.mxu0 0.0
      %3461 = vmatprep.subr.mxu0 0.0
      %3462 = vmatpush1.msra.mxu0 0.0
      %3463 = vmatprep.subr.mxu0 0.0
      %3464 = vmatpush1.msra.mxu0 0.0
      %3465 = vmatprep.subr.mxu0 0.0
      %3466 = vmatpush1.msra.mxu0 0.0
      %3467 = vmatprep.subr.mxu0 0.0
      %3468 = vmatpush1.msra.mxu0 0.0
      %3469 = vmatprep.subr.mxu0 0.0
      %3470 = vmatpush1.msra.mxu0 0.0
      %3471 = vmatprep.mubr.f32.mxu0 0.0
      %3472 = vmatmul.mubr.f32.gmra.mrb[0].mxu0 %v3381
      %v3473 = vpop.f32.mrb[0].mxu0
      %v3474 = vadd.f32 %v3378, %v3473
      %v3475 = vpop.f32.mrb[0].mxu0
      %3476 = vmatprep.mubr.f32.mxu0 0.0
      %3477 = vmatmul.mubr.f32.gmra.mrb[0].mxu0 %v3384
      %v3478 = vpop.f32.mrb[0].mxu0
      %v3479 = vadd.f32 %v3378, %v3478
      %v3480 = vpop.f32.mrb[0].mxu0
      %3481 = vmatprep.mubr.f32.mxu0 0.0
      %3482 = vmatmul.mubr.f32.gmra.mrb[0].mxu0 %v3387
      %v3483 = vpop.f32.mrb[0].mxu0
      %v3484 = vadd.f32 %v3378, %v3483
      %v3485 = vpop.f32.mrb[0].mxu0
      %3486 = vmatprep.mubr.f32.mxu0 0.0
      %3487 = vmatmul.mubr.f32.gmra.mrb[0].mxu0 %v3390
      %v3488 = vpop.f32.mrb[0].mxu0
      %v3489 = vadd.f32 %v3378, %v3488
      %v3490 = vpop.f32.mrb[0].mxu0
      %3491 = vmatprep.mubr.f32.mxu0 0.0
      %3492 = vmatmul.mubr.f32.gmra.mrb[0].mxu0 %v3393
      %v3493 = vpop.f32.mrb[0].mxu0
      %v3494 = vadd.f32 %v3378, %v3493
      %v3495 = vpop.f32.mrb[0].mxu0
      %3496 = vmatprep.mubr.f32.mxu0 0.0
      %3497 = vmatmul.mubr.f32.gmra.mrb[0].mxu0 %v3396
      %v3498 = vpop.f32.mrb[0].mxu0
      %v3499 = vadd.f32 %v3378, %v3498
      %v3500 = vpop.f32.mrb[0].mxu0
      %3501 = vmatprep.mubr.f32.mxu0 0.0
      %3502 = vmatmul.mubr.f32.gmra.mrb[0].mxu0 %v3399
      %v3503 = vpop.f32.mrb[0].mxu0
      %v3504 = vadd.f32 %v3378, %v3503
      %v3505 = vpop.f32.mrb[0].mxu0
      %3506 = vmatprep.mubr.f32.mxu0 0.0
      %3507 = vmatmul.mubr.f32.gmra.mrb[0].mxu0 %v3402
      %v3508 = vpop.f32.mrb[0].mxu0
      %v3509 = vadd.f32 %v3378, %v3508
      %v3510 = vpop.f32.mrb[0].mxu0
      %3511 = vdwg.mxu0
      %v3512 = vadd.f32 %v3474, %v2717
      %v3513 = vadd.f32 %v3479, %v2718
      %v3514 = vadd.f32 %v3484, %v2719
      %v3515 = vadd.f32 %v3489, %v2720
      %v3516 = vadd.f32 %v3494, %v2721
      %v3517 = vadd.f32 %v3499, %v2722
      %v3518 = vadd.f32 %v3504, %v2723
      %v3519 = vadd.f32 %v3509, %v2724
      %v3520 = vmax.f32 %v3512, 0.0
      %v3521 = vmax.f32 %v3513, 0.0
      %v3522 = vmax.f32 %v3514, 0.0
      %v3523 = vmax.f32 %v3515, 0.0
      %v3524 = vmax.f32 %v3516, 0.0
      %v3525 = vmax.f32 %v3517, 0.0
      %v3526 = vmax.f32 %v3518, 0.0
      %v3527 = vmax.f32 %v3519, 0.0
      %s3528 = scalar_lea.vmem %s1, 64
      %v3529 = vld [vmem:[%s3528] sm:$0xff]
      %v3530 = vld [vmem:[%s3528 + $0x8] sm:$0xff]
      %s3531 = scalar_lea.vmem %s2, 4
      %v3532 = vld [vmem:[%s3531] sm:$0x1]
      %v3534 = vlaneseq
      %v3535 = vshrl.u32 %v3534, 7
      %v3536 = vsub.s32 0, %v3535
      %v3537 = vrot.slane %v3532, %v3536
      %v3540 = vsel %vm296, %v3520, 0
      %v3543 = vsel %vm296, %v3521, 0
      %v3546 = vsel %vm296, %v3522, 0
      %v3549 = vsel %vm296, %v3523, 0
      %v3552 = vsel %vm296, %v3524, 0
      %v3555 = vsel %vm296, %v3525, 0
      %v3558 = vsel %vm296, %v3526, 0
      %v3561 = vsel %vm296, %v3527, 0
      %3563 = vmatprep.subr.mxu0 0.0
      %3564 = vmatpush1.msra.mxu0 %v3529
      %3565 = vmatprep.subr.mxu0 0.0
      %3566 = vmatpush1.msra.mxu0 %v3530
      %3567 = vmatprep.subr.mxu0 0.0
      %3568 = vmatpush1.msra.mxu0 0.0
      %3569 = vmatprep.subr.mxu0 0.0
      %3570 = vmatpush1.msra.mxu0 0.0
      %3571 = vmatprep.subr.mxu0 0.0
      %3572 = vmatpush1.msra.mxu0 0.0
      %3573 = vmatprep.subr.mxu0 0.0
      %3574 = vmatpush1.msra.mxu0 0.0
      %3575 = vmatprep.subr.mxu0 0.0
      %3576 = vmatpush1.msra.mxu0 0.0
      %3577 = vmatprep.subr.mxu0 0.0
      %3578 = vmatpush1.msra.mxu0 0.0
      %3579 = vmatprep.subr.mxu0 0.0
      %3580 = vmatpush1.msra.mxu0 0.0
      %3581 = vmatprep.subr.mxu0 0.0
      %3582 = vmatpush1.msra.mxu0 0.0
      %3583 = vmatprep.subr.mxu0 0.0
      %3584 = vmatpush1.msra.mxu0 0.0
      %3585 = vmatprep.subr.mxu0 0.0
      %3586 = vmatpush1.msra.mxu0 0.0
      %3587 = vmatprep.subr.mxu0 0.0
      %3588 = vmatpush1.msra.mxu0 0.0
      %3589 = vmatprep.subr.mxu0 0.0
      %3590 = vmatpush1.msra.mxu0 0.0
      %3591 = vmatprep.subr.mxu0 0.0
      %3592 = vmatpush1.msra.mxu0 0.0
      %3593 = vmatprep.subr.mxu0 0.0
      %3594 = vmatpush1.msra.mxu0 0.0
      %3595 = vmatprep.subr.mxu0 0.0
      %3596 = vmatpush1.msra.mxu0 0.0
      %3597 = vmatprep.subr.mxu0 0.0
      %3598 = vmatpush1.msra.mxu0 0.0
      %3599 = vmatprep.subr.mxu0 0.0
      %3600 = vmatpush1.msra.mxu0 0.0
      %3601 = vmatprep.subr.mxu0 0.0
      %3602 = vmatpush1.msra.mxu0 0.0
      %3603 = vmatprep.subr.mxu0 0.0
      %3604 = vmatpush1.msra.mxu0 0.0
      %3605 = vmatprep.subr.mxu0 0.0
      %3606 = vmatpush1.msra.mxu0 0.0
      %3607 = vmatprep.subr.mxu0 0.0
      %3608 = vmatpush1.msra.mxu0 0.0
      %3609 = vmatprep.subr.mxu0 0.0
      %3610 = vmatpush1.msra.mxu0 0.0
      %3611 = vmatprep.subr.mxu0 0.0
      %3612 = vmatpush1.msra.mxu0 0.0
      %3613 = vmatprep.subr.mxu0 0.0
      %3614 = vmatpush1.msra.mxu0 0.0
      %3615 = vmatprep.subr.mxu0 0.0
      %3616 = vmatpush1.msra.mxu0 0.0
      %3617 = vmatprep.subr.mxu0 0.0
      %3618 = vmatpush1.msra.mxu0 0.0
      %3619 = vmatprep.subr.mxu0 0.0
      %3620 = vmatpush1.msra.mxu0 0.0
      %3621 = vmatprep.subr.mxu0 0.0
      %3622 = vmatpush1.msra.mxu0 0.0
      %3623 = vmatprep.subr.mxu0 0.0
      %3624 = vmatpush1.msra.mxu0 0.0
      %3625 = vmatprep.subr.mxu0 0.0
      %3626 = vmatpush1.msra.mxu0 0.0
      %3627 = vmatprep.mubr.f32.mxu0 0.0
      %3628 = vmatmul.mubr.f32.gmra.mrb[0].mxu0 %v3540
      %v3629 = vpop.f32.mrb[0].mxu0
      %v3630 = vadd.f32 %v3537, %v3629
      %v3631 = vpop.f32.mrb[0].mxu0
      %3632 = vmatprep.mubr.f32.mxu0 0.0
      %3633 = vmatmul.mubr.f32.gmra.mrb[0].mxu0 %v3543
      %v3634 = vpop.f32.mrb[0].mxu0
      %v3635 = vadd.f32 %v3537, %v3634
      %v3636 = vpop.f32.mrb[0].mxu0
      %3637 = vmatprep.mubr.f32.mxu0 0.0
      %3638 = vmatmul.mubr.f32.gmra.mrb[0].mxu0 %v3546
      %v3639 = vpop.f32.mrb[0].mxu0
      %v3640 = vadd.f32 %v3537, %v3639
      %v3641 = vpop.f32.mrb[0].mxu0
      %3642 = vmatprep.mubr.f32.mxu0 0.0
      %3643 = vmatmul.mubr.f32.gmra.mrb[0].mxu0 %v3549
      %v3644 = vpop.f32.mrb[0].mxu0
      %v3645 = vadd.f32 %v3537, %v3644
      %v3646 = vpop.f32.mrb[0].mxu0
      %3647 = vmatprep.mubr.f32.mxu0 0.0
      %3648 = vmatmul.mubr.f32.gmra.mrb[0].mxu0 %v3552
      %v3649 = vpop.f32.mrb[0].mxu0
      %v3650 = vadd.f32 %v3537, %v3649
      %v3651 = vpop.f32.mrb[0].mxu0
      %3652 = vmatprep.mubr.f32.mxu0 0.0
      %3653 = vmatmul.mubr.f32.gmra.mrb[0].mxu0 %v3555
      %v3654 = vpop.f32.mrb[0].mxu0
      %v3655 = vadd.f32 %v3537, %v3654
      %v3656 = vpop.f32.mrb[0].mxu0
      %3657 = vmatprep.mubr.f32.mxu0 0.0
      %3658 = vmatmul.mubr.f32.gmra.mrb[0].mxu0 %v3558
      %v3659 = vpop.f32.mrb[0].mxu0
      %v3660 = vadd.f32 %v3537, %v3659
      %v3661 = vpop.f32.mrb[0].mxu0
      %3662 = vmatprep.mubr.f32.mxu0 0.0
      %3663 = vmatmul.mubr.f32.gmra.mrb[0].mxu0 %v3561
      %v3664 = vpop.f32.mrb[0].mxu0
      %v3665 = vadd.f32 %v3537, %v3664
      %v3666 = vpop.f32.mrb[0].mxu0
      %3667 = vdwg.mxu0
      %v3668 = vmax.f32 %v3630, 0.0
      %v3669 = vmax.f32 %v3635, 0.0
      %v3670 = vmax.f32 %v3640, 0.0
      %v3671 = vmax.f32 %v3645, 0.0
      %v3672 = vmax.f32 %v3650, 0.0
      %v3673 = vmax.f32 %v3655, 0.0
      %v3674 = vmax.f32 %v3660, 0.0
      %v3675 = vmax.f32 %v3665, 0.0
      %v3684 = vrot.slane %v3668, 7
      %v3685 = vrot.slane %v3669, 7
      %v3686 = vrot.slane %v3670, 7
      %v3687 = vrot.slane %v3671, 7
      %v3688 = vrot.slane %v3672, 7
      %v3689 = vrot.slane %v3673, 7
      %v3690 = vrot.slane %v3674, 7
      %v3691 = vrot.slane %v3675, 7
      %v3700 = vsel %vm458, 0.0, %v3684
      %v3701 = vsel %vm458, 0.0, %v3685
      %v3702 = vsel %vm458, 0.0, %v3686
      %v3703 = vsel %vm458, 0.0, %v3687
      %v3704 = vsel %vm458, 0.0, %v3688
      %v3705 = vsel %vm458, 0.0, %v3689
      %v3706 = vsel %vm458, 0.0, %v3690
      %v3707 = vsel %vm458, 0.0, %v3691
      %v3708 = vsel %vm458, %v3684, 0.0
      %v3709 = vsel %vm458, %v3685, 0.0
      %v3710 = vsel %vm458, %v3686, 0.0
      %v3711 = vsel %vm458, %v3687, 0.0
      %v3712 = vsel %vm458, %v3688, 0.0
      %v3713 = vsel %vm458, %v3689, 0.0
      %v3714 = vsel %vm458, %v3690, 0.0
      %v3715 = vsel %vm458, %v3691, 0.0
      %v3730 = vrot.slane %v3700, 1
      %v3731 = vrot.slane %v3708, 1
      %v3732 = vsel %vm490, %v3730, %v3731
      %v3733 = vrot.slane %v3701, 1
      %v3734 = vrot.slane %v3709, 1
      %v3735 = vsel %vm490, %v3733, %v3734
      %v3736 = vrot.slane %v3702, 1
      %v3737 = vrot.slane %v3710, 1
      %v3738 = vsel %vm490, %v3736, %v3737
      %v3739 = vrot.slane %v3703, 1
      %v3740 = vrot.slane %v3711, 1
      %v3741 = vsel %vm490, %v3739, %v3740
      %v3742 = vrot.slane %v3704, 1
      %v3743 = vrot.slane %v3712, 1
      %v3744 = vsel %vm490, %v3742, %v3743
      %v3745 = vrot.slane %v3705, 1
      %v3746 = vrot.slane %v3713, 1
      %v3747 = vsel %vm490, %v3745, %v3746
      %v3748 = vrot.slane %v3706, 1
      %v3749 = vrot.slane %v3714, 1
      %v3750 = vsel %vm490, %v3748, %v3749
      %3751 = vrot.lane.b32.xlu0 %v3732, 4
      %v3752 = vpop.permute.xlu0 %3751
      %3753 = vrot.lane.b32.xlu0 %v3735, 4
      %v3754 = vpop.permute.xlu0 %3753
      %3755 = vrot.lane.b32.xlu0 %v3738, 4
      %v3756 = vpop.permute.xlu0 %3755
      %3757 = vrot.lane.b32.xlu0 %v3741, 4
      %v3758 = vpop.permute.xlu0 %3757
      %3759 = vrot.lane.b32.xlu0 %v3744, 4
      %v3760 = vpop.permute.xlu0 %3759
      %3761 = vrot.lane.b32.xlu0 %v3747, 4
      %v3762 = vpop.permute.xlu0 %3761
      %3763 = vrot.lane.b32.xlu0 %v3750, 4
      %v3764 = vpop.permute.xlu0 %3763
      %v3772 = vrot.slane %v3700, 2
      %v3773 = vrot.slane %v3708, 2
      %v3774 = vsel %vm538, %v3772, %v3773
      %v3775 = vrot.slane %v3701, 2
      %v3776 = vrot.slane %v3709, 2
      %v3777 = vsel %vm538, %v3775, %v3776
      %v3778 = vrot.slane %v3702, 2
      %v3779 = vrot.slane %v3710, 2
      %v3780 = vsel %vm538, %v3778, %v3779
      %v3781 = vrot.slane %v3703, 2
      %v3782 = vrot.slane %v3711, 2
      %v3783 = vsel %vm538, %v3781, %v3782
      %v3784 = vrot.slane %v3704, 2
      %v3785 = vrot.slane %v3712, 2
      %v3786 = vsel %vm538, %v3784, %v3785
      %v3787 = vrot.slane %v3705, 2
      %v3788 = vrot.slane %v3713, 2
      %v3789 = vsel %vm538, %v3787, %v3788
      %v3790 = vrot.slane %v3706, 2
      %v3791 = vrot.slane %v3714, 2
      %v3792 = vsel %vm538, %v3790, %v3791
      %3793 = vrot.lane.b32.xlu0 %v3774, 8
      %v3794 = vpop.permute.xlu0 %3793
      %3795 = vrot.lane.b32.xlu0 %v3777, 8
      %v3796 = vpop.permute.xlu0 %3795
      %3797 = vrot.lane.b32.xlu0 %v3780, 8
      %v3798 = vpop.permute.xlu0 %3797
      %3799 = vrot.lane.b32.xlu0 %v3783, 8
      %v3800 = vpop.permute.xlu0 %3799
      %3801 = vrot.lane.b32.xlu0 %v3786, 8
      %v3802 = vpop.permute.xlu0 %3801
      %3803 = vrot.lane.b32.xlu0 %v3789, 8
      %v3804 = vpop.permute.xlu0 %3803
      %3805 = vrot.lane.b32.xlu0 %v3792, 8
      %v3806 = vpop.permute.xlu0 %3805
      %3815 = vrot.lane.b32.xlu0 %v3700, 12
      %v3816 = vpop.permute.xlu0 %3815
      %3817 = vrot.lane.b32.xlu0 %v3701, 12
      %v3818 = vpop.permute.xlu0 %3817
      %3819 = vrot.lane.b32.xlu0 %v3702, 12
      %v3820 = vpop.permute.xlu0 %3819
      %3821 = vrot.lane.b32.xlu0 %v3703, 12
      %v3822 = vpop.permute.xlu0 %3821
      %3823 = vrot.lane.b32.xlu0 %v3704, 12
      %v3824 = vpop.permute.xlu0 %3823
      %3825 = vrot.lane.b32.xlu0 %v3705, 12
      %v3826 = vpop.permute.xlu0 %3825
      %3827 = vrot.lane.b32.xlu0 %v3706, 12
      %v3828 = vpop.permute.xlu0 %3827
      %3829 = vrot.lane.b32.xlu0 %v3707, 12
      %v3830 = vpop.permute.xlu0 %3829
      %v3840 = vrot.slane %v3707, 1
      %v3841 = vrot.slane %v3715, 1
      %v3842 = vsel %vm490, %v3840, %v3841
      %3843 = vrot.lane.b32.xlu0 %v3732, 16
      %v3844 = vpop.permute.xlu0 %3843
      %3845 = vrot.lane.b32.xlu0 %v3735, 16
      %v3846 = vpop.permute.xlu0 %3845
      %3847 = vrot.lane.b32.xlu0 %v3738, 16
      %v3848 = vpop.permute.xlu0 %3847
      %3849 = vrot.lane.b32.xlu0 %v3741, 16
      %v3850 = vpop.permute.xlu0 %3849
      %3851 = vrot.lane.b32.xlu0 %v3744, 16
      %v3852 = vpop.permute.xlu0 %3851
      %3853 = vrot.lane.b32.xlu0 %v3747, 16
      %v3854 = vpop.permute.xlu0 %3853
      %3855 = vrot.lane.b32.xlu0 %v3750, 16
      %v3856 = vpop.permute.xlu0 %3855
      %3857 = vrot.lane.b32.xlu0 %v3842, 16
      %v3858 = vpop.permute.xlu0 %3857
      %v3867 = vrot.slane %v3707, 2
      %v3868 = vrot.slane %v3715, 2
      %v3869 = vsel %vm538, %v3867, %v3868
      %3870 = vrot.lane.b32.xlu0 %v3774, 20
      %v3871 = vpop.permute.xlu0 %3870
      %3872 = vrot.lane.b32.xlu0 %v3777, 20
      %v3873 = vpop.permute.xlu0 %3872
      %3874 = vrot.lane.b32.xlu0 %v3780, 20
      %v3875 = vpop.permute.xlu0 %3874
      %3876 = vrot.lane.b32.xlu0 %v3783, 20
      %v3877 = vpop.permute.xlu0 %3876
      %3878 = vrot.lane.b32.xlu0 %v3786, 20
      %v3879 = vpop.permute.xlu0 %3878
      %3880 = vrot.lane.b32.xlu0 %v3789, 20
      %v3881 = vpop.permute.xlu0 %3880
      %3882 = vrot.lane.b32.xlu0 %v3792, 20
      %v3883 = vpop.permute.xlu0 %3882
      %3884 = vrot.lane.b32.xlu0 %v3869, 20
      %v3885 = vpop.permute.xlu0 %3884
      %3894 = vrot.lane.b32.xlu0 %v3701, 24
      %v3895 = vpop.permute.xlu0 %3894
      %3896 = vrot.lane.b32.xlu0 %v3702, 24
      %v3897 = vpop.permute.xlu0 %3896
      %3898 = vrot.lane.b32.xlu0 %v3703, 24
      %v3899 = vpop.permute.xlu0 %3898
      %3900 = vrot.lane.b32.xlu0 %v3704, 24
      %v3901 = vpop.permute.xlu0 %3900
      %3902 = vrot.lane.b32.xlu0 %v3705, 24
      %v3903 = vpop.permute.xlu0 %3902
      %3904 = vrot.lane.b32.xlu0 %v3706, 24
      %v3905 = vpop.permute.xlu0 %3904
      %3906 = vrot.lane.b32.xlu0 %v3707, 24
      %v3907 = vpop.permute.xlu0 %3906
      %3915 = vrot.lane.b32.xlu0 %v3735, 28
      %v3916 = vpop.permute.xlu0 %3915
      %3917 = vrot.lane.b32.xlu0 %v3738, 28
      %v3918 = vpop.permute.xlu0 %3917
      %3919 = vrot.lane.b32.xlu0 %v3741, 28
      %v3920 = vpop.permute.xlu0 %3919
      %3921 = vrot.lane.b32.xlu0 %v3744, 28
      %v3922 = vpop.permute.xlu0 %3921
      %3923 = vrot.lane.b32.xlu0 %v3747, 28
      %v3924 = vpop.permute.xlu0 %3923
      %3925 = vrot.lane.b32.xlu0 %v3750, 28
      %v3926 = vpop.permute.xlu0 %3925
      %3927 = vrot.lane.b32.xlu0 %v3842, 28
      %v3928 = vpop.permute.xlu0 %3927
      %3936 = vrot.lane.b32.xlu0 %v3777, 32
      %v3937 = vpop.permute.xlu0 %3936
      %3938 = vrot.lane.b32.xlu0 %v3780, 32
      %v3939 = vpop.permute.xlu0 %3938
      %3940 = vrot.lane.b32.xlu0 %v3783, 32
      %v3941 = vpop.permute.xlu0 %3940
      %3942 = vrot.lane.b32.xlu0 %v3786, 32
      %v3943 = vpop.permute.xlu0 %3942
      %3944 = vrot.lane.b32.xlu0 %v3789, 32
      %v3945 = vpop.permute.xlu0 %3944
      %3946 = vrot.lane.b32.xlu0 %v3792, 32
      %v3947 = vpop.permute.xlu0 %3946
      %3948 = vrot.lane.b32.xlu0 %v3869, 32
      %v3949 = vpop.permute.xlu0 %3948
      %v3957 = vsel %vm738, %v3700, %v3752
      %v3958 = vsel %vm738, %v3701, %v3754
      %v3959 = vsel %vm738, %v3702, %v3756
      %v3960 = vsel %vm738, %v3703, %v3758
      %v3961 = vsel %vm738, %v3704, %v3760
      %v3962 = vsel %vm738, %v3705, %v3762
      %v3963 = vsel %vm738, %v3706, %v3764
      %v3964 = vsel %vm747, %v3957, %v3794
      %v3965 = vsel %vm747, %v3958, %v3796
      %v3966 = vsel %vm747, %v3959, %v3798
      %v3967 = vsel %vm747, %v3960, %v3800
      %v3968 = vsel %vm747, %v3961, %v3802
      %v3969 = vsel %vm747, %v3962, %v3804
      %v3970 = vsel %vm747, %v3963, %v3806
      %v3971 = vsel %vm756, %v748, %v3816
      %v3972 = vsel %vm756, %v3964, %v3818
      %v3973 = vsel %vm756, %v3965, %v3820
      %v3974 = vsel %vm756, %v3966, %v3822
      %v3975 = vsel %vm756, %v3967, %v3824
      %v3976 = vsel %vm756, %v3968, %v3826
      %v3977 = vsel %vm756, %v3969, %v3828
      %v3978 = vsel %vm756, %v3970, %v3830
      %v3979 = vsel %vm296, %v3971, %v3844
      %v3980 = vsel %vm296, %v3972, %v3846
      %v3981 = vsel %vm296, %v3973, %v3848
      %v3982 = vsel %vm296, %v3974, %v3850
      %v3983 = vsel %vm296, %v3975, %v3852
      %v3984 = vsel %vm296, %v3976, %v3854
      %v3985 = vsel %vm296, %v3977, %v3856
      %v3986 = vsel %vm296, %v3978, %v3858
      %v3987 = vsel %vm773, %v3979, %v3871
      %v3988 = vsel %vm773, %v3980, %v3873
      %v3989 = vsel %vm773, %v3981, %v3875
      %v3990 = vsel %vm773, %v3982, %v3877
      %v3991 = vsel %vm773, %v3983, %v3879
      %v3992 = vsel %vm773, %v3984, %v3881
      %v3993 = vsel %vm773, %v3985, %v3883
      %v3994 = vsel %vm773, %v3986, %v3885
      %v3995 = vsel %vm782, %v3987, %v3895
      %v3996 = vsel %vm782, %v3988, %v3897
      %v3997 = vsel %vm782, %v3989, %v3899
      %v3998 = vsel %vm782, %v3990, %v3901
      %v3999 = vsel %vm782, %v3991, %v3903
      %v4000 = vsel %vm782, %v3992, %v3905
      %v4001 = vsel %vm782, %v3993, %v3907
      %v4002 = vsel %vm782, %v3994, %v681
      %v4003 = vsel %vm791, %v3995, %v3916
      %v4004 = vsel %vm791, %v3996, %v3918
      %v4005 = vsel %vm791, %v3997, %v3920
      %v4006 = vsel %vm791, %v3998, %v3922
      %v4007 = vsel %vm791, %v3999, %v3924
      %v4008 = vsel %vm791, %v4000, %v3926
      %v4009 = vsel %vm791, %v4001, %v3928
      %v4010 = vsel %vm791, %v4002, %v705
      %v4011 = vsel %vm800, %v4003, %v3937
      %v4012 = vsel %vm800, %v4004, %v3939
      %v4013 = vsel %vm800, %v4005, %v3941
      %v4014 = vsel %vm800, %v4006, %v3943
      %v4015 = vsel %vm800, %v4007, %v3945
      %v4016 = vsel %vm800, %v4008, %v3947
      %v4017 = vsel %vm800, %v4009, %v3949
      %v4018 = vsel %vm800, %v4010, %v729
      %s4019 = scalar_lea.vmem %s3, 160
      %v4020 = vld [vmem:[%s4019] sm:$0xff]
      %v4021 = vld [vmem:[%s4019 + $0x8] sm:$0xff]
      %v4022 = vld [vmem:[%s4019 + $0x10] sm:$0xff]
      %v4023 = vld [vmem:[%s4019 + $0x18] sm:$0xff]
      %v4024 = vld [vmem:[%s4019 + $0x20] sm:$0xf]
      %s4025 = scalar_lea.vmem %s4, 4
      %v4026 = vld [vmem:[%s4025] sm:$0x1]
      %v4028 = vlaneseq
      %v4029 = vshrl.u32 %v4028, 7
      %v4030 = vsub.s32 0, %v4029
      %v4031 = vrot.slane %v4026, %v4030
      %v4034 = vsel %vm821, %v4011, 0
      %v4037 = vsel %vm821, %v4012, 0
      %v4040 = vsel %vm821, %v4013, 0
      %v4043 = vsel %vm821, %v4014, 0
      %v4046 = vsel %vm821, %v4015, 0
      %v4049 = vsel %vm821, %v4016, 0
      %v4052 = vsel %vm821, %v4017, 0
      %v4055 = vsel %vm821, %v4018, 0
      %v4058 = vsel %vm846, %v4024, 0
      %4060 = vmatprep.subr.mxu0 0.0
      %4061 = vmatpush1.msra.mxu0 %v4020
      %4062 = vmatprep.subr.mxu0 0.0
      %4063 = vmatpush1.msra.mxu0 %v4021
      %4064 = vmatprep.subr.mxu0 0.0
      %4065 = vmatpush1.msra.mxu0 %v4022
      %4066 = vmatprep.subr.mxu0 0.0
      %4067 = vmatpush1.msra.mxu0 %v4023
      %4068 = vmatprep.subr.mxu0 0.0
      %4069 = vmatpush1.msra.mxu0 %v4058
      %4070 = vmatprep.subr.mxu0 0.0
      %4071 = vmatpush1.msra.mxu0 0.0
      %4072 = vmatprep.subr.mxu0 0.0
      %4073 = vmatpush1.msra.mxu0 0.0
      %4074 = vmatprep.subr.mxu0 0.0
      %4075 = vmatpush1.msra.mxu0 0.0
      %4076 = vmatprep.subr.mxu0 0.0
      %4077 = vmatpush1.msra.mxu0 0.0
      %4078 = vmatprep.subr.mxu0 0.0
      %4079 = vmatpush1.msra.mxu0 0.0
      %4080 = vmatprep.subr.mxu0 0.0
      %4081 = vmatpush1.msra.mxu0 0.0
      %4082 = vmatprep.subr.mxu0 0.0
      %4083 = vmatpush1.msra.mxu0 0.0
      %4084 = vmatprep.subr.mxu0 0.0
      %4085 = vmatpush1.msra.mxu0 0.0
      %4086 = vmatprep.subr.mxu0 0.0
      %4087 = vmatpush1.msra.mxu0 0.0
      %4088 = vmatprep.subr.mxu0 0.0
      %4089 = vmatpush1.msra.mxu0 0.0
      %4090 = vmatprep.subr.mxu0 0.0
      %4091 = vmatpush1.msra.mxu0 0.0
      %4092 = vmatprep.subr.mxu0 0.0
      %4093 = vmatpush1.msra.mxu0 0.0
      %4094 = vmatprep.subr.mxu0 0.0
      %4095 = vmatpush1.msra.mxu0 0.0
      %4096 = vmatprep.subr.mxu0 0.0
      %4097 = vmatpush1.msra.mxu0 0.0
      %4098 = vmatprep.subr.mxu0 0.0
      %4099 = vmatpush1.msra.mxu0 0.0
      %4100 = vmatprep.subr.mxu0 0.0
      %4101 = vmatpush1.msra.mxu0 0.0
      %4102 = vmatprep.subr.mxu0 0.0
      %4103 = vmatpush1.msra.mxu0 0.0
      %4104 = vmatprep.subr.mxu0 0.0
      %4105 = vmatpush1.msra.mxu0 0.0
      %4106 = vmatprep.subr.mxu0 0.0
      %4107 = vmatpush1.msra.mxu0 0.0
      %4108 = vmatprep.subr.mxu0 0.0
      %4109 = vmatpush1.msra.mxu0 0.0
      %4110 = vmatprep.subr.mxu0 0.0
      %4111 = vmatpush1.msra.mxu0 0.0
      %4112 = vmatprep.subr.mxu0 0.0
      %4113 = vmatpush1.msra.mxu0 0.0
      %4114 = vmatprep.subr.mxu0 0.0
      %4115 = vmatpush1.msra.mxu0 0.0
      %4116 = vmatprep.subr.mxu0 0.0
      %4117 = vmatpush1.msra.mxu0 0.0
      %4118 = vmatprep.subr.mxu0 0.0
      %4119 = vmatpush1.msra.mxu0 0.0
      %4120 = vmatprep.subr.mxu0 0.0
      %4121 = vmatpush1.msra.mxu0 0.0
      %4122 = vmatprep.subr.mxu0 0.0
      %4123 = vmatpush1.msra.mxu0 0.0
      %4124 = vmatprep.mubr.f32.mxu0 0.0
      %4125 = vmatmul.mubr.f32.gmra.mrb[0].mxu0 %v4034
      %v4126 = vpop.f32.mrb[0].mxu0
      %v4127 = vadd.f32 %v4031, %v4126
      %v4128 = vpop.f32.mrb[0].mxu0
      %4129 = vmatprep.mubr.f32.mxu0 0.0
      %4130 = vmatmul.mubr.f32.gmra.mrb[0].mxu0 %v4037
      %v4131 = vpop.f32.mrb[0].mxu0
      %v4132 = vadd.f32 %v4031, %v4131
      %v4133 = vpop.f32.mrb[0].mxu0
      %4134 = vmatprep.mubr.f32.mxu0 0.0
      %4135 = vmatmul.mubr.f32.gmra.mrb[0].mxu0 %v4040
      %v4136 = vpop.f32.mrb[0].mxu0
      %v4137 = vadd.f32 %v4031, %v4136
      %v4138 = vpop.f32.mrb[0].mxu0
      %4139 = vmatprep.mubr.f32.mxu0 0.0
      %4140 = vmatmul.mubr.f32.gmra.mrb[0].mxu0 %v4043
      %v4141 = vpop.f32.mrb[0].mxu0
      %v4142 = vadd.f32 %v4031, %v4141
      %v4143 = vpop.f32.mrb[0].mxu0
      %4144 = vmatprep.mubr.f32.mxu0 0.0
      %4145 = vmatmul.mubr.f32.gmra.mrb[0].mxu0 %v4046
      %v4146 = vpop.f32.mrb[0].mxu0
      %v4147 = vadd.f32 %v4031, %v4146
      %v4148 = vpop.f32.mrb[0].mxu0
      %4149 = vmatprep.mubr.f32.mxu0 0.0
      %4150 = vmatmul.mubr.f32.gmra.mrb[0].mxu0 %v4049
      %v4151 = vpop.f32.mrb[0].mxu0
      %v4152 = vadd.f32 %v4031, %v4151
      %v4153 = vpop.f32.mrb[0].mxu0
      %4154 = vmatprep.mubr.f32.mxu0 0.0
      %4155 = vmatmul.mubr.f32.gmra.mrb[0].mxu0 %v4052
      %v4156 = vpop.f32.mrb[0].mxu0
      %v4157 = vadd.f32 %v4031, %v4156
      %v4158 = vpop.f32.mrb[0].mxu0
      %4159 = vmatprep.mubr.f32.mxu0 0.0
      %4160 = vmatmul.mubr.f32.gmra.mrb[0].mxu0 %v4055
      %v4161 = vpop.f32.mrb[0].mxu0
      %v4162 = vadd.f32 %v4031, %v4161
      %v4163 = vpop.f32.mrb[0].mxu0
      %4164 = vdwg.mxu0
      %v4165 = vmax.f32 %v4127, 0.0
      %v4166 = vmax.f32 %v4132, 0.0
      %v4167 = vmax.f32 %v4137, 0.0
      %v4168 = vmax.f32 %v4142, 0.0
      %v4169 = vmax.f32 %v4147, 0.0
      %v4170 = vmax.f32 %v4152, 0.0
      %v4171 = vmax.f32 %v4157, 0.0
      %v4172 = vmax.f32 %v4162, 0.0
      %s4173 = scalar_lea.vmem %s5, 16
      %v4174 = vld [vmem:[%s4173] sm:$0xf]
      %s4175 = scalar_lea.vmem %s6, 4
      %v4176 = vld [vmem:[%s4175] sm:$0x1]
      %v4178 = vlaneseq
      %v4179 = vshrl.u32 %v4178, 7
      %v4180 = vsub.s32 0, %v4179
      %v4181 = vrot.slane %v4176, %v4180
      %v4184 = vsel %vm738, %v4165, 0
      %v4187 = vsel %vm738, %v4166, 0
      %v4190 = vsel %vm738, %v4167, 0
      %v4193 = vsel %vm738, %v4168, 0
      %v4196 = vsel %vm738, %v4169, 0
      %v4199 = vsel %vm738, %v4170, 0
      %v4202 = vsel %vm738, %v4171, 0
      %v4205 = vsel %vm738, %v4172, 0
      %v4208 = vsel %vm846, %v4174, 0
      %4210 = vmatprep.subr.mxu0 0.0
      %4211 = vmatpush1.msra.mxu0 %v4208
      %4212 = vmatprep.subr.mxu0 0.0
      %4213 = vmatpush1.msra.mxu0 0.0
      %4214 = vmatprep.subr.mxu0 0.0
      %4215 = vmatpush1.msra.mxu0 0.0
      %4216 = vmatprep.subr.mxu0 0.0
      %4217 = vmatpush1.msra.mxu0 0.0
      %4218 = vmatprep.subr.mxu0 0.0
      %4219 = vmatpush1.msra.mxu0 0.0
      %4220 = vmatprep.subr.mxu0 0.0
      %4221 = vmatpush1.msra.mxu0 0.0
      %4222 = vmatprep.subr.mxu0 0.0
      %4223 = vmatpush1.msra.mxu0 0.0
      %4224 = vmatprep.subr.mxu0 0.0
      %4225 = vmatpush1.msra.mxu0 0.0
      %4226 = vmatprep.subr.mxu0 0.0
      %4227 = vmatpush1.msra.mxu0 0.0
      %4228 = vmatprep.subr.mxu0 0.0
      %4229 = vmatpush1.msra.mxu0 0.0
      %4230 = vmatprep.subr.mxu0 0.0
      %4231 = vmatpush1.msra.mxu0 0.0
      %4232 = vmatprep.subr.mxu0 0.0
      %4233 = vmatpush1.msra.mxu0 0.0
      %4234 = vmatprep.subr.mxu0 0.0
      %4235 = vmatpush1.msra.mxu0 0.0
      %4236 = vmatprep.subr.mxu0 0.0
      %4237 = vmatpush1.msra.mxu0 0.0
      %4238 = vmatprep.subr.mxu0 0.0
      %4239 = vmatpush1.msra.mxu0 0.0
      %4240 = vmatprep.subr.mxu0 0.0
      %4241 = vmatpush1.msra.mxu0 0.0
      %4242 = vmatprep.subr.mxu0 0.0
      %4243 = vmatpush1.msra.mxu0 0.0
      %4244 = vmatprep.subr.mxu0 0.0
      %4245 = vmatpush1.msra.mxu0 0.0
      %4246 = vmatprep.subr.mxu0 0.0
      %4247 = vmatpush1.msra.mxu0 0.0
      %4248 = vmatprep.subr.mxu0 0.0
      %4249 = vmatpush1.msra.mxu0 0.0
      %4250 = vmatprep.subr.mxu0 0.0
      %4251 = vmatpush1.msra.mxu0 0.0
      %4252 = vmatprep.subr.mxu0 0.0
      %4253 = vmatpush1.msra.mxu0 0.0
      %4254 = vmatprep.subr.mxu0 0.0
      %4255 = vmatpush1.msra.mxu0 0.0
      %4256 = vmatprep.subr.mxu0 0.0
      %4257 = vmatpush1.msra.mxu0 0.0
      %4258 = vmatprep.subr.mxu0 0.0
      %4259 = vmatpush1.msra.mxu0 0.0
      %4260 = vmatprep.subr.mxu0 0.0
      %4261 = vmatpush1.msra.mxu0 0.0
      %4262 = vmatprep.subr.mxu0 0.0
      %4263 = vmatpush1.msra.mxu0 0.0
      %4264 = vmatprep.subr.mxu0 0.0
      %4265 = vmatpush1.msra.mxu0 0.0
      %4266 = vmatprep.subr.mxu0 0.0
      %4267 = vmatpush1.msra.mxu0 0.0
      %4268 = vmatprep.subr.mxu0 0.0
      %4269 = vmatpush1.msra.mxu0 0.0
      %4270 = vmatprep.subr.mxu0 0.0
      %4271 = vmatpush1.msra.mxu0 0.0
      %4272 = vmatprep.subr.mxu0 0.0
      %4273 = vmatpush1.msra.mxu0 0.0
      %4274 = vmatprep.mubr.f32.mxu0 0.0
      %4275 = vmatmul.mubr.f32.gmra.mrb[0].mxu0 %v4184
      %v4276 = vpop.f32.mrb[0].mxu0
      %v4277 = vadd.f32 %v4181, %v4276
      %v4278 = vpop.f32.mrb[0].mxu0
      %4279 = vmatprep.mubr.f32.mxu0 0.0
      %4280 = vmatmul.mubr.f32.gmra.mrb[0].mxu0 %v4187
      %v4281 = vpop.f32.mrb[0].mxu0
      %v4282 = vadd.f32 %v4181, %v4281
      %v4283 = vpop.f32.mrb[0].mxu0
      %4284 = vmatprep.mubr.f32.mxu0 0.0
      %4285 = vmatmul.mubr.f32.gmra.mrb[0].mxu0 %v4190
      %v4286 = vpop.f32.mrb[0].mxu0
      %v4287 = vadd.f32 %v4181, %v4286
      %v4288 = vpop.f32.mrb[0].mxu0
      %4289 = vmatprep.mubr.f32.mxu0 0.0
      %4290 = vmatmul.mubr.f32.gmra.mrb[0].mxu0 %v4193
      %v4291 = vpop.f32.mrb[0].mxu0
      %v4292 = vadd.f32 %v4181, %v4291
      %v4293 = vpop.f32.mrb[0].mxu0
      %4294 = vmatprep.mubr.f32.mxu0 0.0
      %4295 = vmatmul.mubr.f32.gmra.mrb[0].mxu0 %v4196
      %v4296 = vpop.f32.mrb[0].mxu0
      %v4297 = vadd.f32 %v4181, %v4296
      %v4298 = vpop.f32.mrb[0].mxu0
      %4299 = vmatprep.mubr.f32.mxu0 0.0
      %4300 = vmatmul.mubr.f32.gmra.mrb[0].mxu0 %v4199
      %v4301 = vpop.f32.mrb[0].mxu0
      %v4302 = vadd.f32 %v4181, %v4301
      %v4303 = vpop.f32.mrb[0].mxu0
      %4304 = vmatprep.mubr.f32.mxu0 0.0
      %4305 = vmatmul.mubr.f32.gmra.mrb[0].mxu0 %v4202
      %v4306 = vpop.f32.mrb[0].mxu0
      %v4307 = vadd.f32 %v4181, %v4306
      %v4308 = vpop.f32.mrb[0].mxu0
      %4309 = vmatprep.mubr.f32.mxu0 0.0
      %4310 = vmatmul.mubr.f32.gmra.mrb[0].mxu0 %v4205
      %v4311 = vpop.f32.mrb[0].mxu0
      %v4312 = vadd.f32 %v4181, %v4311
      %v4313 = vpop.f32.mrb[0].mxu0
      %4314 = vdwg.mxu0
      %v4315 = vadd.f32 %v4277, %v3520
      %v4316 = vadd.f32 %v4282, %v3521
      %v4317 = vadd.f32 %v4287, %v3522
      %v4318 = vadd.f32 %v4292, %v3523
      %v4319 = vadd.f32 %v4297, %v3524
      %v4320 = vadd.f32 %v4302, %v3525
      %v4321 = vadd.f32 %v4307, %v3526
      %v4322 = vadd.f32 %v4312, %v3527
      %v4323 = vmax.f32 %v4315, 0.0
      %v4324 = vmax.f32 %v4316, 0.0
      %v4325 = vmax.f32 %v4317, 0.0
      %v4326 = vmax.f32 %v4318, 0.0
      %v4327 = vmax.f32 %v4319, 0.0
      %v4328 = vmax.f32 %v4320, 0.0
      %v4329 = vmax.f32 %v4321, 0.0
      %v4330 = vmax.f32 %v4322, 0.0
      %4331 = vst.msk [vmem:[%s278] sm:$0xff] %vm296, %v4323
      %4332 = vst.msk [vmem:[%s278 + $0x8] sm:$0xff] %vm296, %v4324
      %4333 = vst.msk [vmem:[%s278 + $0x10] sm:$0xff] %vm296, %v4325
      %4334 = vst.msk [vmem:[%s278 + $0x18] sm:$0xff] %vm296, %v4326
      %4335 = vst.msk [vmem:[%s278 + $0x20] sm:$0xff] %vm296, %v4327
      %4336 = vst.msk [vmem:[%s278 + $0x28] sm:$0xff] %vm296, %v4328
      %4337 = vst.msk [vmem:[%s278 + $0x30] sm:$0xff] %vm296, %v4329
      %4338 = vst.msk [vmem:[%s278 + $0x38] sm:$0xff] %vm296, %v4330
      %p4339 = scmp.lt.s32.totalorder %s18, 1
      %s4340 = scalar_select %p4339, %s18, 1
      %s4341 = smul.addr %s4340, 8
      %s4342 = smul.addr %s4341, 8
      %s4343 = scalar_lea.vmem %s7, %s4342
      // Predicated region
      $region49: #{bottleneck5_forward.1} parent=47 // pred_check
        %p4344 = pneg %p188
      $region50: #{bottleneck5_forward.1} parent=47 // pred_check_branch
        %4346 = sbr.rel (%p4344) target = $region52
      $region51: #{bottleneck5_forward.1} parent=47 // pred_region
        _
      $region52: #{bottleneck5_forward.1} parent=47 // pred_fallthru
        _
    $region48: #{bottleneck5_forward.1} parent=5 // pred_fallthru
      _
    %p4347 = scmp.le.s32.totalorder 2, %s13
    // Predicated region
    $region53: #{bottleneck5_forward.1} parent=5 // pred_check
      %p4348 = pneg %p4347
    $region54: #{bottleneck5_forward.1} parent=5 // pred_check_branch
      %4350 = sbr.rel (%p4348) target = $region56
    $region55: #{bottleneck5_forward.1} parent=5 // pred_region
      %s4351 = ssub.s32 %s13, 2
      // Predicated region
      $region57: #{bottleneck5_forward.1} parent=55 // pred_check
        %p4352 = pneg %p194
      $region58: #{bottleneck5_forward.1} parent=55 // pred_check_branch
        %4354 = sbr.rel (%p4352) target = $region60
      $region59: #{bottleneck5_forward.1} parent=55 // pred_region
        %p4355 = scmp.lt.s32.totalorder %s19, 1
        %s4356 = scalar_select %p4355, %s19, 1
        %s4357 = smul.addr %s4356, 8
        %s4358 = smul.addr %s4357, 8
        %s4359 = scalar_lea.vmem %s7, %s4358
      $region60: #{bottleneck5_forward.1} parent=55 // pred_fallthru
        _
    $region56: #{bottleneck5_forward.1} parent=5 // pred_fallthru
      _
  $region6: #{bottleneck5_forward.1} parent=0 // loop_footer
    %s17 = sadd.s32 1, %s13
  $region7: #{bottleneck5_forward.1} parent=0 // loop_footer_branch
    %12 = sbr.rel target = $region3
  $region8: #{bottleneck5_forward.1} parent=0 // loop_exit
    _

</llo_original>
